<compile_context>
chip_gen: v7x
topology: tpu7x:2x2x1
jax: 0.10.0
libtpu: 0.0.40
codegen_flags: <defaults>
</compile_context>

<pallas_src>
import jax
import jax.numpy as jnp
import numpy as np
from jax.experimental import pallas as pl
from jax.experimental.pallas import tpu as pltpu

N_ATOM_EMBED = 128   # n_atom_embed == n_rdf_embed == n_bdf_embed in the module
BN_EPS = 1e-5
LANE = 128


# ----------------------------------------------------------------------------
# Pallas kernel: full DistNN forward for one graph batch (single invocation,
# everything resident in VMEM).
# ----------------------------------------------------------------------------
def distnn_kernel(
    af2_ref, rdf_ref, bdf_ref,                                   # node features
    seg_a_ref, back_a_ref, inv_a_ref,                            # atom-idx pooling factors
    seg_e_ref, back_e_ref, inv_e_ref,                            # ele-idx pooling factors
    m_g_ref, inv_g_ref,                                          # graph pooling factors
    w_ea_ref, b_ea_ref, w_er_ref, b_er_ref, w_eb_ref, b_eb_ref,  # embeddings
    r_w1ae_ref, r_w1d_ref, r_b1_ref, r_g_ref, r_be_ref,          # rdf DistLayer
    r_w23_ref, r_w2p_ref, r_w3p_ref, r_b23_ref,
    b_w1ae_ref, b_w1d_ref, b_b1_ref, b_g_ref, b_be_ref,          # bdf DistLayer
    b_w23_ref, b_w2p_ref, b_w3p_ref, b_b23_ref,
    wf1_ref, bf1_ref, wf2_ref, bf2_ref,                          # head
    out_ref,
):
    E = N_ATOM_EMBED
    N = rdf_ref.shape[0]
    bf16 = jnp.bfloat16

    def mm(a, b):
        return jnp.dot(a, b, preferred_element_type=jnp.float32)

    def relu(x):
        return jnp.maximum(x, 0.0)

    # --- embeddings (embed_atom is shared between the two atom_feat halves;
    #     the wrapper row-stacks them so a single matmul covers both) ---
    emb = relu(mm(af2_ref[...], w_ea_ref[...]) + b_ea_ref[...])              # [2N, E] f32
    x_ae = jnp.concatenate([emb[:N, :], emb[N:, :]], axis=-1).astype(bf16)   # [N, 2E]
    x_rdf = relu(mm(rdf_ref[...], w_er_ref[...]) + b_er_ref[...]).astype(bf16)
    x_bdf = relu(mm(bdf_ref[...], w_eb_ref[...]) + b_eb_ref[...]).astype(bf16)

    seg_a, back_a, inv_a = seg_a_ref[...], back_a_ref[...], inv_a_ref[...]
    seg_e, back_e, inv_e = seg_e_ref[...], back_e_ref[...], inv_e_ref[...]

    def dist_layer(x_dist, w1ae_ref, w1d_ref, b1_ref, g_ref, be_ref,
                   w23_ref, w2p_ref, w3p_ref, b23_ref):
        # fc1 over cat([x_atom, x_ele, x_dist]): one K=256 + one K=128 matmul.
        h = mm(x_ae, w1ae_ref[...]) + mm(x_dist, w1d_ref[...]) + b1_ref[...]
        # BatchNorm1d (batch stats, biased variance), folded affine, f32 stats.
        mu = jnp.mean(h, axis=0, keepdims=True)
        var = jnp.mean(h * h, axis=0, keepdims=True) - mu * mu
        scale = g_ref[...] * jax.lax.rsqrt(var + BN_EPS)
        shift = be_ref[...] - mu * scale
        h16 = relu(h * scale + shift).astype(bf16)                           # [N, E]
        # fc2/fc3: shared [h | x_dist] operand vs output-fused [2E, 2E] weight.
        hd = jnp.concatenate([h16, x_dist], axis=-1)                         # [N, 2E]
        base = mm(hd, w23_ref[...]) + b23_ref[...]                           # [N, 2E]
        # Factored segment-mean pooling (no dense NxN):
        #   pool-contribution = back @ (((seg @ h) * 1/cnt) @ Wp)
        pa = (mm(seg_a, h16) * inv_a).astype(bf16)                           # [Sa, E]
        ca = mm(back_a, mm(pa, w2p_ref[...]).astype(bf16))                   # [N, E]
        pe = (mm(seg_e, h16) * inv_e).astype(bf16)                           # [Se, E]
        ce = mm(back_e, mm(pe, w3p_ref[...]).astype(bf16))                   # [N, E]
        h1 = relu(base[:, :E] + ca)
        h2 = relu(base[:, E:] + ce)
        return h1.astype(bf16), h2.astype(bf16)

    r1, r2 = dist_layer(x_rdf, r_w1ae_ref, r_w1d_ref, r_b1_ref, r_g_ref, r_be_ref,
                        r_w23_ref, r_w2p_ref, r_w3p_ref, r_b23_ref)
    q1, q2 = dist_layer(x_bdf, b_w1ae_ref, b_w1d_ref, b_b1_ref, b_g_ref, b_be_ref,
                        b_w23_ref, b_w2p_ref, b_w3p_ref, b_b23_ref)

    # graph-level mean pool of cat([r1, r2, q1, q2]), fc1 (512->16), fc2 (16->out)
    mg = m_g_ref[...]
    g = jnp.concatenate([mm(mg, r1), mm(mg, r2), mm(mg, q1), mm(mg, q2)],
                        axis=-1) * inv_g_ref[...]                            # [Gp, 4E] f32
    z = relu(mm(g.astype(bf16), wf1_ref[...]) + bf1_ref[...])                # [Gp, 16]
    out_ref[...] = relu(mm(z.astype(bf16), wf2_ref[...]) + bf2_ref[...])     # [Gp, LANEpad]


# ----------------------------------------------------------------------------
# Glue: pooling factors, lane-dense padding, weight packing, pallas_call.
# ----------------------------------------------------------------------------
def _round_up(x, m):
    return (x + m - 1) // m * m


def _pad_last_to_lane(x):
    c = x.shape[-1]
    pad = _round_up(max(c, 1), LANE) - c
    return jnp.pad(x, ((0, 0), (0, pad))) if pad > 0 else x


def _pad_first_to_lane(x):
    r = x.shape[0]
    pad = _round_up(max(r, 1), LANE) - r
    return jnp.pad(x, ((0, pad), (0, 0))) if pad > 0 else x


def _segment_factors(idx, n_seg):
    """Skinny pooling factors for `global_mean_pool(h, idx)[idx, :]`.

    Returns: one-hot gather [Sp, N] (bf16), scatter-back [N, Sp] (bf16),
    and f32 1/count column [Sp, 1].  Padded segments have zero rows/cols, so
    they contribute nothing and don't perturb any statistics.
    """
    sp = _round_up(max(int(n_seg), 1), 8)
    oh = (jnp.arange(sp)[:, None] == idx[None, :])
    cnt = jnp.sum(oh, axis=1, keepdims=True).astype(jnp.float32)
    inv = 1.0 / jnp.maximum(cnt, 1.0)
    return oh.astype(jnp.bfloat16), oh.T.astype(jnp.bfloat16), inv


def distnn_forward(params, atom_feat, rdf_feat, bdf_feat,
                   atom_idx, ele_idx, graph_idx, ref_feat, num_graphs):
    # ref_feat is accepted but unused, matching the PyTorch forward.
    del ref_feat
    E = N_ATOM_EMBED
    n_af = atom_feat.shape[1] // 2
    dim_out = params["bf2"].shape[0]

    bf = lambda x: x.astype(jnp.bfloat16)
    r32 = lambda v: v.reshape(1, -1).astype(jnp.float32)

    # Row-stack the two atom_feat halves (shared embed_atom weight) and pad the
    # tiny feature dims to a full 128-lane width (zero cols x zero weight rows).
    af2 = _pad_last_to_lane(
        jnp.concatenate([atom_feat[:, :n_af], atom_feat[:, n_af:]], axis=0))
    rdf = _pad_last_to_lane(rdf_feat)
    bdf = _pad_last_to_lane(bdf_feat)

    # Factored segment-mean pooling (idx arrays are concrete here; the wrapper
    # is not jit-traced, so max() is usable for the segment counts).
    seg_a, back_a, inv_a = _segment_factors(atom_idx, int(atom_idx.max()) + 1)
    seg_e, back_e, inv_e = _segment_factors(ele_idx, int(ele_idx.max()) + 1)
    m_g, _, inv_g = _segment_factors(graph_idx, num_graphs)
    gp = m_g.shape[0]

    def pack_dist(p):
        w1, w2, w3 = params[p + "w1"], params[p + "w2"], params[p + "w3"]
        # Output-fused fc2/fc3 weight for the shared [h | x_dist] operand.
        w23 = jnp.concatenate(
            [jnp.concatenate([w2[0:E], w3[0:E]], axis=1),
             jnp.concatenate([w2[2 * E:3 * E], w3[2 * E:3 * E]], axis=1)],
            axis=0)                                                  # [2E, 2E]
        b23 = jnp.concatenate([params[p + "b2"], params[p + "b3"]])  # [2E]
        return [
            bf(w1[0:2 * E]), bf(w1[2 * E:3 * E]), r32(params[p + "b1"]),
            r32(params[p + "gamma"]), r32(params[p + "beta"]),
            bf(w23), bf(w2[E:2 * E]), bf(w3[E:2 * E]), r32(b23),
        ]

    wf2p = _pad_last_to_lane(params["wf2"])                          # [16, LANEpad]
    out_pad = wf2p.shape[1]
    bf2p = jnp.pad(params["bf2"], (0, out_pad - dim_out))

    inputs = [
        bf(af2), bf(rdf), bf(bdf),
        seg_a, back_a, inv_a, seg_e, back_e, inv_e, m_g, inv_g,
        bf(_pad_first_to_lane(params["w_ea"])), r32(params["b_ea"]),
        bf(_pad_first_to_lane(params["w_er"])), r32(params["b_er"]),
        bf(_pad_first_to_lane(params["w_eb"])), r32(params["b_eb"]),
        *pack_dist("r_"), *pack_dist("b_"),
        bf(params["wf1"]), r32(params["bf1"]), bf(wf2p), r32(bf2p),
    ]

    vmem = pl.BlockSpec(memory_space=pltpu.MemorySpace.VMEM)
    out = pl.pallas_call(
        distnn_kernel,
        out_shape=jax.ShapeDtypeStruct((gp, out_pad), jnp.float32),
        in_specs=[vmem] * len(inputs),
        out_specs=vmem,
        compiler_params=pltpu.CompilerParams(
            # Explicit budget; stays below v7x's 64 MiB physical VMEM while
            # lifting the (16/32 MiB) scoped defaults on v5e/v6e.
            vmem_limit_bytes=48 * 1024 * 1024),
    )(*inputs)
    return out[:num_graphs, :dim_out]


# ----------------------------------------------------------------------------
# Pure-JAX f32 reference (segment_sum + concatenate) for validation.
# ----------------------------------------------------------------------------
def distnn_reference(params, atom_feat, rdf_feat, bdf_feat,
                     atom_idx, ele_idx, graph_idx, num_graphs):
    E = N_ATOM_EMBED
    n_af = atom_feat.shape[1] // 2
    relu = lambda x: jnp.maximum(x, 0.0)
    lin = lambda x, w, b: x @ w + b

    def gmp(h, idx, nseg):
        s = jax.ops.segment_sum(h, idx, num_segments=nseg)
        c = jax.ops.segment_sum(jnp.ones((h.shape[0],), h.dtype), idx, num_segments=nseg)
        return s / jnp.maximum(c, 1.0)[:, None]

    x_atom = relu(lin(atom_feat[:, :n_af], params["w_ea"], params["b_ea"]))
    x_ele = relu(lin(atom_feat[:, n_af:], params["w_ea"], params["b_ea"]))
    x_rdf = relu(lin(rdf_feat, params["w_er"], params["b_er"]))
    x_bdf = relu(lin(bdf_feat, params["w_eb"], params["b_eb"]))

    def dist_layer(x, p):
        x_dist = x[:, 2 * E:]
        h = lin(x, params[p + "w1"], params[p + "b1"])
        mu = h.mean(0, keepdims=True)
        var = ((h - mu) ** 2).mean(0, keepdims=True)
        h = relu((h - mu) / jnp.sqrt(var + BN_EPS) * params[p + "gamma"] + params[p + "beta"])
        pa = gmp(h, atom_idx, h.shape[0])[atom_idx, :]
        h1 = relu(lin(jnp.concatenate([h, pa, x_dist], 1), params[p + "w2"], params[p + "b2"]))
        pe = gmp(h, ele_idx, h.shape[0])[ele_idx, :]
        h2 = relu(lin(jnp.concatenate([h, pe, x_dist], 1), params[p + "w3"], params[p + "b3"]))
        return jnp.concatenate([h1, h2], 1)

    h1 = dist_layer(jnp.concatenate([x_atom, x_ele, x_rdf], 1), "r_")
    h2 = dist_layer(jnp.concatenate([x_atom, x_ele, x_bdf], 1), "b_")
    h = jnp.concatenate([h1, h2], 1)
    h = gmp(h, graph_idx, num_graphs)
    h = relu(lin(h, params["wf1"], params["bf1"]))
    return relu(lin(h, params["wf2"], params["bf2"]))


# ----------------------------------------------------------------------------
# Deterministic parameter init (weights stored as [in, out], i.e. W.T of torch).
# ----------------------------------------------------------------------------
def init_params(key, n_atom_feat, n_rdf_feat, n_bdf_feat, dim_out):
    E = N_ATOM_EMBED
    keys = iter(jax.random.split(key, 64))
    nrm = lambda shape, s=0.1: (s * jax.random.normal(next(keys), shape)).astype(jnp.float32)

    params = {
        "w_ea": nrm((n_atom_feat, E)), "b_ea": nrm((E,), 0.05),
        "w_er": nrm((n_rdf_feat, E)), "b_er": nrm((E,), 0.05),
        "w_eb": nrm((n_bdf_feat, E)), "b_eb": nrm((E,), 0.05),
        "wf1": nrm((4 * E, 16)), "bf1": nrm((16,), 0.05),
        "wf2": nrm((16, dim_out)), "bf2": nrm((dim_out,), 0.05),
    }
    for p in ("r_", "b_"):
        params[p + "w1"] = nrm((3 * E, E)); params[p + "b1"] = nrm((E,), 0.05)
        params[p + "gamma"] = jnp.ones((E,), jnp.float32)
        params[p + "beta"] = jnp.zeros((E,), jnp.float32)
        params[p + "w2"] = nrm((3 * E, E)); params[p + "b2"] = nrm((E,), 0.05)
        params[p + "w3"] = nrm((3 * E, E)); params[p + "b3"] = nrm((E,), 0.05)
    return params


if __name__ == "__main__":
    key = jax.random.PRNGKey(0)
    n_atom_feat, n_rdf_feat, n_bdf_feat, dim_out = 4, 6, 5, 3
    N, num_graphs = 8, 2

    k_p, k_a, k_r, k_b, k_ref = jax.random.split(key, 5)
    params = init_params(k_p, n_atom_feat, n_rdf_feat, n_bdf_feat, dim_out)

    atom_feat = jax.random.normal(k_a, (N, 2 * n_atom_feat), jnp.float32)
    rdf_feat = jax.random.normal(k_r, (N, n_rdf_feat), jnp.float32)
    bdf_feat = jax.random.normal(k_b, (N, n_bdf_feat), jnp.float32)
    ref_feat = jax.random.normal(k_ref, (num_graphs, 4), jnp.float32)  # unused in forward
    atom_idx = jnp.array([0, 0, 1, 1, 2, 2, 3, 3], jnp.int32)
    ele_idx = jnp.array([0, 1, 0, 1, 0, 1, 0, 1], jnp.int32)
    graph_idx = jnp.array([0, 0, 0, 0, 1, 1, 1, 1], jnp.int32)

    out = distnn_forward(params, atom_feat, rdf_feat, bdf_feat,
                         atom_idx, ele_idx, graph_idx, ref_feat, num_graphs)
    out = jax.block_until_ready(out)

    ref = distnn_reference(params, atom_feat, rdf_feat, bdf_feat,
                           atom_idx, ele_idx, graph_idx, num_graphs)
    ref = jax.block_until_ready(ref)

    assert out.shape == (num_graphs, dim_out)
    # Tolerance widened vs the all-f32 version: matmuls now run in bf16 on the
    # MXU (f32 accumulation); BN stats / biases / pooling scales remain f32.
    np.testing.assert_allclose(np.asarray(out), np.asarray(ref), rtol=3e-2, atol=3e-2)
    print("KERNEL_OK")
</pallas_src>

<mosaic_0001>
module attributes {stable_mosaic.version = 11 : i64} {
  func.func @distnn_kernel(%arg0: memref<16x128xbf16, #tpu.memory_space<vmem>>, %arg1: memref<8x128xbf16, #tpu.memory_space<vmem>>, %arg2: memref<8x128xbf16, #tpu.memory_space<vmem>>, %arg3: memref<8x8xbf16, #tpu.memory_space<vmem>>, %arg4: memref<8x8xbf16, #tpu.memory_space<vmem>>, %arg5: memref<8x1xf32, #tpu.memory_space<vmem>>, %arg6: memref<8x8xbf16, #tpu.memory_space<vmem>>, %arg7: memref<8x8xbf16, #tpu.memory_space<vmem>>, %arg8: memref<8x1xf32, #tpu.memory_space<vmem>>, %arg9: memref<8x8xbf16, #tpu.memory_space<vmem>>, %arg10: memref<8x1xf32, #tpu.memory_space<vmem>>, %arg11: memref<128x128xbf16, #tpu.memory_space<vmem>>, %arg12: memref<1x128xf32, #tpu.memory_space<vmem>>, %arg13: memref<128x128xbf16, #tpu.memory_space<vmem>>, %arg14: memref<1x128xf32, #tpu.memory_space<vmem>>, %arg15: memref<128x128xbf16, #tpu.memory_space<vmem>>, %arg16: memref<1x128xf32, #tpu.memory_space<vmem>>, %arg17: memref<256x128xbf16, #tpu.memory_space<vmem>>, %arg18: memref<128x128xbf16, #tpu.memory_space<vmem>>, %arg19: memref<1x128xf32, #tpu.memory_space<vmem>>, %arg20: memref<1x128xf32, #tpu.memory_space<vmem>>, %arg21: memref<1x128xf32, #tpu.memory_space<vmem>>, %arg22: memref<256x256xbf16, #tpu.memory_space<vmem>>, %arg23: memref<128x128xbf16, #tpu.memory_space<vmem>>, %arg24: memref<128x128xbf16, #tpu.memory_space<vmem>>, %arg25: memref<1x256xf32, #tpu.memory_space<vmem>>, %arg26: memref<256x128xbf16, #tpu.memory_space<vmem>>, %arg27: memref<128x128xbf16, #tpu.memory_space<vmem>>, %arg28: memref<1x128xf32, #tpu.memory_space<vmem>>, %arg29: memref<1x128xf32, #tpu.memory_space<vmem>>, %arg30: memref<1x128xf32, #tpu.memory_space<vmem>>, %arg31: memref<256x256xbf16, #tpu.memory_space<vmem>>, %arg32: memref<128x128xbf16, #tpu.memory_space<vmem>>, %arg33: memref<128x128xbf16, #tpu.memory_space<vmem>>, %arg34: memref<1x256xf32, #tpu.memory_space<vmem>>, %arg35: memref<512x16xbf16, #tpu.memory_space<vmem>>, %arg36: memref<1x16xf32, #tpu.memory_space<vmem>>, %arg37: memref<16x128xbf16, #tpu.memory_space<vmem>>, %arg38: memref<1x128xf32, #tpu.memory_space<vmem>>, %arg39: memref<8x128xf32, #tpu.memory_space<vmem>>) attributes {dimension_semantics = [], scalar_prefetch = 0 : i64, scratch_operands = 0 : i64, tpu.core_type = #tpu.core_type<tc>} {
    %c0 = arith.constant 0 : index
    %c0_0 = arith.constant 0 : index
    %0 = vector.load %arg0[%c0, %c0_0] : memref<16x128xbf16, #tpu.memory_space<vmem>>, vector<16x128xbf16>
    %c0_1 = arith.constant 0 : index
    %c0_2 = arith.constant 0 : index
    %1 = vector.load %arg11[%c0_1, %c0_2] : memref<128x128xbf16, #tpu.memory_space<vmem>>, vector<128x128xbf16>
    %cst = arith.constant dense<0.000000e+00> : vector<16x128xf32>
    %2 = tpu.matmul %0, %1, %cst {dimension_numbers = #tpu.dot_dimension_numbers<[1], [0], [0], [1], [0, 0, 1, 1], [], []>} : vector<16x128xbf16>, vector<128x128xbf16>, vector<16x128xf32> -> vector<16x128xf32>
    %c0_3 = arith.constant 0 : index
    %c0_4 = arith.constant 0 : index
    %3 = vector.load %arg12[%c0_3, %c0_4] : memref<1x128xf32, #tpu.memory_space<vmem>>, vector<1x128xf32>
    %4 = vector.broadcast %3 : vector<1x128xf32> to vector<16x128xf32>
    %5 = arith.addf %2, %4 : vector<16x128xf32>
    %cst_5 = arith.constant 0.000000e+00 : f32
    %6 = vector.broadcast %cst_5 : f32 to vector<16x128xf32>
    %7 = arith.maximumf %5, %6 : vector<16x128xf32>
    %8 = vector.extract_strided_slice %7 {offsets = [0, 0], sizes = [8, 128], strides = [1, 1]} : vector<16x128xf32> to vector<8x128xf32>
    %9 = vector.extract_strided_slice %7 {offsets = [8, 0], sizes = [8, 128], strides = [1, 1]} : vector<16x128xf32> to vector<8x128xf32>
    %10 = tpu.concatenate %8, %9 in 1 : vector<8x128xf32>, vector<8x128xf32> -> vector<8x256xf32>
    %11 = arith.truncf %10 : vector<8x256xf32> to vector<8x256xbf16>
    %c0_6 = arith.constant 0 : index
    %c0_7 = arith.constant 0 : index
    %12 = vector.load %arg1[%c0_6, %c0_7] : memref<8x128xbf16, #tpu.memory_space<vmem>>, vector<8x128xbf16>
    %c0_8 = arith.constant 0 : index
    %c0_9 = arith.constant 0 : index
    %13 = vector.load %arg13[%c0_8, %c0_9] : memref<128x128xbf16, #tpu.memory_space<vmem>>, vector<128x128xbf16>
    %cst_10 = arith.constant dense<0.000000e+00> : vector<8x128xf32>
    %14 = tpu.matmul %12, %13, %cst_10 {dimension_numbers = #tpu.dot_dimension_numbers<[1], [0], [0], [1], [0, 0, 1, 1], [], []>} : vector<8x128xbf16>, vector<128x128xbf16>, vector<8x128xf32> -> vector<8x128xf32>
    %c0_11 = arith.constant 0 : index
    %c0_12 = arith.constant 0 : index
    %15 = vector.load %arg14[%c0_11, %c0_12] : memref<1x128xf32, #tpu.memory_space<vmem>>, vector<1x128xf32>
    %16 = vector.broadcast %15 : vector<1x128xf32> to vector<8x128xf32>
    %17 = arith.addf %14, %16 : vector<8x128xf32>
    %cst_13 = arith.constant 0.000000e+00 : f32
    %18 = vector.broadcast %cst_13 : f32 to vector<8x128xf32>
    %19 = arith.maximumf %17, %18 : vector<8x128xf32>
    %20 = arith.truncf %19 : vector<8x128xf32> to vector<8x128xbf16>
    %c0_14 = arith.constant 0 : index
    %c0_15 = arith.constant 0 : index
    %21 = vector.load %arg2[%c0_14, %c0_15] : memref<8x128xbf16, #tpu.memory_space<vmem>>, vector<8x128xbf16>
    %c0_16 = arith.constant 0 : index
    %c0_17 = arith.constant 0 : index
    %22 = vector.load %arg15[%c0_16, %c0_17] : memref<128x128xbf16, #tpu.memory_space<vmem>>, vector<128x128xbf16>
    %cst_18 = arith.constant dense<0.000000e+00> : vector<8x128xf32>
    %23 = tpu.matmul %21, %22, %cst_18 {dimension_numbers = #tpu.dot_dimension_numbers<[1], [0], [0], [1], [0, 0, 1, 1], [], []>} : vector<8x128xbf16>, vector<128x128xbf16>, vector<8x128xf32> -> vector<8x128xf32>
    %c0_19 = arith.constant 0 : index
    %c0_20 = arith.constant 0 : index
    %24 = vector.load %arg16[%c0_19, %c0_20] : memref<1x128xf32, #tpu.memory_space<vmem>>, vector<1x128xf32>
    %25 = vector.broadcast %24 : vector<1x128xf32> to vector<8x128xf32>
    %26 = arith.addf %23, %25 : vector<8x128xf32>
    %cst_21 = arith.constant 0.000000e+00 : f32
    %27 = vector.broadcast %cst_21 : f32 to vector<8x128xf32>
    %28 = arith.maximumf %26, %27 : vector<8x128xf32>
    %29 = arith.truncf %28 : vector<8x128xf32> to vector<8x128xbf16>
    %c0_22 = arith.constant 0 : index
    %c0_23 = arith.constant 0 : index
    %30 = vector.load %arg3[%c0_22, %c0_23] : memref<8x8xbf16, #tpu.memory_space<vmem>>, vector<8x8xbf16>
    %c0_24 = arith.constant 0 : index
    %c0_25 = arith.constant 0 : index
    %31 = vector.load %arg4[%c0_24, %c0_25] : memref<8x8xbf16, #tpu.memory_space<vmem>>, vector<8x8xbf16>
    %c0_26 = arith.constant 0 : index
    %c0_27 = arith.constant 0 : index
    %32 = vector.load %arg5[%c0_26, %c0_27] : memref<8x1xf32, #tpu.memory_space<vmem>>, vector<8x1xf32>
    %c0_28 = arith.constant 0 : index
    %c0_29 = arith.constant 0 : index
    %33 = vector.load %arg6[%c0_28, %c0_29] : memref<8x8xbf16, #tpu.memory_space<vmem>>, vector<8x8xbf16>
    %c0_30 = arith.constant 0 : index
    %c0_31 = arith.constant 0 : index
    %34 = vector.load %arg7[%c0_30, %c0_31] : memref<8x8xbf16, #tpu.memory_space<vmem>>, vector<8x8xbf16>
    %c0_32 = arith.constant 0 : index
    %c0_33 = arith.constant 0 : index
    %35 = vector.load %arg8[%c0_32, %c0_33] : memref<8x1xf32, #tpu.memory_space<vmem>>, vector<8x1xf32>
    %c0_34 = arith.constant 0 : index
    %c0_35 = arith.constant 0 : index
    %36 = vector.load %arg17[%c0_34, %c0_35] : memref<256x128xbf16, #tpu.memory_space<vmem>>, vector<256x128xbf16>
    %cst_36 = arith.constant dense<0.000000e+00> : vector<8x128xf32>
    %37 = tpu.matmul %11, %36, %cst_36 {dimension_numbers = #tpu.dot_dimension_numbers<[1], [0], [0], [1], [0, 0, 1, 1], [], []>} : vector<8x256xbf16>, vector<256x128xbf16>, vector<8x128xf32> -> vector<8x128xf32>
    %c0_37 = arith.constant 0 : index
    %c0_38 = arith.constant 0 : index
    %38 = vector.load %arg18[%c0_37, %c0_38] : memref<128x128xbf16, #tpu.memory_space<vmem>>, vector<128x128xbf16>
    %cst_39 = arith.constant dense<0.000000e+00> : vector<8x128xf32>
    %39 = tpu.matmul %20, %38, %cst_39 {dimension_numbers = #tpu.dot_dimension_numbers<[1], [0], [0], [1], [0, 0, 1, 1], [], []>} : vector<8x128xbf16>, vector<128x128xbf16>, vector<8x128xf32> -> vector<8x128xf32>
    %40 = arith.addf %37, %39 : vector<8x128xf32>
    %c0_40 = arith.constant 0 : index
    %c0_41 = arith.constant 0 : index
    %41 = vector.load %arg19[%c0_40, %c0_41] : memref<1x128xf32, #tpu.memory_space<vmem>>, vector<1x128xf32>
    %42 = vector.broadcast %41 : vector<1x128xf32> to vector<8x128xf32>
    %43 = arith.addf %40, %42 : vector<8x128xf32>
    %cst_42 = arith.constant dense<0.000000e+00> : vector<128xf32>
    %44 = vector.multi_reduction <add>, %43, %cst_42 [0] : vector<8x128xf32> to vector<128xf32>
    %45 = vector.shape_cast %44 : vector<128xf32> to vector<1x128xf32>
    %cst_43 = arith.constant 8.000000e+00 : f32
    %46 = vector.broadcast %cst_43 : f32 to vector<1x128xf32>
    %47 = arith.divf %45, %46 : vector<1x128xf32>
    %48 = arith.mulf %43, %43 : vector<8x128xf32>
    %cst_44 = arith.constant dense<0.000000e+00> : vector<128xf32>
    %49 = vector.multi_reduction <add>, %48, %cst_44 [0] : vector<8x128xf32> to vector<128xf32>
    %50 = vector.shape_cast %49 : vector<128xf32> to vector<1x128xf32>
    %cst_45 = arith.constant 8.000000e+00 : f32
    %51 = vector.broadcast %cst_45 : f32 to vector<1x128xf32>
    %52 = arith.divf %50, %51 : vector<1x128xf32>
    %53 = arith.mulf %47, %47 : vector<1x128xf32>
    %54 = arith.subf %52, %53 : vector<1x128xf32>
    %c0_46 = arith.constant 0 : index
    %c0_47 = arith.constant 0 : index
    %55 = vector.load %arg20[%c0_46, %c0_47] : memref<1x128xf32, #tpu.memory_space<vmem>>, vector<1x128xf32>
    %cst_48 = arith.constant 9.99999974E-6 : f32
    %56 = vector.broadcast %cst_48 : f32 to vector<1x128xf32>
    %57 = arith.addf %54, %56 : vector<1x128xf32>
    %58 = math.rsqrt %57 : vector<1x128xf32>
    %59 = arith.mulf %55, %58 : vector<1x128xf32>
    %c0_49 = arith.constant 0 : index
    %c0_50 = arith.constant 0 : index
    %60 = vector.load %arg21[%c0_49, %c0_50] : memref<1x128xf32, #tpu.memory_space<vmem>>, vector<1x128xf32>
    %61 = arith.mulf %47, %59 : vector<1x128xf32>
    %62 = arith.subf %60, %61 : vector<1x128xf32>
    %63 = vector.broadcast %59 : vector<1x128xf32> to vector<8x128xf32>
    %64 = arith.mulf %43, %63 : vector<8x128xf32>
    %65 = vector.broadcast %62 : vector<1x128xf32> to vector<8x128xf32>
    %66 = arith.addf %64, %65 : vector<8x128xf32>
    %cst_51 = arith.constant 0.000000e+00 : f32
    %67 = vector.broadcast %cst_51 : f32 to vector<8x128xf32>
    %68 = arith.maximumf %66, %67 : vector<8x128xf32>
    %69 = arith.truncf %68 : vector<8x128xf32> to vector<8x128xbf16>
    %70 = tpu.concatenate %69, %20 in 1 : vector<8x128xbf16>, vector<8x128xbf16> -> vector<8x256xbf16>
    %c0_52 = arith.constant 0 : index
    %c0_53 = arith.constant 0 : index
    %71 = vector.load %arg22[%c0_52, %c0_53] : memref<256x256xbf16, #tpu.memory_space<vmem>>, vector<256x256xbf16>
    %cst_54 = arith.constant dense<0.000000e+00> : vector<8x256xf32>
    %72 = tpu.matmul %70, %71, %cst_54 {dimension_numbers = #tpu.dot_dimension_numbers<[1], [0], [0], [1], [0, 0, 1, 1], [], []>} : vector<8x256xbf16>, vector<256x256xbf16>, vector<8x256xf32> -> vector<8x256xf32>
    %c0_55 = arith.constant 0 : index
    %c0_56 = arith.constant 0 : index
    %73 = vector.load %arg25[%c0_55, %c0_56] : memref<1x256xf32, #tpu.memory_space<vmem>>, vector<1x256xf32>
    %74 = vector.broadcast %73 : vector<1x256xf32> to vector<8x256xf32>
    %75 = arith.addf %72, %74 : vector<8x256xf32>
    %cst_57 = arith.constant dense<0.000000e+00> : vector<8x128xf32>
    %76 = tpu.matmul %30, %69, %cst_57 {dimension_numbers = #tpu.dot_dimension_numbers<[1], [0], [0], [1], [0, 0, 1, 1], [], []>} : vector<8x8xbf16>, vector<8x128xbf16>, vector<8x128xf32> -> vector<8x128xf32>
    %77 = vector.broadcast %32 : vector<8x1xf32> to vector<8x128xf32>
    %78 = arith.mulf %76, %77 : vector<8x128xf32>
    %79 = arith.truncf %78 : vector<8x128xf32> to vector<8x128xbf16>
    %c0_58 = arith.constant 0 : index
    %c0_59 = arith.constant 0 : index
    %80 = vector.load %arg23[%c0_58, %c0_59] : memref<128x128xbf16, #tpu.memory_space<vmem>>, vector<128x128xbf16>
    %cst_60 = arith.constant dense<0.000000e+00> : vector<8x128xf32>
    %81 = tpu.matmul %79, %80, %cst_60 {dimension_numbers = #tpu.dot_dimension_numbers<[1], [0], [0], [1], [0, 0, 1, 1], [], []>} : vector<8x128xbf16>, vector<128x128xbf16>, vector<8x128xf32> -> vector<8x128xf32>
    %82 = arith.truncf %81 : vector<8x128xf32> to vector<8x128xbf16>
    %cst_61 = arith.constant dense<0.000000e+00> : vector<8x128xf32>
    %83 = tpu.matmul %31, %82, %cst_61 {dimension_numbers = #tpu.dot_dimension_numbers<[1], [0], [0], [1], [0, 0, 1, 1], [], []>} : vector<8x8xbf16>, vector<8x128xbf16>, vector<8x128xf32> -> vector<8x128xf32>
    %cst_62 = arith.constant dense<0.000000e+00> : vector<8x128xf32>
    %84 = tpu.matmul %33, %69, %cst_62 {dimension_numbers = #tpu.dot_dimension_numbers<[1], [0], [0], [1], [0, 0, 1, 1], [], []>} : vector<8x8xbf16>, vector<8x128xbf16>, vector<8x128xf32> -> vector<8x128xf32>
    %85 = vector.broadcast %35 : vector<8x1xf32> to vector<8x128xf32>
    %86 = arith.mulf %84, %85 : vector<8x128xf32>
    %87 = arith.truncf %86 : vector<8x128xf32> to vector<8x128xbf16>
    %c0_63 = arith.constant 0 : index
    %c0_64 = arith.constant 0 : index
    %88 = vector.load %arg24[%c0_63, %c0_64] : memref<128x128xbf16, #tpu.memory_space<vmem>>, vector<128x128xbf16>
    %cst_65 = arith.constant dense<0.000000e+00> : vector<8x128xf32>
    %89 = tpu.matmul %87, %88, %cst_65 {dimension_numbers = #tpu.dot_dimension_numbers<[1], [0], [0], [1], [0, 0, 1, 1], [], []>} : vector<8x128xbf16>, vector<128x128xbf16>, vector<8x128xf32> -> vector<8x128xf32>
    %90 = arith.truncf %89 : vector<8x128xf32> to vector<8x128xbf16>
    %cst_66 = arith.constant dense<0.000000e+00> : vector<8x128xf32>
    %91 = tpu.matmul %34, %90, %cst_66 {dimension_numbers = #tpu.dot_dimension_numbers<[1], [0], [0], [1], [0, 0, 1, 1], [], []>} : vector<8x8xbf16>, vector<8x128xbf16>, vector<8x128xf32> -> vector<8x128xf32>
    %92 = vector.extract_strided_slice %75 {offsets = [0, 0], sizes = [8, 128], strides = [1, 1]} : vector<8x256xf32> to vector<8x128xf32>
    %93 = arith.addf %92, %83 : vector<8x128xf32>
    %cst_67 = arith.constant 0.000000e+00 : f32
    %94 = vector.broadcast %cst_67 : f32 to vector<8x128xf32>
    %95 = arith.maximumf %93, %94 : vector<8x128xf32>
    %96 = vector.extract_strided_slice %75 {offsets = [0, 128], sizes = [8, 128], strides = [1, 1]} : vector<8x256xf32> to vector<8x128xf32>
    %97 = arith.addf %96, %91 : vector<8x128xf32>
    %cst_68 = arith.constant 0.000000e+00 : f32
    %98 = vector.broadcast %cst_68 : f32 to vector<8x128xf32>
    %99 = arith.maximumf %97, %98 : vector<8x128xf32>
    %100 = arith.truncf %95 : vector<8x128xf32> to vector<8x128xbf16>
    %101 = arith.truncf %99 : vector<8x128xf32> to vector<8x128xbf16>
    %c0_69 = arith.constant 0 : index
    %c0_70 = arith.constant 0 : index
    %102 = vector.load %arg26[%c0_69, %c0_70] : memref<256x128xbf16, #tpu.memory_space<vmem>>, vector<256x128xbf16>
    %cst_71 = arith.constant dense<0.000000e+00> : vector<8x128xf32>
    %103 = tpu.matmul %11, %102, %cst_71 {dimension_numbers = #tpu.dot_dimension_numbers<[1], [0], [0], [1], [0, 0, 1, 1], [], []>} : vector<8x256xbf16>, vector<256x128xbf16>, vector<8x128xf32> -> vector<8x128xf32>
    %c0_72 = arith.constant 0 : index
    %c0_73 = arith.constant 0 : index
    %104 = vector.load %arg27[%c0_72, %c0_73] : memref<128x128xbf16, #tpu.memory_space<vmem>>, vector<128x128xbf16>
    %cst_74 = arith.constant dense<0.000000e+00> : vector<8x128xf32>
    %105 = tpu.matmul %29, %104, %cst_74 {dimension_numbers = #tpu.dot_dimension_numbers<[1], [0], [0], [1], [0, 0, 1, 1], [], []>} : vector<8x128xbf16>, vector<128x128xbf16>, vector<8x128xf32> -> vector<8x128xf32>
    %106 = arith.addf %103, %105 : vector<8x128xf32>
    %c0_75 = arith.constant 0 : index
    %c0_76 = arith.constant 0 : index
    %107 = vector.load %arg28[%c0_75, %c0_76] : memref<1x128xf32, #tpu.memory_space<vmem>>, vector<1x128xf32>
    %108 = vector.broadcast %107 : vector<1x128xf32> to vector<8x128xf32>
    %109 = arith.addf %106, %108 : vector<8x128xf32>
    %cst_77 = arith.constant dense<0.000000e+00> : vector<128xf32>
    %110 = vector.multi_reduction <add>, %109, %cst_77 [0] : vector<8x128xf32> to vector<128xf32>
    %111 = vector.shape_cast %110 : vector<128xf32> to vector<1x128xf32>
    %cst_78 = arith.constant 8.000000e+00 : f32
    %112 = vector.broadcast %cst_78 : f32 to vector<1x128xf32>
    %113 = arith.divf %111, %112 : vector<1x128xf32>
    %114 = arith.mulf %109, %109 : vector<8x128xf32>
    %cst_79 = arith.constant dense<0.000000e+00> : vector<128xf32>
    %115 = vector.multi_reduction <add>, %114, %cst_79 [0] : vector<8x128xf32> to vector<128xf32>
    %116 = vector.shape_cast %115 : vector<128xf32> to vector<1x128xf32>
    %cst_80 = arith.constant 8.000000e+00 : f32
    %117 = vector.broadcast %cst_80 : f32 to vector<1x128xf32>
    %118 = arith.divf %116, %117 : vector<1x128xf32>
    %119 = arith.mulf %113, %113 : vector<1x128xf32>
    %120 = arith.subf %118, %119 : vector<1x128xf32>
    %c0_81 = arith.constant 0 : index
    %c0_82 = arith.constant 0 : index
    %121 = vector.load %arg29[%c0_81, %c0_82] : memref<1x128xf32, #tpu.memory_space<vmem>>, vector<1x128xf32>
    %cst_83 = arith.constant 9.99999974E-6 : f32
    %122 = vector.broadcast %cst_83 : f32 to vector<1x128xf32>
    %123 = arith.addf %120, %122 : vector<1x128xf32>
    %124 = math.rsqrt %123 : vector<1x128xf32>
    %125 = arith.mulf %121, %124 : vector<1x128xf32>
    %c0_84 = arith.constant 0 : index
    %c0_85 = arith.constant 0 : index
    %126 = vector.load %arg30[%c0_84, %c0_85] : memref<1x128xf32, #tpu.memory_space<vmem>>, vector<1x128xf32>
    %127 = arith.mulf %113, %125 : vector<1x128xf32>
    %128 = arith.subf %126, %127 : vector<1x128xf32>
    %129 = vector.broadcast %125 : vector<1x128xf32> to vector<8x128xf32>
    %130 = arith.mulf %109, %129 : vector<8x128xf32>
    %131 = vector.broadcast %128 : vector<1x128xf32> to vector<8x128xf32>
    %132 = arith.addf %130, %131 : vector<8x128xf32>
    %cst_86 = arith.constant 0.000000e+00 : f32
    %133 = vector.broadcast %cst_86 : f32 to vector<8x128xf32>
    %134 = arith.maximumf %132, %133 : vector<8x128xf32>
    %135 = arith.truncf %134 : vector<8x128xf32> to vector<8x128xbf16>
    %136 = tpu.concatenate %135, %29 in 1 : vector<8x128xbf16>, vector<8x128xbf16> -> vector<8x256xbf16>
    %c0_87 = arith.constant 0 : index
    %c0_88 = arith.constant 0 : index
    %137 = vector.load %arg31[%c0_87, %c0_88] : memref<256x256xbf16, #tpu.memory_space<vmem>>, vector<256x256xbf16>
    %cst_89 = arith.constant dense<0.000000e+00> : vector<8x256xf32>
    %138 = tpu.matmul %136, %137, %cst_89 {dimension_numbers = #tpu.dot_dimension_numbers<[1], [0], [0], [1], [0, 0, 1, 1], [], []>} : vector<8x256xbf16>, vector<256x256xbf16>, vector<8x256xf32> -> vector<8x256xf32>
    %c0_90 = arith.constant 0 : index
    %c0_91 = arith.constant 0 : index
    %139 = vector.load %arg34[%c0_90, %c0_91] : memref<1x256xf32, #tpu.memory_space<vmem>>, vector<1x256xf32>
    %140 = vector.broadcast %139 : vector<1x256xf32> to vector<8x256xf32>
    %141 = arith.addf %138, %140 : vector<8x256xf32>
    %cst_92 = arith.constant dense<0.000000e+00> : vector<8x128xf32>
    %142 = tpu.matmul %30, %135, %cst_92 {dimension_numbers = #tpu.dot_dimension_numbers<[1], [0], [0], [1], [0, 0, 1, 1], [], []>} : vector<8x8xbf16>, vector<8x128xbf16>, vector<8x128xf32> -> vector<8x128xf32>
    %143 = vector.broadcast %32 : vector<8x1xf32> to vector<8x128xf32>
    %144 = arith.mulf %142, %143 : vector<8x128xf32>
    %145 = arith.truncf %144 : vector<8x128xf32> to vector<8x128xbf16>
    %c0_93 = arith.constant 0 : index
    %c0_94 = arith.constant 0 : index
    %146 = vector.load %arg32[%c0_93, %c0_94] : memref<128x128xbf16, #tpu.memory_space<vmem>>, vector<128x128xbf16>
    %cst_95 = arith.constant dense<0.000000e+00> : vector<8x128xf32>
    %147 = tpu.matmul %145, %146, %cst_95 {dimension_numbers = #tpu.dot_dimension_numbers<[1], [0], [0], [1], [0, 0, 1, 1], [], []>} : vector<8x128xbf16>, vector<128x128xbf16>, vector<8x128xf32> -> vector<8x128xf32>
    %148 = arith.truncf %147 : vector<8x128xf32> to vector<8x128xbf16>
    %cst_96 = arith.constant dense<0.000000e+00> : vector<8x128xf32>
    %149 = tpu.matmul %31, %148, %cst_96 {dimension_numbers = #tpu.dot_dimension_numbers<[1], [0], [0], [1], [0, 0, 1, 1], [], []>} : vector<8x8xbf16>, vector<8x128xbf16>, vector<8x128xf32> -> vector<8x128xf32>
    %cst_97 = arith.constant dense<0.000000e+00> : vector<8x128xf32>
    %150 = tpu.matmul %33, %135, %cst_97 {dimension_numbers = #tpu.dot_dimension_numbers<[1], [0], [0], [1], [0, 0, 1, 1], [], []>} : vector<8x8xbf16>, vector<8x128xbf16>, vector<8x128xf32> -> vector<8x128xf32>
    %151 = vector.broadcast %35 : vector<8x1xf32> to vector<8x128xf32>
    %152 = arith.mulf %150, %151 : vector<8x128xf32>
    %153 = arith.truncf %152 : vector<8x128xf32> to vector<8x128xbf16>
    %c0_98 = arith.constant 0 : index
    %c0_99 = arith.constant 0 : index
    %154 = vector.load %arg33[%c0_98, %c0_99] : memref<128x128xbf16, #tpu.memory_space<vmem>>, vector<128x128xbf16>
    %cst_100 = arith.constant dense<0.000000e+00> : vector<8x128xf32>
    %155 = tpu.matmul %153, %154, %cst_100 {dimension_numbers = #tpu.dot_dimension_numbers<[1], [0], [0], [1], [0, 0, 1, 1], [], []>} : vector<8x128xbf16>, vector<128x128xbf16>, vector<8x128xf32> -> vector<8x128xf32>
    %156 = arith.truncf %155 : vector<8x128xf32> to vector<8x128xbf16>
    %cst_101 = arith.constant dense<0.000000e+00> : vector<8x128xf32>
    %157 = tpu.matmul %34, %156, %cst_101 {dimension_numbers = #tpu.dot_dimension_numbers<[1], [0], [0], [1], [0, 0, 1, 1], [], []>} : vector<8x8xbf16>, vector<8x128xbf16>, vector<8x128xf32> -> vector<8x128xf32>
    %158 = vector.extract_strided_slice %141 {offsets = [0, 0], sizes = [8, 128], strides = [1, 1]} : vector<8x256xf32> to vector<8x128xf32>
    %159 = arith.addf %158, %149 : vector<8x128xf32>
    %cst_102 = arith.constant 0.000000e+00 : f32
    %160 = vector.broadcast %cst_102 : f32 to vector<8x128xf32>
    %161 = arith.maximumf %159, %160 : vector<8x128xf32>
    %162 = vector.extract_strided_slice %141 {offsets = [0, 128], sizes = [8, 128], strides = [1, 1]} : vector<8x256xf32> to vector<8x128xf32>
    %163 = arith.addf %162, %157 : vector<8x128xf32>
    %cst_103 = arith.constant 0.000000e+00 : f32
    %164 = vector.broadcast %cst_103 : f32 to vector<8x128xf32>
    %165 = arith.maximumf %163, %164 : vector<8x128xf32>
    %166 = arith.truncf %161 : vector<8x128xf32> to vector<8x128xbf16>
    %167 = arith.truncf %165 : vector<8x128xf32> to vector<8x128xbf16>
    %c0_104 = arith.constant 0 : index
    %c0_105 = arith.constant 0 : index
    %168 = vector.load %arg9[%c0_104, %c0_105] : memref<8x8xbf16, #tpu.memory_space<vmem>>, vector<8x8xbf16>
    %cst_106 = arith.constant dense<0.000000e+00> : vector<8x128xf32>
    %169 = tpu.matmul %168, %100, %cst_106 {dimension_numbers = #tpu.dot_dimension_numbers<[1], [0], [0], [1], [0, 0, 1, 1], [], []>} : vector<8x8xbf16>, vector<8x128xbf16>, vector<8x128xf32> -> vector<8x128xf32>
    %cst_107 = arith.constant dense<0.000000e+00> : vector<8x128xf32>
    %170 = tpu.matmul %168, %101, %cst_107 {dimension_numbers = #tpu.dot_dimension_numbers<[1], [0], [0], [1], [0, 0, 1, 1], [], []>} : vector<8x8xbf16>, vector<8x128xbf16>, vector<8x128xf32> -> vector<8x128xf32>
    %cst_108 = arith.constant dense<0.000000e+00> : vector<8x128xf32>
    %171 = tpu.matmul %168, %166, %cst_108 {dimension_numbers = #tpu.dot_dimension_numbers<[1], [0], [0], [1], [0, 0, 1, 1], [], []>} : vector<8x8xbf16>, vector<8x128xbf16>, vector<8x128xf32> -> vector<8x128xf32>
    %cst_109 = arith.constant dense<0.000000e+00> : vector<8x128xf32>
    %172 = tpu.matmul %168, %167, %cst_109 {dimension_numbers = #tpu.dot_dimension_numbers<[1], [0], [0], [1], [0, 0, 1, 1], [], []>} : vector<8x8xbf16>, vector<8x128xbf16>, vector<8x128xf32> -> vector<8x128xf32>
    %173 = tpu.concatenate %169, %170, %171, %172 in 1 : vector<8x128xf32>, vector<8x128xf32>, vector<8x128xf32>, vector<8x128xf32> -> vector<8x512xf32>
    %c0_110 = arith.constant 0 : index
    %c0_111 = arith.constant 0 : index
    %174 = vector.load %arg10[%c0_110, %c0_111] : memref<8x1xf32, #tpu.memory_space<vmem>>, vector<8x1xf32>
    %175 = vector.broadcast %174 : vector<8x1xf32> to vector<8x512xf32>
    %176 = arith.mulf %173, %175 : vector<8x512xf32>
    %177 = arith.truncf %176 : vector<8x512xf32> to vector<8x512xbf16>
    %c0_112 = arith.constant 0 : index
    %c0_113 = arith.constant 0 : index
    %178 = vector.load %arg35[%c0_112, %c0_113] : memref<512x16xbf16, #tpu.memory_space<vmem>>, vector<512x16xbf16>
    %cst_114 = arith.constant dense<0.000000e+00> : vector<8x16xf32>
    %179 = tpu.matmul %177, %178, %cst_114 {dimension_numbers = #tpu.dot_dimension_numbers<[1], [0], [0], [1], [0, 0, 1, 1], [], []>} : vector<8x512xbf16>, vector<512x16xbf16>, vector<8x16xf32> -> vector<8x16xf32>
    %c0_115 = arith.constant 0 : index
    %c0_116 = arith.constant 0 : index
    %180 = vector.load %arg36[%c0_115, %c0_116] : memref<1x16xf32, #tpu.memory_space<vmem>>, vector<1x16xf32>
    %181 = vector.broadcast %180 : vector<1x16xf32> to vector<8x16xf32>
    %182 = arith.addf %179, %181 : vector<8x16xf32>
    %cst_117 = arith.constant 0.000000e+00 : f32
    %183 = vector.broadcast %cst_117 : f32 to vector<8x16xf32>
    %184 = arith.maximumf %182, %183 : vector<8x16xf32>
    %185 = arith.truncf %184 : vector<8x16xf32> to vector<8x16xbf16>
    %c0_118 = arith.constant 0 : index
    %c0_119 = arith.constant 0 : index
    %186 = vector.load %arg37[%c0_118, %c0_119] : memref<16x128xbf16, #tpu.memory_space<vmem>>, vector<16x128xbf16>
    %cst_120 = arith.constant dense<0.000000e+00> : vector<8x128xf32>
    %187 = tpu.matmul %185, %186, %cst_120 {dimension_numbers = #tpu.dot_dimension_numbers<[1], [0], [0], [1], [0, 0, 1, 1], [], []>} : vector<8x16xbf16>, vector<16x128xbf16>, vector<8x128xf32> -> vector<8x128xf32>
    %c0_121 = arith.constant 0 : index
    %c0_122 = arith.constant 0 : index
    %188 = vector.load %arg38[%c0_121, %c0_122] : memref<1x128xf32, #tpu.memory_space<vmem>>, vector<1x128xf32>
    %189 = vector.broadcast %188 : vector<1x128xf32> to vector<8x128xf32>
    %190 = arith.addf %187, %189 : vector<8x128xf32>
    %cst_123 = arith.constant 0.000000e+00 : f32
    %191 = vector.broadcast %cst_123 : f32 to vector<8x128xf32>
    %192 = arith.maximumf %190, %191 : vector<8x128xf32>
    %c0_124 = arith.constant 0 : index
    %c0_125 = arith.constant 0 : index
    %193 = vector.load %arg39[%c0_124, %c0_125] : memref<8x128xf32, #tpu.memory_space<vmem>>, vector<8x128xf32>
    tpu.vector_store %arg39[%c0_124, %c0_125], %192 {strides = array<i32>} : memref<8x128xf32, #tpu.memory_space<vmem>>, vector<8x128xf32>,
    return
  }
}

</mosaic_0001>

<llo_original>
// kernel: tpu_custom_call.1
$region0: #{tpu_custom_call.1}
  #allocation0 [shape = 'u32[]', space=smem, size = 0x4, offset = 0x4, fixed_abs, tag = 'smem constant byte address 0x4 - core index']
  #allocation1 [shape = 'u32[144,128]{1,0:T(1,128)}', space=vmem, size = 0x12000, scoped, tag = 'internal scratch']
  %s0 = inlined_call_operand.smem [shape: u32[40], index: -1, kind: input, shape index: {}]
  %s1 = sld [smem:[%s0]]
  %s2 = scalar_lea.smem %s0, 1
  %s3 = sld [smem:[%s2]]
  %s4 = scalar_lea.smem %s0, 2
  %s5 = sld [smem:[%s4]]
  %s6 = scalar_lea.smem %s0, 3
  %s7 = sld [smem:[%s6]]
  %s8 = scalar_lea.smem %s0, 4
  %s9 = sld [smem:[%s8]]
  %s10 = scalar_lea.smem %s0, 5
  %s11 = sld [smem:[%s10]]
  %s12 = scalar_lea.smem %s0, 6
  %s13 = sld [smem:[%s12]]
  %s14 = scalar_lea.smem %s0, 7
  %s15 = sld [smem:[%s14]]
  %s16 = scalar_lea.smem %s0, 8
  %s17 = sld [smem:[%s16]]
  %s18 = scalar_lea.smem %s0, 9
  %s19 = sld [smem:[%s18]]
  %s20 = scalar_lea.smem %s0, 10
  %s21 = sld [smem:[%s20]]
  %s22 = scalar_lea.smem %s0, 11
  %s23 = sld [smem:[%s22]]
  %s24 = scalar_lea.smem %s0, 12
  %s25 = sld [smem:[%s24]]
  %s26 = scalar_lea.smem %s0, 13
  %s27 = sld [smem:[%s26]]
  %s28 = scalar_lea.smem %s0, 14
  %s29 = sld [smem:[%s28]]
  %s30 = scalar_lea.smem %s0, 15
  %s31 = sld [smem:[%s30]]
  %s32 = scalar_lea.smem %s0, 16
  %s33 = sld [smem:[%s32]]
  %s34 = scalar_lea.smem %s0, 17
  %s35 = sld [smem:[%s34]]
  %s36 = scalar_lea.smem %s0, 18
  %s37 = sld [smem:[%s36]]
  %s38 = scalar_lea.smem %s0, 19
  %s39 = sld [smem:[%s38]]
  %s40 = scalar_lea.smem %s0, 20
  %s41 = sld [smem:[%s40]]
  %s42 = scalar_lea.smem %s0, 21
  %s43 = sld [smem:[%s42]]
  %s44 = scalar_lea.smem %s0, 22
  %s45 = sld [smem:[%s44]]
  %s46 = scalar_lea.smem %s0, 23
  %s47 = sld [smem:[%s46]]
  %s48 = scalar_lea.smem %s0, 24
  %s49 = sld [smem:[%s48]]
  %s50 = scalar_lea.smem %s0, 25
  %s51 = sld [smem:[%s50]]
  %s52 = scalar_lea.smem %s0, 26
  %s53 = sld [smem:[%s52]]
  %s54 = scalar_lea.smem %s0, 27
  %s55 = sld [smem:[%s54]]
  %s56 = scalar_lea.smem %s0, 28
  %s57 = sld [smem:[%s56]]
  %s58 = scalar_lea.smem %s0, 29
  %s59 = sld [smem:[%s58]]
  %s60 = scalar_lea.smem %s0, 30
  %s61 = sld [smem:[%s60]]
  %s62 = scalar_lea.smem %s0, 31
  %s63 = sld [smem:[%s62]]
  %s64 = scalar_lea.smem %s0, 32
  %s65 = sld [smem:[%s64]]
  %s66 = scalar_lea.smem %s0, 33
  %s67 = sld [smem:[%s66]]
  %s68 = scalar_lea.smem %s0, 34
  %s69 = sld [smem:[%s68]]
  %s70 = scalar_lea.smem %s0, 35
  %s71 = sld [smem:[%s70]]
  %s72 = scalar_lea.smem %s0, 36
  %s73 = sld [smem:[%s72]]
  %s74 = scalar_lea.smem %s0, 37
  %s75 = sld [smem:[%s74]]
  %s76 = scalar_lea.smem %s0, 38
  %s77 = sld [smem:[%s76]]
  %s78 = scalar_lea.smem %s0, 39
  %s79 = sld [smem:[%s78]]
  %s80 = sld [smem:[#allocation0]]
  $region274: #{tpu_custom_call.1} parent=0
    _
  %s82 = ssub.s32 1, %s80
  %s83 = scalar_select 0, %s82, %s80
  $region1: #{tpu_custom_call.1} parent=0
    #allocation2 [shape = 'u8[4096]{0}', space=vmem, size = 0x1000, scoped, tag = 'input window, operand 0, single buffered']
    #allocation3 [shape = 's32[1]{0}', space=sflag, size = 0x4, scoped, tag = 'scoped memory for tpu_custom_call.1']
    #allocation4 [shape = 's32[1]{0}', space=sflag, size = 0x4, scoped, tag = 'scoped memory for tpu_custom_call.1']
    #allocation5 [shape = 'u8[2048]{0}', space=vmem, size = 0x800, scoped, tag = 'input window, operand 1, single buffered']
    #allocation6 [shape = 's32[1]{0}', space=sflag, size = 0x4, scoped, tag = 'scoped memory for tpu_custom_call.1']
    #allocation7 [shape = 'u8[2048]{0}', space=vmem, size = 0x800, scoped, tag = 'input window, operand 2, single buffered']
    #allocation8 [shape = 'u8[2048]{0}', space=vmem, size = 0x800, scoped, tag = 'input window, operand 3, single buffered']
    #allocation9 [shape = 's32[1]{0}', space=sflag, size = 0x4, scoped, tag = 'scoped memory for tpu_custom_call.1']
    #allocation10 [shape = 'u8[2048]{0}', space=vmem, size = 0x800, scoped, tag = 'input window, operand 4, single buffered']
    #allocation11 [shape = 'u8[2048]{0}', space=vmem, size = 0x800, scoped, tag = 'input window, operand 6, single buffered']
    #allocation12 [shape = 's32[1]{0}', space=sflag, size = 0x4, scoped, tag = 'scoped memory for tpu_custom_call.1']
    #allocation13 [shape = 'u8[2048]{0}', space=vmem, size = 0x800, scoped, tag = 'input window, operand 7, single buffered']
    #allocation14 [shape = 'u8[2048]{0}', space=vmem, size = 0x800, scoped, tag = 'input window, operand 9, single buffered']
    #allocation15 [shape = 's32[1]{0}', space=sflag, size = 0x4, scoped, tag = 'scoped memory for tpu_custom_call.1']
    #allocation16 [shape = 'u8[32768]{0}', space=vmem, size = 0x8000, scoped, tag = 'input window, operand 11, single buffered']
    #allocation17 [shape = 'u8[32768]{0}', space=vmem, size = 0x8000, scoped, tag = 'input window, operand 13, single buffered']
    #allocation18 [shape = 's32[1]{0}', space=sflag, size = 0x4, scoped, tag = 'scoped memory for tpu_custom_call.1']
    #allocation19 [shape = 'u8[512]{0}', space=vmem, size = 0x400, scoped, tag = 'input window, operand 14, single buffered']
    #allocation20 [shape = 'u8[32768]{0}', space=vmem, size = 0x8000, scoped, tag = 'input window, operand 15, single buffered']
    #allocation21 [shape = 's32[1]{0}', space=sflag, size = 0x4, scoped, tag = 'scoped memory for tpu_custom_call.1']
    #allocation22 [shape = 'u8[512]{0}', space=vmem, size = 0x400, scoped, tag = 'input window, operand 16, single buffered']
    #allocation23 [shape = 'u8[32768]{0}', space=vmem, size = 0x8000, scoped, tag = 'input window, operand 18, single buffered']
    #allocation24 [shape = 's32[1]{0}', space=sflag, size = 0x4, scoped, tag = 'scoped memory for tpu_custom_call.1']
    #allocation25 [shape = 'u8[512]{0}', space=vmem, size = 0x400, scoped, tag = 'input window, operand 19, single buffered']
    #allocation26 [shape = 'u8[512]{0}', space=vmem, size = 0x400, scoped, tag = 'input window, operand 20, single buffered']
    #allocation27 [shape = 's32[1]{0}', space=sflag, size = 0x4, scoped, tag = 'scoped memory for tpu_custom_call.1']
    #allocation28 [shape = 'u8[512]{0}', space=vmem, size = 0x400, scoped, tag = 'input window, operand 21, single buffered']
    #allocation29 [shape = 'u8[32768]{0}', space=vmem, size = 0x8000, scoped, tag = 'input window, operand 23, single buffered']
    #allocation30 [shape = 's32[1]{0}', space=sflag, size = 0x4, scoped, tag = 'scoped memory for tpu_custom_call.1']
    #allocation31 [shape = 'u8[32768]{0}', space=vmem, size = 0x8000, scoped, tag = 'input window, operand 24, single buffered']
    #allocation32 [shape = 'u8[1024]{0}', space=vmem, size = 0x400, scoped, tag = 'input window, operand 25, single buffered']
    #allocation33 [shape = 's32[1]{0}', space=sflag, size = 0x4, scoped, tag = 'scoped memory for tpu_custom_call.1']
    #allocation34 [shape = 'u8[65536]{0}', space=vmem, size = 0x10000, scoped, tag = 'input window, operand 26, single buffered']
    #allocation35 [shape = 'u8[32768]{0}', space=vmem, size = 0x8000, scoped, tag = 'input window, operand 27, single buffered']
    #allocation36 [shape = 's32[1]{0}', space=sflag, size = 0x4, scoped, tag = 'scoped memory for tpu_custom_call.1']
    #allocation37 [shape = 'u8[512]{0}', space=vmem, size = 0x400, scoped, tag = 'input window, operand 29, single buffered']
    #allocation38 [shape = 'u8[512]{0}', space=vmem, size = 0x400, scoped, tag = 'input window, operand 30, single buffered']
    #allocation39 [shape = 's32[1]{0}', space=sflag, size = 0x4, scoped, tag = 'scoped memory for tpu_custom_call.1']
    #allocation40 [shape = 'u8[131072]{0}', space=vmem, size = 0x20000, scoped, tag = 'input window, operand 31, single buffered']
    #allocation41 [shape = 'u8[32768]{0}', space=vmem, size = 0x8000, scoped, tag = 'input window, operand 32, single buffered']
    #allocation42 [shape = 's32[1]{0}', space=sflag, size = 0x4, scoped, tag = 'scoped memory for tpu_custom_call.1']
    #allocation43 [shape = 'u8[32768]{0}', space=vmem, size = 0x8000, scoped, tag = 'input window, operand 33, single buffered']
    #allocation44 [shape = 'u8[4096]{0}', space=vmem, size = 0x1000, scoped, tag = 'output window, operand 0, single buffered']
    %84 = vsyncpa [#allocation3], 0
    %85 = vsyncpa [#allocation6], 0
    %86 = vsyncpa [#allocation9], 0
    %87 = vsyncpa [#allocation12], 0
    %88 = vsyncpa [#allocation15], 0
    %89 = vsyncpa [#allocation18], 0
    %90 = vsyncpa [#allocation21], 0
    %91 = vsyncpa [#allocation24], 0
    %92 = vsyncpa [#allocation27], 0
    %93 = vsyncpa [#allocation30], 0
    %94 = vsyncpa [#allocation33], 0
    %95 = vsyncpa [#allocation36], 0
    %96 = vsyncpa [#allocation39], 0
    %97 = vsyncpa [#allocation42], 0
    %98 = vsyncpa [#allocation4], 0
    // Predicated region
    $region2: #{tpu_custom_call.1} parent=1 // pred_check
      _
    $region3: #{tpu_custom_call.1} parent=1 // pred_check_branch
      %100 = sbr.rel (0) target = $region5
    $region4: #{tpu_custom_call.1} parent=1 // pred_region
      %s102 = ssub.s32 128, 128
      %103 = vsyncadd [#allocation3], %s102
      %s104 = sshll.u32 [#allocation2], 4
      %s105 = int_to_ptr.vmem [resolvable:$true] %s104
      %110 = dma.hbm_to_vmem [thread:$0]  %s1, 128, %s105, [#allocation3], 64, 64, 4
    $region5: #{tpu_custom_call.1} parent=1 // pred_fallthru
      _
    // Predicated region
    $region6: #{tpu_custom_call.1} parent=1 // pred_check
      _
    $region7: #{tpu_custom_call.1} parent=1 // pred_check_branch
      %112 = sbr.rel (0) target = $region9
    $region8: #{tpu_custom_call.1} parent=1 // pred_region
      %s114 = ssub.s32 64, 64
      %115 = vsyncadd [#allocation6], %s114
      %s117 = sshll.u32 [#allocation5], 4
      %s118 = int_to_ptr.vmem [resolvable:$true] %s117
      %120 = dma.hbm_to_vmem [thread:$0]  %s3, 64, %s118, [#allocation6]
    $region9: #{tpu_custom_call.1} parent=1 // pred_fallthru
      _
    // Predicated region
    $region10: #{tpu_custom_call.1} parent=1 // pred_check
      _
    $region11: #{tpu_custom_call.1} parent=1 // pred_check_branch
      %122 = sbr.rel (0) target = $region13
    $region12: #{tpu_custom_call.1} parent=1 // pred_region
      %s124 = ssub.s32 64, 64
      %125 = vsyncadd [#allocation6], %s124
      %s127 = sshll.u32 [#allocation7], 4
      %s128 = int_to_ptr.vmem [resolvable:$true] %s127
      %130 = dma.hbm_to_vmem [thread:$0]  %s5, 64, %s128, [#allocation6]
    $region13: #{tpu_custom_call.1} parent=1 // pred_fallthru
      _
    // Predicated region
    $region14: #{tpu_custom_call.1} parent=1 // pred_check
      _
    $region15: #{tpu_custom_call.1} parent=1 // pred_check_branch
      %132 = sbr.rel (0) target = $region17
    $region16: #{tpu_custom_call.1} parent=1 // pred_region
      %s134 = ssub.s32 64, 64
      %135 = vsyncadd [#allocation9], %s134
      %s137 = sshll.u32 [#allocation8], 4
      %s138 = int_to_ptr.vmem [resolvable:$true] %s137
      %140 = dma.hbm_to_vmem [thread:$0]  %s7, 64, %s138, [#allocation9]
    $region17: #{tpu_custom_call.1} parent=1 // pred_fallthru
      _
    // Predicated region
    $region18: #{tpu_custom_call.1} parent=1 // pred_check
      _
    $region19: #{tpu_custom_call.1} parent=1 // pred_check_branch
      %142 = sbr.rel (0) target = $region21
    $region20: #{tpu_custom_call.1} parent=1 // pred_region
      %s144 = ssub.s32 64, 64
      %145 = vsyncadd [#allocation9], %s144
      %s147 = sshll.u32 [#allocation10], 4
      %s148 = int_to_ptr.vmem [resolvable:$true] %s147
      %150 = dma.hbm_to_vmem [thread:$0]  %s9, 64, %s148, [#allocation9]
    $region21: #{tpu_custom_call.1} parent=1 // pred_fallthru
      _
    // Predicated region
    $region22: #{tpu_custom_call.1} parent=1 // pred_check
      _
    $region23: #{tpu_custom_call.1} parent=1 // pred_check_branch
      %152 = sbr.rel (0) target = $region25
    $region24: #{tpu_custom_call.1} parent=1 // pred_region
      _
    $region25: #{tpu_custom_call.1} parent=1 // pred_fallthru
      _
    // Predicated region
    $region26: #{tpu_custom_call.1} parent=1 // pred_check
      _
    $region27: #{tpu_custom_call.1} parent=1 // pred_check_branch
      %154 = sbr.rel (0) target = $region29
    $region28: #{tpu_custom_call.1} parent=1 // pred_region
      %s156 = ssub.s32 64, 64
      %157 = vsyncadd [#allocation12], %s156
      %s159 = sshll.u32 [#allocation11], 4
      %s160 = int_to_ptr.vmem [resolvable:$true] %s159
      %162 = dma.hbm_to_vmem [thread:$0]  %s13, 64, %s160, [#allocation12]
    $region29: #{tpu_custom_call.1} parent=1 // pred_fallthru
      _
    // Predicated region
    $region30: #{tpu_custom_call.1} parent=1 // pred_check
      _
    $region31: #{tpu_custom_call.1} parent=1 // pred_check_branch
      %164 = sbr.rel (0) target = $region33
    $region32: #{tpu_custom_call.1} parent=1 // pred_region
      %s166 = ssub.s32 64, 64
      %167 = vsyncadd [#allocation12], %s166
      %s169 = sshll.u32 [#allocation13], 4
      %s170 = int_to_ptr.vmem [resolvable:$true] %s169
      %172 = dma.hbm_to_vmem [thread:$0]  %s15, 64, %s170, [#allocation12]
    $region33: #{tpu_custom_call.1} parent=1 // pred_fallthru
      _
    // Predicated region
    $region34: #{tpu_custom_call.1} parent=1 // pred_check
      _
    $region35: #{tpu_custom_call.1} parent=1 // pred_check_branch
      %174 = sbr.rel (0) target = $region37
    $region36: #{tpu_custom_call.1} parent=1 // pred_region
      _
    $region37: #{tpu_custom_call.1} parent=1 // pred_fallthru
      _
    // Predicated region
    $region38: #{tpu_custom_call.1} parent=1 // pred_check
      _
    $region39: #{tpu_custom_call.1} parent=1 // pred_check_branch
      %176 = sbr.rel (0) target = $region41
    $region40: #{tpu_custom_call.1} parent=1 // pred_region
      %s178 = ssub.s32 64, 64
      %179 = vsyncadd [#allocation15], %s178
      %s181 = sshll.u32 [#allocation14], 4
      %s182 = int_to_ptr.vmem [resolvable:$true] %s181
      %184 = dma.hbm_to_vmem [thread:$0]  %s19, 64, %s182, [#allocation15]
    $region41: #{tpu_custom_call.1} parent=1 // pred_fallthru
      _
    // Predicated region
    $region42: #{tpu_custom_call.1} parent=1 // pred_check
      _
    $region43: #{tpu_custom_call.1} parent=1 // pred_check_branch
      %186 = sbr.rel (0) target = $region45
    $region44: #{tpu_custom_call.1} parent=1 // pred_region
      _
    $region45: #{tpu_custom_call.1} parent=1 // pred_fallthru
      _
    // Predicated region
    $region46: #{tpu_custom_call.1} parent=1 // pred_check
      _
    $region47: #{tpu_custom_call.1} parent=1 // pred_check_branch
      %188 = sbr.rel (0) target = $region49
    $region48: #{tpu_custom_call.1} parent=1 // pred_region
      %s190 = ssub.s32 1024, 1024
      %191 = vsyncadd [#allocation15], %s190
      %s192 = sshll.u32 [#allocation16], 4
      %s193 = int_to_ptr.vmem [resolvable:$true] %s192
      %198 = dma.hbm_to_vmem [thread:$0]  %s23, 1024, %s193, [#allocation15], 64, 64, 4
    $region49: #{tpu_custom_call.1} parent=1 // pred_fallthru
      _
    // Predicated region
    $region50: #{tpu_custom_call.1} parent=1 // pred_check
      _
    $region51: #{tpu_custom_call.1} parent=1 // pred_check_branch
      %200 = sbr.rel (0) target = $region53
    $region52: #{tpu_custom_call.1} parent=1 // pred_region
      _
    $region53: #{tpu_custom_call.1} parent=1 // pred_fallthru
      _
    // Predicated region
    $region54: #{tpu_custom_call.1} parent=1 // pred_check
      _
    $region55: #{tpu_custom_call.1} parent=1 // pred_check_branch
      %202 = sbr.rel (0) target = $region57
    $region56: #{tpu_custom_call.1} parent=1 // pred_region
      %s204 = ssub.s32 1024, 1024
      %205 = vsyncadd [#allocation18], %s204
      %s206 = sshll.u32 [#allocation17], 4
      %s207 = int_to_ptr.vmem [resolvable:$true] %s206
      %212 = dma.hbm_to_vmem [thread:$0]  %s27, 1024, %s207, [#allocation18], 64, 64, 4
    $region57: #{tpu_custom_call.1} parent=1 // pred_fallthru
      _
    // Predicated region
    $region58: #{tpu_custom_call.1} parent=1 // pred_check
      _
    $region59: #{tpu_custom_call.1} parent=1 // pred_check_branch
      %214 = sbr.rel (0) target = $region61
    $region60: #{tpu_custom_call.1} parent=1 // pred_region
      %s216 = ssub.s32 16, 16
      %217 = vsyncadd [#allocation18], %s216
      %s219 = sshll.u32 [#allocation19], 4
      %s220 = int_to_ptr.vmem [resolvable:$true] %s219
      %222 = dma.hbm_to_vmem [thread:$0]  %s29, 16, %s220, [#allocation18]
    $region61: #{tpu_custom_call.1} parent=1 // pred_fallthru
      _
    // Predicated region
    $region62: #{tpu_custom_call.1} parent=1 // pred_check
      _
    $region63: #{tpu_custom_call.1} parent=1 // pred_check_branch
      %224 = sbr.rel (0) target = $region65
    $region64: #{tpu_custom_call.1} parent=1 // pred_region
      %s226 = ssub.s32 1024, 1024
      %227 = vsyncadd [#allocation21], %s226
      %s228 = sshll.u32 [#allocation20], 4
      %s229 = int_to_ptr.vmem [resolvable:$true] %s228
      %234 = dma.hbm_to_vmem [thread:$0]  %s31, 1024, %s229, [#allocation21], 64, 64, 4
    $region65: #{tpu_custom_call.1} parent=1 // pred_fallthru
      _
    // Predicated region
    $region66: #{tpu_custom_call.1} parent=1 // pred_check
      _
    $region67: #{tpu_custom_call.1} parent=1 // pred_check_branch
      %236 = sbr.rel (0) target = $region69
    $region68: #{tpu_custom_call.1} parent=1 // pred_region
      %s238 = ssub.s32 16, 16
      %239 = vsyncadd [#allocation21], %s238
      %s241 = sshll.u32 [#allocation22], 4
      %s242 = int_to_ptr.vmem [resolvable:$true] %s241
      %244 = dma.hbm_to_vmem [thread:$0]  %s33, 16, %s242, [#allocation21]
    $region69: #{tpu_custom_call.1} parent=1 // pred_fallthru
      _
    // Predicated region
    $region70: #{tpu_custom_call.1} parent=1 // pred_check
      _
    $region71: #{tpu_custom_call.1} parent=1 // pred_check_branch
      %246 = sbr.rel (0) target = $region73
    $region72: #{tpu_custom_call.1} parent=1 // pred_region
      _
    $region73: #{tpu_custom_call.1} parent=1 // pred_fallthru
      _
    // Predicated region
    $region74: #{tpu_custom_call.1} parent=1 // pred_check
      _
    $region75: #{tpu_custom_call.1} parent=1 // pred_check_branch
      %248 = sbr.rel (0) target = $region77
    $region76: #{tpu_custom_call.1} parent=1 // pred_region
      %s250 = ssub.s32 1024, 1024
      %251 = vsyncadd [#allocation24], %s250
      %s252 = sshll.u32 [#allocation23], 4
      %s253 = int_to_ptr.vmem [resolvable:$true] %s252
      %258 = dma.hbm_to_vmem [thread:$0]  %s37, 1024, %s253, [#allocation24], 64, 64, 4
    $region77: #{tpu_custom_call.1} parent=1 // pred_fallthru
      _
    // Predicated region
    $region78: #{tpu_custom_call.1} parent=1 // pred_check
      _
    $region79: #{tpu_custom_call.1} parent=1 // pred_check_branch
      %260 = sbr.rel (0) target = $region81
    $region80: #{tpu_custom_call.1} parent=1 // pred_region
      %s262 = ssub.s32 16, 16
      %263 = vsyncadd [#allocation24], %s262
      %s265 = sshll.u32 [#allocation25], 4
      %s266 = int_to_ptr.vmem [resolvable:$true] %s265
      %268 = dma.hbm_to_vmem [thread:$0]  %s39, 16, %s266, [#allocation24]
    $region81: #{tpu_custom_call.1} parent=1 // pred_fallthru
      _
    // Predicated region
    $region82: #{tpu_custom_call.1} parent=1 // pred_check
      _
    $region83: #{tpu_custom_call.1} parent=1 // pred_check_branch
      %270 = sbr.rel (0) target = $region85
    $region84: #{tpu_custom_call.1} parent=1 // pred_region
      %s272 = ssub.s32 16, 16
      %273 = vsyncadd [#allocation27], %s272
      %s275 = sshll.u32 [#allocation26], 4
      %s276 = int_to_ptr.vmem [resolvable:$true] %s275
      %278 = dma.hbm_to_vmem [thread:$0]  %s41, 16, %s276, [#allocation27]
    $region85: #{tpu_custom_call.1} parent=1 // pred_fallthru
      _
    // Predicated region
    $region86: #{tpu_custom_call.1} parent=1 // pred_check
      _
    $region87: #{tpu_custom_call.1} parent=1 // pred_check_branch
      %280 = sbr.rel (0) target = $region89
    $region88: #{tpu_custom_call.1} parent=1 // pred_region
      %s282 = ssub.s32 16, 16
      %283 = vsyncadd [#allocation27], %s282
      %s285 = sshll.u32 [#allocation28], 4
      %s286 = int_to_ptr.vmem [resolvable:$true] %s285
      %288 = dma.hbm_to_vmem [thread:$0]  %s43, 16, %s286, [#allocation27]
    $region89: #{tpu_custom_call.1} parent=1 // pred_fallthru
      _
    // Predicated region
    $region90: #{tpu_custom_call.1} parent=1 // pred_check
      _
    $region91: #{tpu_custom_call.1} parent=1 // pred_check_branch
      %290 = sbr.rel (0) target = $region93
    $region92: #{tpu_custom_call.1} parent=1 // pred_region
      _
    $region93: #{tpu_custom_call.1} parent=1 // pred_fallthru
      _
    // Predicated region
    $region94: #{tpu_custom_call.1} parent=1 // pred_check
      _
    $region95: #{tpu_custom_call.1} parent=1 // pred_check_branch
      %292 = sbr.rel (0) target = $region97
    $region96: #{tpu_custom_call.1} parent=1 // pred_region
      %s294 = ssub.s32 1024, 1024
      %295 = vsyncadd [#allocation30], %s294
      %s296 = sshll.u32 [#allocation29], 4
      %s297 = int_to_ptr.vmem [resolvable:$true] %s296
      %302 = dma.hbm_to_vmem [thread:$0]  %s47, 1024, %s297, [#allocation30], 64, 64, 4
    $region97: #{tpu_custom_call.1} parent=1 // pred_fallthru
      _
    // Predicated region
    $region98: #{tpu_custom_call.1} parent=1 // pred_check
      _
    $region99: #{tpu_custom_call.1} parent=1 // pred_check_branch
      %304 = sbr.rel (0) target = $region101
    $region100: #{tpu_custom_call.1} parent=1 // pred_region
      %s306 = ssub.s32 1024, 1024
      %307 = vsyncadd [#allocation30], %s306
      %s308 = sshll.u32 [#allocation31], 4
      %s309 = int_to_ptr.vmem [resolvable:$true] %s308
      %314 = dma.hbm_to_vmem [thread:$0]  %s49, 1024, %s309, [#allocation30], 64, 64, 4
    $region101: #{tpu_custom_call.1} parent=1 // pred_fallthru
      _
    // Predicated region
    $region102: #{tpu_custom_call.1} parent=1 // pred_check
      _
    $region103: #{tpu_custom_call.1} parent=1 // pred_check_branch
      %316 = sbr.rel (0) target = $region105
    $region104: #{tpu_custom_call.1} parent=1 // pred_region
      %s318 = ssub.s32 32, 32
      %319 = vsyncadd [#allocation33], %s318
      %s321 = sshll.u32 [#allocation32], 4
      %s322 = int_to_ptr.vmem [resolvable:$true] %s321
      %324 = dma.hbm_to_vmem [thread:$0]  %s51, 32, %s322, [#allocation33]
    $region105: #{tpu_custom_call.1} parent=1 // pred_fallthru
      _
    // Predicated region
    $region106: #{tpu_custom_call.1} parent=1 // pred_check
      _
    $region107: #{tpu_custom_call.1} parent=1 // pred_check_branch
      %326 = sbr.rel (0) target = $region109
    $region108: #{tpu_custom_call.1} parent=1 // pred_region
      %s328 = ssub.s32 2048, 2048
      %329 = vsyncadd [#allocation33], %s328
      %s330 = sshll.u32 [#allocation34], 4
      %s331 = int_to_ptr.vmem [resolvable:$true] %s330
      %336 = dma.hbm_to_vmem [thread:$0]  %s53, 2048, %s331, [#allocation33], 64, 64, 4
    $region109: #{tpu_custom_call.1} parent=1 // pred_fallthru
      _
    // Predicated region
    $region110: #{tpu_custom_call.1} parent=1 // pred_check
      _
    $region111: #{tpu_custom_call.1} parent=1 // pred_check_branch
      %338 = sbr.rel (0) target = $region113
    $region112: #{tpu_custom_call.1} parent=1 // pred_region
      %s340 = ssub.s32 1024, 1024
      %341 = vsyncadd [#allocation36], %s340
      %s342 = sshll.u32 [#allocation35], 4
      %s343 = int_to_ptr.vmem [resolvable:$true] %s342
      %348 = dma.hbm_to_vmem [thread:$0]  %s55, 1024, %s343, [#allocation36], 64, 64, 4
    $region113: #{tpu_custom_call.1} parent=1 // pred_fallthru
      _
    // Predicated region
    $region114: #{tpu_custom_call.1} parent=1 // pred_check
      _
    $region115: #{tpu_custom_call.1} parent=1 // pred_check_branch
      %350 = sbr.rel (0) target = $region117
    $region116: #{tpu_custom_call.1} parent=1 // pred_region
      _
    $region117: #{tpu_custom_call.1} parent=1 // pred_fallthru
      _
    // Predicated region
    $region118: #{tpu_custom_call.1} parent=1 // pred_check
      _
    $region119: #{tpu_custom_call.1} parent=1 // pred_check_branch
      %352 = sbr.rel (0) target = $region121
    $region120: #{tpu_custom_call.1} parent=1 // pred_region
      %s354 = ssub.s32 16, 16
      %355 = vsyncadd [#allocation36], %s354
      %s357 = sshll.u32 [#allocation37], 4
      %s358 = int_to_ptr.vmem [resolvable:$true] %s357
      %360 = dma.hbm_to_vmem [thread:$0]  %s59, 16, %s358, [#allocation36]
    $region121: #{tpu_custom_call.1} parent=1 // pred_fallthru
      _
    // Predicated region
    $region122: #{tpu_custom_call.1} parent=1 // pred_check
      _
    $region123: #{tpu_custom_call.1} parent=1 // pred_check_branch
      %362 = sbr.rel (0) target = $region125
    $region124: #{tpu_custom_call.1} parent=1 // pred_region
      %s364 = ssub.s32 16, 16
      %365 = vsyncadd [#allocation39], %s364
      %s367 = sshll.u32 [#allocation38], 4
      %s368 = int_to_ptr.vmem [resolvable:$true] %s367
      %370 = dma.hbm_to_vmem [thread:$0]  %s61, 16, %s368, [#allocation39]
    $region125: #{tpu_custom_call.1} parent=1 // pred_fallthru
      _
    // Predicated region
    $region126: #{tpu_custom_call.1} parent=1 // pred_check
      _
    $region127: #{tpu_custom_call.1} parent=1 // pred_check_branch
      %372 = sbr.rel (0) target = $region129
    $region128: #{tpu_custom_call.1} parent=1 // pred_region
      %s374 = ssub.s32 4096, 4096
      %375 = vsyncadd [#allocation39], %s374
      %s376 = sshll.u32 [#allocation40], 4
      %s377 = int_to_ptr.vmem [resolvable:$true] %s376
      %382 = dma.hbm_to_vmem [thread:$0]  %s63, 4096, %s377, [#allocation39], 128, 128, 8
    $region129: #{tpu_custom_call.1} parent=1 // pred_fallthru
      _
    // Predicated region
    $region130: #{tpu_custom_call.1} parent=1 // pred_check
      _
    $region131: #{tpu_custom_call.1} parent=1 // pred_check_branch
      %384 = sbr.rel (0) target = $region133
    $region132: #{tpu_custom_call.1} parent=1 // pred_region
      %s386 = ssub.s32 1024, 1024
      %387 = vsyncadd [#allocation42], %s386
      %s388 = sshll.u32 [#allocation41], 4
      %s389 = int_to_ptr.vmem [resolvable:$true] %s388
      %394 = dma.hbm_to_vmem [thread:$0]  %s65, 1024, %s389, [#allocation42], 64, 64, 4
    $region133: #{tpu_custom_call.1} parent=1 // pred_fallthru
      _
    // Predicated region
    $region134: #{tpu_custom_call.1} parent=1 // pred_check
      _
    $region135: #{tpu_custom_call.1} parent=1 // pred_check_branch
      %396 = sbr.rel (0) target = $region137
    $region136: #{tpu_custom_call.1} parent=1 // pred_region
      %s398 = ssub.s32 1024, 1024
      %399 = vsyncadd [#allocation42], %s398
      %s400 = sshll.u32 [#allocation43], 4
      %s401 = int_to_ptr.vmem [resolvable:$true] %s400
      %406 = dma.hbm_to_vmem [thread:$0]  %s67, 1024, %s401, [#allocation42], 64, 64, 4
    $region137: #{tpu_custom_call.1} parent=1 // pred_fallthru
      _
    // Predicated region
    $region138: #{tpu_custom_call.1} parent=1 // pred_check
      _
    $region139: #{tpu_custom_call.1} parent=1 // pred_check_branch
      %408 = sbr.rel (0) target = $region141
    $region140: #{tpu_custom_call.1} parent=1 // pred_region
      _
    $region141: #{tpu_custom_call.1} parent=1 // pred_fallthru
      _
    // Predicated region
    $region142: #{tpu_custom_call.1} parent=1 // pred_check
      _
    $region143: #{tpu_custom_call.1} parent=1 // pred_check_branch
      %410 = sbr.rel (0) target = $region145
    $region144: #{tpu_custom_call.1} parent=1 // pred_region
      _
    $region145: #{tpu_custom_call.1} parent=1 // pred_fallthru
      _
    // Predicated region
    $region146: #{tpu_custom_call.1} parent=1 // pred_check
      _
    $region147: #{tpu_custom_call.1} parent=1 // pred_check_branch
      %412 = sbr.rel (0) target = $region149
    $region148: #{tpu_custom_call.1} parent=1 // pred_region
      _
    $region149: #{tpu_custom_call.1} parent=1 // pred_fallthru
      _
    // Predicated region
    $region150: #{tpu_custom_call.1} parent=1 // pred_check
      _
    $region151: #{tpu_custom_call.1} parent=1 // pred_check_branch
      %414 = sbr.rel (0) target = $region153
    $region152: #{tpu_custom_call.1} parent=1 // pred_region
      _
    $region153: #{tpu_custom_call.1} parent=1 // pred_fallthru
      _
    // Predicated region
    $region154: #{tpu_custom_call.1} parent=1 // pred_check
      _
    $region155: #{tpu_custom_call.1} parent=1 // pred_check_branch
      %416 = sbr.rel (0) target = $region157
    $region156: #{tpu_custom_call.1} parent=1 // pred_region
      _
    $region157: #{tpu_custom_call.1} parent=1 // pred_fallthru
      _
    // Predicated region
    $region158: #{tpu_custom_call.1} parent=1 // pred_check
      _
    $region159: #{tpu_custom_call.1} parent=1 // pred_check_branch
      %418 = sbr.rel (0) target = $region161
    $region160: #{tpu_custom_call.1} parent=1 // pred_region
      %419 = dma.done [#allocation3], 128
    $region161: #{tpu_custom_call.1} parent=1 // pred_fallthru
      _
    // Predicated region
    $region162: #{tpu_custom_call.1} parent=1 // pred_check
      _
    $region163: #{tpu_custom_call.1} parent=1 // pred_check_branch
      %421 = sbr.rel (0) target = $region165
    $region164: #{tpu_custom_call.1} parent=1 // pred_region
      %422 = dma.done [#allocation6], 64
    $region165: #{tpu_custom_call.1} parent=1 // pred_fallthru
      _
    // Predicated region
    $region166: #{tpu_custom_call.1} parent=1 // pred_check
      _
    $region167: #{tpu_custom_call.1} parent=1 // pred_check_branch
      %424 = sbr.rel (0) target = $region169
    $region168: #{tpu_custom_call.1} parent=1 // pred_region
      %425 = dma.done [#allocation6], 64
    $region169: #{tpu_custom_call.1} parent=1 // pred_fallthru
      _
    // Predicated region
    $region170: #{tpu_custom_call.1} parent=1 // pred_check
      _
    $region171: #{tpu_custom_call.1} parent=1 // pred_check_branch
      %427 = sbr.rel (0) target = $region173
    $region172: #{tpu_custom_call.1} parent=1 // pred_region
      %428 = dma.done [#allocation9], 64
    $region173: #{tpu_custom_call.1} parent=1 // pred_fallthru
      _
    // Predicated region
    $region174: #{tpu_custom_call.1} parent=1 // pred_check
      _
    $region175: #{tpu_custom_call.1} parent=1 // pred_check_branch
      %430 = sbr.rel (0) target = $region177
    $region176: #{tpu_custom_call.1} parent=1 // pred_region
      %431 = dma.done [#allocation9], 64
    $region177: #{tpu_custom_call.1} parent=1 // pred_fallthru
      _
    // Predicated region
    $region178: #{tpu_custom_call.1} parent=1 // pred_check
      _
    $region179: #{tpu_custom_call.1} parent=1 // pred_check_branch
      %433 = sbr.rel (0) target = $region181
    $region180: #{tpu_custom_call.1} parent=1 // pred_region
      %434 = dma.done [#allocation12], 64
    $region181: #{tpu_custom_call.1} parent=1 // pred_fallthru
      _
    // Predicated region
    $region182: #{tpu_custom_call.1} parent=1 // pred_check
      _
    $region183: #{tpu_custom_call.1} parent=1 // pred_check_branch
      %436 = sbr.rel (0) target = $region185
    $region184: #{tpu_custom_call.1} parent=1 // pred_region
      %437 = dma.done [#allocation12], 64
    $region185: #{tpu_custom_call.1} parent=1 // pred_fallthru
      _
    // Predicated region
    $region186: #{tpu_custom_call.1} parent=1 // pred_check
      _
    $region187: #{tpu_custom_call.1} parent=1 // pred_check_branch
      %439 = sbr.rel (0) target = $region189
    $region188: #{tpu_custom_call.1} parent=1 // pred_region
      %440 = dma.done [#allocation15], 64
    $region189: #{tpu_custom_call.1} parent=1 // pred_fallthru
      _
    // Predicated region
    $region190: #{tpu_custom_call.1} parent=1 // pred_check
      _
    $region191: #{tpu_custom_call.1} parent=1 // pred_check_branch
      %442 = sbr.rel (0) target = $region193
    $region192: #{tpu_custom_call.1} parent=1 // pred_region
      %443 = dma.done [#allocation15], 1024
    $region193: #{tpu_custom_call.1} parent=1 // pred_fallthru
      _
    // Predicated region
    $region194: #{tpu_custom_call.1} parent=1 // pred_check
      _
    $region195: #{tpu_custom_call.1} parent=1 // pred_check_branch
      %445 = sbr.rel (0) target = $region197
    $region196: #{tpu_custom_call.1} parent=1 // pred_region
      %446 = dma.done [#allocation18], 1024
    $region197: #{tpu_custom_call.1} parent=1 // pred_fallthru
      _
    // Predicated region
    $region198: #{tpu_custom_call.1} parent=1 // pred_check
      _
    $region199: #{tpu_custom_call.1} parent=1 // pred_check_branch
      %448 = sbr.rel (0) target = $region201
    $region200: #{tpu_custom_call.1} parent=1 // pred_region
      %449 = dma.done [#allocation18], 16
    $region201: #{tpu_custom_call.1} parent=1 // pred_fallthru
      _
    // Predicated region
    $region202: #{tpu_custom_call.1} parent=1 // pred_check
      _
    $region203: #{tpu_custom_call.1} parent=1 // pred_check_branch
      %451 = sbr.rel (0) target = $region205
    $region204: #{tpu_custom_call.1} parent=1 // pred_region
      %452 = dma.done [#allocation21], 1024
    $region205: #{tpu_custom_call.1} parent=1 // pred_fallthru
      _
    // Predicated region
    $region206: #{tpu_custom_call.1} parent=1 // pred_check
      _
    $region207: #{tpu_custom_call.1} parent=1 // pred_check_branch
      %454 = sbr.rel (0) target = $region209
    $region208: #{tpu_custom_call.1} parent=1 // pred_region
      %455 = dma.done [#allocation21], 16
    $region209: #{tpu_custom_call.1} parent=1 // pred_fallthru
      _
    // Predicated region
    $region210: #{tpu_custom_call.1} parent=1 // pred_check
      _
    $region211: #{tpu_custom_call.1} parent=1 // pred_check_branch
      %457 = sbr.rel (0) target = $region213
    $region212: #{tpu_custom_call.1} parent=1 // pred_region
      %458 = dma.done [#allocation24], 1024
    $region213: #{tpu_custom_call.1} parent=1 // pred_fallthru
      _
    // Predicated region
    $region214: #{tpu_custom_call.1} parent=1 // pred_check
      _
    $region215: #{tpu_custom_call.1} parent=1 // pred_check_branch
      %460 = sbr.rel (0) target = $region217
    $region216: #{tpu_custom_call.1} parent=1 // pred_region
      %461 = dma.done [#allocation24], 16
    $region217: #{tpu_custom_call.1} parent=1 // pred_fallthru
      _
    // Predicated region
    $region218: #{tpu_custom_call.1} parent=1 // pred_check
      _
    $region219: #{tpu_custom_call.1} parent=1 // pred_check_branch
      %463 = sbr.rel (0) target = $region221
    $region220: #{tpu_custom_call.1} parent=1 // pred_region
      %464 = dma.done [#allocation27], 16
    $region221: #{tpu_custom_call.1} parent=1 // pred_fallthru
      _
    // Predicated region
    $region222: #{tpu_custom_call.1} parent=1 // pred_check
      _
    $region223: #{tpu_custom_call.1} parent=1 // pred_check_branch
      %466 = sbr.rel (0) target = $region225
    $region224: #{tpu_custom_call.1} parent=1 // pred_region
      %467 = dma.done [#allocation27], 16
    $region225: #{tpu_custom_call.1} parent=1 // pred_fallthru
      _
    // Predicated region
    $region226: #{tpu_custom_call.1} parent=1 // pred_check
      _
    $region227: #{tpu_custom_call.1} parent=1 // pred_check_branch
      %469 = sbr.rel (0) target = $region229
    $region228: #{tpu_custom_call.1} parent=1 // pred_region
      %470 = dma.done [#allocation30], 1024
    $region229: #{tpu_custom_call.1} parent=1 // pred_fallthru
      _
    // Predicated region
    $region230: #{tpu_custom_call.1} parent=1 // pred_check
      _
    $region231: #{tpu_custom_call.1} parent=1 // pred_check_branch
      %472 = sbr.rel (0) target = $region233
    $region232: #{tpu_custom_call.1} parent=1 // pred_region
      %473 = dma.done [#allocation30], 1024
    $region233: #{tpu_custom_call.1} parent=1 // pred_fallthru
      _
    // Predicated region
    $region234: #{tpu_custom_call.1} parent=1 // pred_check
      _
    $region235: #{tpu_custom_call.1} parent=1 // pred_check_branch
      %475 = sbr.rel (0) target = $region237
    $region236: #{tpu_custom_call.1} parent=1 // pred_region
      %476 = dma.done [#allocation33], 32
    $region237: #{tpu_custom_call.1} parent=1 // pred_fallthru
      _
    // Predicated region
    $region238: #{tpu_custom_call.1} parent=1 // pred_check
      _
    $region239: #{tpu_custom_call.1} parent=1 // pred_check_branch
      %478 = sbr.rel (0) target = $region241
    $region240: #{tpu_custom_call.1} parent=1 // pred_region
      %479 = dma.done [#allocation33], 2048
    $region241: #{tpu_custom_call.1} parent=1 // pred_fallthru
      _
    // Predicated region
    $region242: #{tpu_custom_call.1} parent=1 // pred_check
      _
    $region243: #{tpu_custom_call.1} parent=1 // pred_check_branch
      %481 = sbr.rel (0) target = $region245
    $region244: #{tpu_custom_call.1} parent=1 // pred_region
      %482 = dma.done [#allocation36], 1024
    $region245: #{tpu_custom_call.1} parent=1 // pred_fallthru
      _
    // Predicated region
    $region246: #{tpu_custom_call.1} parent=1 // pred_check
      _
    $region247: #{tpu_custom_call.1} parent=1 // pred_check_branch
      %484 = sbr.rel (0) target = $region249
    $region248: #{tpu_custom_call.1} parent=1 // pred_region
      %485 = dma.done [#allocation36], 16
    $region249: #{tpu_custom_call.1} parent=1 // pred_fallthru
      _
    // Predicated region
    $region250: #{tpu_custom_call.1} parent=1 // pred_check
      _
    $region251: #{tpu_custom_call.1} parent=1 // pred_check_branch
      %487 = sbr.rel (0) target = $region253
    $region252: #{tpu_custom_call.1} parent=1 // pred_region
      %488 = dma.done [#allocation39], 16
    $region253: #{tpu_custom_call.1} parent=1 // pred_fallthru
      _
    // Predicated region
    $region254: #{tpu_custom_call.1} parent=1 // pred_check
      _
    $region255: #{tpu_custom_call.1} parent=1 // pred_check_branch
      %490 = sbr.rel (0) target = $region257
    $region256: #{tpu_custom_call.1} parent=1 // pred_region
      %491 = dma.done [#allocation39], 4096
    $region257: #{tpu_custom_call.1} parent=1 // pred_fallthru
      _
    // Predicated region
    $region258: #{tpu_custom_call.1} parent=1 // pred_check
      _
    $region259: #{tpu_custom_call.1} parent=1 // pred_check_branch
      %493 = sbr.rel (0) target = $region261
    $region260: #{tpu_custom_call.1} parent=1 // pred_region
      %494 = dma.done [#allocation42], 1024
    $region261: #{tpu_custom_call.1} parent=1 // pred_fallthru
      _
    // Predicated region
    $region262: #{tpu_custom_call.1} parent=1 // pred_check
      _
    $region263: #{tpu_custom_call.1} parent=1 // pred_check_branch
      %496 = sbr.rel (0) target = $region265
    $region264: #{tpu_custom_call.1} parent=1 // pred_region
      %497 = dma.done [#allocation42], 1024
    $region265: #{tpu_custom_call.1} parent=1 // pred_fallthru
      _
    %v499 = vld [vmem:[#allocation2] sm:$0xf]
    %v500 = vld [vmem:[#allocation2 + $0x4] sm:$0xf]
    %v501 = vld [vmem:[#allocation16] sm:$0xf]
    %v502 = vld [vmem:[#allocation16 + $0x4] sm:$0xf]
    %v503 = vld [vmem:[#allocation16 + $0x8] sm:$0xf]
    %v504 = vld [vmem:[#allocation16 + $0xc] sm:$0xf]
    %v505 = vld [vmem:[#allocation16 + $0x10] sm:$0xf]
    %v506 = vld [vmem:[#allocation16 + $0x14] sm:$0xf]
    %v507 = vld [vmem:[#allocation16 + $0x18] sm:$0xf]
    %v508 = vld [vmem:[#allocation16 + $0x1c] sm:$0xf]
    %v509 = vld [vmem:[#allocation16 + $0x20] sm:$0xf]
    %v510 = vld [vmem:[#allocation16 + $0x24] sm:$0xf]
    %v511 = vld [vmem:[#allocation16 + $0x28] sm:$0xf]
    %v512 = vld [vmem:[#allocation16 + $0x2c] sm:$0xf]
    %v513 = vld [vmem:[#allocation16 + $0x30] sm:$0xf]
    %v514 = vld [vmem:[#allocation16 + $0x34] sm:$0xf]
    %v515 = vld [vmem:[#allocation16 + $0x38] sm:$0xf]
    %v516 = vld [vmem:[#allocation16 + $0x3c] sm:$0xf]
    %v517 = vld [vmem:[%s25] sm:$0x1]
    %v519 = vlaneseq
    %v520 = vshrl.u32 %v519, 7
    %v521 = vsub.s32 0, %v520
    %v522 = vrot.slane %v517, %v521
    %v526 = vunpack.c.l.b16 %v499
    %v527 = vunpack.c.l.b16 %v500
    %v528 = vpack.c.b16 %v527, %v526
    %v546 = vunpack.c.l.b16 %v501
    %v547 = vunpack.c.l.b16 %v502
    %v548 = vunpack.c.l.b16 %v503
    %v549 = vunpack.c.l.b16 %v504
    %v550 = vunpack.c.l.b16 %v505
    %v551 = vunpack.c.l.b16 %v506
    %v552 = vunpack.c.l.b16 %v507
    %v553 = vunpack.c.l.b16 %v508
    %v554 = vunpack.c.l.b16 %v509
    %v555 = vunpack.c.l.b16 %v510
    %v556 = vunpack.c.l.b16 %v511
    %v557 = vunpack.c.l.b16 %v512
    %v558 = vunpack.c.l.b16 %v513
    %v559 = vunpack.c.l.b16 %v514
    %v560 = vunpack.c.l.b16 %v515
    %v561 = vunpack.c.l.b16 %v516
    %v562 = vpack.c.b16 %v547, %v546
    %v563 = vpack.c.b16 %v549, %v548
    %v564 = vpack.c.b16 %v551, %v550
    %v565 = vpack.c.b16 %v553, %v552
    %v566 = vpack.c.b16 %v555, %v554
    %v567 = vpack.c.b16 %v557, %v556
    %v568 = vpack.c.b16 %v559, %v558
    %v569 = vpack.c.b16 %v561, %v560
    %578 = vmatprep.subr.bf16.mxu0 0
    %579 = vmatpush1.bf16.msra.mxu0 %v562
    %580 = vmatprep.subr.bf16.mxu0 0
    %581 = vmatpush1.bf16.msra.mxu0 %v563
    %582 = vmatprep.subr.bf16.mxu0 0
    %583 = vmatpush1.bf16.msra.mxu0 %v564
    %584 = vmatprep.subr.bf16.mxu0 0
    %585 = vmatpush1.bf16.msra.mxu0 %v565
    %586 = vmatprep.subr.bf16.mxu0 0
    %587 = vmatpush1.bf16.msra.mxu0 %v566
    %588 = vmatprep.subr.bf16.mxu0 0
    %589 = vmatpush1.bf16.msra.mxu0 %v567
    %590 = vmatprep.subr.bf16.mxu0 0
    %591 = vmatpush1.bf16.msra.mxu0 %v568
    %592 = vmatprep.subr.bf16.mxu0 0
    %593 = vmatpush1.bf16.msra.mxu0 %v569
    %594 = vmatprep.subr.bf16.mxu0 0
    %595 = vmatpush1.bf16.msra.mxu0 0
    %596 = vmatprep.subr.bf16.mxu0 0
    %597 = vmatpush1.bf16.msra.mxu0 0
    %598 = vmatprep.subr.bf16.mxu0 0
    %599 = vmatpush1.bf16.msra.mxu0 0
    %600 = vmatprep.subr.bf16.mxu0 0
    %601 = vmatpush1.bf16.msra.mxu0 0
    %602 = vmatprep.subr.bf16.mxu0 0
    %603 = vmatpush1.bf16.msra.mxu0 0
    %604 = vmatprep.subr.bf16.mxu0 0
    %605 = vmatpush1.bf16.msra.mxu0 0
    %606 = vmatprep.subr.bf16.mxu0 0
    %607 = vmatpush1.bf16.msra.mxu0 0
    %608 = vmatprep.subr.bf16.mxu0 0
    %609 = vmatpush1.bf16.msra.mxu0 0
    %610 = vmatprep.mubr.bf16.mxu0 0
    %611 = vmatmul.mubr.bf16.gmra.mrb[0].mxu0 %v528
    %v612 = vpop.f32.mrb[0].mxu0
    %v613 = vadd.f32 %v522, %v612
    %v614 = vpop.f32.mrb[0].mxu0
    %v615 = vpop.f32.mrb[0].mxu0
    %v616 = vadd.f32 %v522, %v615
    %v617 = vpop.f32.mrb[0].mxu0
    %618 = vdwg.mxu0
    %v619 = vmax.f32 %v613, 0.0
    %v620 = vmax.f32 %v616, 0.0
    %v621 = vpack.c.bf16 %v619, %v619
    %v622 = vpack.c.bf16 %v620, %v620
    %v623 = vld [vmem:[#allocation5] sm:$0xf]
    %v624 = vld [vmem:[#allocation17] sm:$0xf]
    %v625 = vld [vmem:[#allocation17 + $0x4] sm:$0xf]
    %v626 = vld [vmem:[#allocation17 + $0x8] sm:$0xf]
    %v627 = vld [vmem:[#allocation17 + $0xc] sm:$0xf]
    %v628 = vld [vmem:[#allocation17 + $0x10] sm:$0xf]
    %v629 = vld [vmem:[#allocation17 + $0x14] sm:$0xf]
    %v630 = vld [vmem:[#allocation17 + $0x18] sm:$0xf]
    %v631 = vld [vmem:[#allocation17 + $0x1c] sm:$0xf]
    %v632 = vld [vmem:[#allocation17 + $0x20] sm:$0xf]
    %v633 = vld [vmem:[#allocation17 + $0x24] sm:$0xf]
    %v634 = vld [vmem:[#allocation17 + $0x28] sm:$0xf]
    %v635 = vld [vmem:[#allocation17 + $0x2c] sm:$0xf]
    %v636 = vld [vmem:[#allocation17 + $0x30] sm:$0xf]
    %v637 = vld [vmem:[#allocation17 + $0x34] sm:$0xf]
    %v638 = vld [vmem:[#allocation17 + $0x38] sm:$0xf]
    %v639 = vld [vmem:[#allocation17 + $0x3c] sm:$0xf]
    %v640 = vld [vmem:[#allocation19] sm:$0x1]
    %v642 = vlaneseq
    %v643 = vshrl.u32 %v642, 7
    %v644 = vsub.s32 0, %v643
    %v645 = vrot.slane %v640, %v644
    %v663 = vunpack.c.l.b16 %v624
    %v664 = vunpack.c.l.b16 %v625
    %v665 = vunpack.c.l.b16 %v626
    %v666 = vunpack.c.l.b16 %v627
    %v667 = vunpack.c.l.b16 %v628
    %v668 = vunpack.c.l.b16 %v629
    %v669 = vunpack.c.l.b16 %v630
    %v670 = vunpack.c.l.b16 %v631
    %v671 = vunpack.c.l.b16 %v632
    %v672 = vunpack.c.l.b16 %v633
    %v673 = vunpack.c.l.b16 %v634
    %v674 = vunpack.c.l.b16 %v635
    %v675 = vunpack.c.l.b16 %v636
    %v676 = vunpack.c.l.b16 %v637
    %v677 = vunpack.c.l.b16 %v638
    %v678 = vunpack.c.l.b16 %v639
    %v679 = vpack.c.b16 %v664, %v663
    %v680 = vpack.c.b16 %v666, %v665
    %v681 = vpack.c.b16 %v668, %v667
    %v682 = vpack.c.b16 %v670, %v669
    %v683 = vpack.c.b16 %v672, %v671
    %v684 = vpack.c.b16 %v674, %v673
    %v685 = vpack.c.b16 %v676, %v675
    %v686 = vpack.c.b16 %v678, %v677
    %695 = vmatprep.subr.bf16.mxu0 0
    %696 = vmatpush1.bf16.msra.mxu0 %v679
    %697 = vmatprep.subr.bf16.mxu0 0
    %698 = vmatpush1.bf16.msra.mxu0 %v680
    %699 = vmatprep.subr.bf16.mxu0 0
    %700 = vmatpush1.bf16.msra.mxu0 %v681
    %701 = vmatprep.subr.bf16.mxu0 0
    %702 = vmatpush1.bf16.msra.mxu0 %v682
    %703 = vmatprep.subr.bf16.mxu0 0
    %704 = vmatpush1.bf16.msra.mxu0 %v683
    %705 = vmatprep.subr.bf16.mxu0 0
    %706 = vmatpush1.bf16.msra.mxu0 %v684
    %707 = vmatprep.subr.bf16.mxu0 0
    %708 = vmatpush1.bf16.msra.mxu0 %v685
    %709 = vmatprep.subr.bf16.mxu0 0
    %710 = vmatpush1.bf16.msra.mxu0 %v686
    %711 = vmatprep.subr.bf16.mxu0 0
    %712 = vmatpush1.bf16.msra.mxu0 0
    %713 = vmatprep.subr.bf16.mxu0 0
    %714 = vmatpush1.bf16.msra.mxu0 0
    %715 = vmatprep.subr.bf16.mxu0 0
    %716 = vmatpush1.bf16.msra.mxu0 0
    %717 = vmatprep.subr.bf16.mxu0 0
    %718 = vmatpush1.bf16.msra.mxu0 0
    %719 = vmatprep.subr.bf16.mxu0 0
    %720 = vmatpush1.bf16.msra.mxu0 0
    %721 = vmatprep.subr.bf16.mxu0 0
    %722 = vmatpush1.bf16.msra.mxu0 0
    %723 = vmatprep.subr.bf16.mxu0 0
    %724 = vmatpush1.bf16.msra.mxu0 0
    %725 = vmatprep.subr.bf16.mxu0 0
    %726 = vmatpush1.bf16.msra.mxu0 0
    %727 = vmatprep.mubr.bf16.mxu0 0
    %728 = vmatmul.mubr.bf16.gmra.mrb[0].mxu0 %v623
    %v729 = vpop.f32.mrb[0].mxu0
    %v730 = vadd.f32 %v645, %v729
    %v731 = vpop.f32.mrb[0].mxu0
    %v732 = vpop.f32.mrb[0].mxu0
    %v733 = vpop.f32.mrb[0].mxu0
    %734 = vdwg.mxu0
    %v735 = vmax.f32 %v730, 0.0
    %v736 = vpack.c.bf16 %v735, %v735
    %v737 = vld [vmem:[#allocation7] sm:$0xf]
    %v738 = vld [vmem:[#allocation20] sm:$0xf]
    %v739 = vld [vmem:[#allocation20 + $0x4] sm:$0xf]
    %v740 = vld [vmem:[#allocation20 + $0x8] sm:$0xf]
    %v741 = vld [vmem:[#allocation20 + $0xc] sm:$0xf]
    %v742 = vld [vmem:[#allocation20 + $0x10] sm:$0xf]
    %v743 = vld [vmem:[#allocation20 + $0x14] sm:$0xf]
    %v744 = vld [vmem:[#allocation20 + $0x18] sm:$0xf]
    %v745 = vld [vmem:[#allocation20 + $0x1c] sm:$0xf]
    %v746 = vld [vmem:[#allocation20 + $0x20] sm:$0xf]
    %v747 = vld [vmem:[#allocation20 + $0x24] sm:$0xf]
    %v748 = vld [vmem:[#allocation20 + $0x28] sm:$0xf]
    %v749 = vld [vmem:[#allocation20 + $0x2c] sm:$0xf]
    %v750 = vld [vmem:[#allocation20 + $0x30] sm:$0xf]
    %v751 = vld [vmem:[#allocation20 + $0x34] sm:$0xf]
    %v752 = vld [vmem:[#allocation20 + $0x38] sm:$0xf]
    %v753 = vld [vmem:[#allocation20 + $0x3c] sm:$0xf]
    %v754 = vld [vmem:[#allocation22] sm:$0x1]
    %v756 = vlaneseq
    %v757 = vshrl.u32 %v756, 7
    %v758 = vsub.s32 0, %v757
    %v759 = vrot.slane %v754, %v758
    %v777 = vunpack.c.l.b16 %v738
    %v778 = vunpack.c.l.b16 %v739
    %v779 = vunpack.c.l.b16 %v740
    %v780 = vunpack.c.l.b16 %v741
    %v781 = vunpack.c.l.b16 %v742
    %v782 = vunpack.c.l.b16 %v743
    %v783 = vunpack.c.l.b16 %v744
    %v784 = vunpack.c.l.b16 %v745
    %v785 = vunpack.c.l.b16 %v746
    %v786 = vunpack.c.l.b16 %v747
    %v787 = vunpack.c.l.b16 %v748
    %v788 = vunpack.c.l.b16 %v749
    %v789 = vunpack.c.l.b16 %v750
    %v790 = vunpack.c.l.b16 %v751
    %v791 = vunpack.c.l.b16 %v752
    %v792 = vunpack.c.l.b16 %v753
    %v793 = vpack.c.b16 %v778, %v777
    %v794 = vpack.c.b16 %v780, %v779
    %v795 = vpack.c.b16 %v782, %v781
    %v796 = vpack.c.b16 %v784, %v783
    %v797 = vpack.c.b16 %v786, %v785
    %v798 = vpack.c.b16 %v788, %v787
    %v799 = vpack.c.b16 %v790, %v789
    %v800 = vpack.c.b16 %v792, %v791
    %809 = vmatprep.subr.bf16.mxu0 0
    %810 = vmatpush1.bf16.msra.mxu0 %v793
    %811 = vmatprep.subr.bf16.mxu0 0
    %812 = vmatpush1.bf16.msra.mxu0 %v794
    %813 = vmatprep.subr.bf16.mxu0 0
    %814 = vmatpush1.bf16.msra.mxu0 %v795
    %815 = vmatprep.subr.bf16.mxu0 0
    %816 = vmatpush1.bf16.msra.mxu0 %v796
    %817 = vmatprep.subr.bf16.mxu0 0
    %818 = vmatpush1.bf16.msra.mxu0 %v797
    %819 = vmatprep.subr.bf16.mxu0 0
    %820 = vmatpush1.bf16.msra.mxu0 %v798
    %821 = vmatprep.subr.bf16.mxu0 0
    %822 = vmatpush1.bf16.msra.mxu0 %v799
    %823 = vmatprep.subr.bf16.mxu0 0
    %824 = vmatpush1.bf16.msra.mxu0 %v800
    %825 = vmatprep.subr.bf16.mxu0 0
    %826 = vmatpush1.bf16.msra.mxu0 0
    %827 = vmatprep.subr.bf16.mxu0 0
    %828 = vmatpush1.bf16.msra.mxu0 0
    %829 = vmatprep.subr.bf16.mxu0 0
    %830 = vmatpush1.bf16.msra.mxu0 0
    %831 = vmatprep.subr.bf16.mxu0 0
    %832 = vmatpush1.bf16.msra.mxu0 0
    %833 = vmatprep.subr.bf16.mxu0 0
    %834 = vmatpush1.bf16.msra.mxu0 0
    %835 = vmatprep.subr.bf16.mxu0 0
    %836 = vmatpush1.bf16.msra.mxu0 0
    %837 = vmatprep.subr.bf16.mxu0 0
    %838 = vmatpush1.bf16.msra.mxu0 0
    %839 = vmatprep.subr.bf16.mxu0 0
    %840 = vmatpush1.bf16.msra.mxu0 0
    %841 = vmatprep.mubr.bf16.mxu0 0
    %842 = vmatmul.mubr.bf16.gmra.mrb[0].mxu0 %v737
    %v843 = vpop.f32.mrb[0].mxu0
    %v844 = vadd.f32 %v759, %v843
    %v845 = vpop.f32.mrb[0].mxu0
    %v846 = vpop.f32.mrb[0].mxu0
    %v847 = vpop.f32.mrb[0].mxu0
    %848 = vdwg.mxu0
    %v849 = vmax.f32 %v844, 0.0
    %v850 = vpack.c.bf16 %v849, %v849
    %v851 = vld [vmem:[#allocation8] sm:$0xf]
    %v852 = vld [vmem:[#allocation10] sm:$0xf]
    %v853 = vld [vmem:[%s11] sm:$0xff]
    %v854 = vld [vmem:[#allocation11] sm:$0xf]
    %v855 = vld [vmem:[#allocation13] sm:$0xf]
    %v856 = vld [vmem:[%s17] sm:$0xff]
    %v857 = vld [vmem:[%s35] sm:$0xf]
    %v858 = vld [vmem:[%s35 + $0x4] sm:$0xf]
    %v859 = vld [vmem:[%s35 + $0x8] sm:$0xf]
    %v860 = vld [vmem:[%s35 + $0xc] sm:$0xf]
    %v861 = vld [vmem:[%s35 + $0x10] sm:$0xf]
    %v862 = vld [vmem:[%s35 + $0x14] sm:$0xf]
    %v863 = vld [vmem:[%s35 + $0x18] sm:$0xf]
    %v864 = vld [vmem:[%s35 + $0x1c] sm:$0xf]
    %v865 = vld [vmem:[%s35 + $0x20] sm:$0xf]
    %v866 = vld [vmem:[%s35 + $0x24] sm:$0xf]
    %v867 = vld [vmem:[%s35 + $0x28] sm:$0xf]
    %v868 = vld [vmem:[%s35 + $0x2c] sm:$0xf]
    %v869 = vld [vmem:[%s35 + $0x30] sm:$0xf]
    %v870 = vld [vmem:[%s35 + $0x34] sm:$0xf]
    %v871 = vld [vmem:[%s35 + $0x38] sm:$0xf]
    %v872 = vld [vmem:[%s35 + $0x3c] sm:$0xf]
    %v873 = vld [vmem:[%s35 + $0x40] sm:$0xf]
    %v874 = vld [vmem:[%s35 + $0x44] sm:$0xf]
    %v875 = vld [vmem:[%s35 + $0x48] sm:$0xf]
    %v876 = vld [vmem:[%s35 + $0x4c] sm:$0xf]
    %v877 = vld [vmem:[%s35 + $0x50] sm:$0xf]
    %v878 = vld [vmem:[%s35 + $0x54] sm:$0xf]
    %v879 = vld [vmem:[%s35 + $0x58] sm:$0xf]
    %v880 = vld [vmem:[%s35 + $0x5c] sm:$0xf]
    %v881 = vld [vmem:[%s35 + $0x60] sm:$0xf]
    %v882 = vld [vmem:[%s35 + $0x64] sm:$0xf]
    %v883 = vld [vmem:[%s35 + $0x68] sm:$0xf]
    %v884 = vld [vmem:[%s35 + $0x6c] sm:$0xf]
    %v885 = vld [vmem:[%s35 + $0x70] sm:$0xf]
    %v886 = vld [vmem:[%s35 + $0x74] sm:$0xf]
    %v887 = vld [vmem:[%s35 + $0x78] sm:$0xf]
    %v888 = vld [vmem:[%s35 + $0x7c] sm:$0xf]
    %v889 = vld [vmem:[#allocation23] sm:$0xf]
    %v890 = vld [vmem:[#allocation23 + $0x4] sm:$0xf]
    %v891 = vld [vmem:[#allocation23 + $0x8] sm:$0xf]
    %v892 = vld [vmem:[#allocation23 + $0xc] sm:$0xf]
    %v893 = vld [vmem:[#allocation23 + $0x10] sm:$0xf]
    %v894 = vld [vmem:[#allocation23 + $0x14] sm:$0xf]
    %v895 = vld [vmem:[#allocation23 + $0x18] sm:$0xf]
    %v896 = vld [vmem:[#allocation23 + $0x1c] sm:$0xf]
    %v897 = vld [vmem:[#allocation23 + $0x20] sm:$0xf]
    %v898 = vld [vmem:[#allocation23 + $0x24] sm:$0xf]
    %v899 = vld [vmem:[#allocation23 + $0x28] sm:$0xf]
    %v900 = vld [vmem:[#allocation23 + $0x2c] sm:$0xf]
    %v901 = vld [vmem:[#allocation23 + $0x30] sm:$0xf]
    %v902 = vld [vmem:[#allocation23 + $0x34] sm:$0xf]
    %v903 = vld [vmem:[#allocation23 + $0x38] sm:$0xf]
    %v904 = vld [vmem:[#allocation23 + $0x3c] sm:$0xf]
    %v921 = vunpack.c.l.b16 %v889
    %v922 = vunpack.c.l.b16 %v890
    %v923 = vunpack.c.l.b16 %v891
    %v924 = vunpack.c.l.b16 %v892
    %v925 = vunpack.c.l.b16 %v893
    %v926 = vunpack.c.l.b16 %v894
    %v927 = vunpack.c.l.b16 %v895
    %v928 = vunpack.c.l.b16 %v896
    %v929 = vunpack.c.l.b16 %v897
    %v930 = vunpack.c.l.b16 %v898
    %v931 = vunpack.c.l.b16 %v899
    %v932 = vunpack.c.l.b16 %v900
    %v933 = vunpack.c.l.b16 %v901
    %v934 = vunpack.c.l.b16 %v902
    %v935 = vunpack.c.l.b16 %v903
    %v936 = vunpack.c.l.b16 %v904
    %v937 = vpack.c.b16 %v922, %v921
    %v938 = vpack.c.b16 %v924, %v923
    %v939 = vpack.c.b16 %v926, %v925
    %v940 = vpack.c.b16 %v928, %v927
    %v941 = vpack.c.b16 %v930, %v929
    %v942 = vpack.c.b16 %v932, %v931
    %v943 = vpack.c.b16 %v934, %v933
    %v944 = vpack.c.b16 %v936, %v935
    %953 = vmatprep.subr.bf16.mxu0 0
    %954 = vmatpush1.bf16.msra.mxu0 %v937
    %955 = vmatprep.subr.bf16.mxu0 0
    %956 = vmatpush1.bf16.msra.mxu0 %v938
    %957 = vmatprep.subr.bf16.mxu0 0
    %958 = vmatpush1.bf16.msra.mxu0 %v939
    %959 = vmatprep.subr.bf16.mxu0 0
    %960 = vmatpush1.bf16.msra.mxu0 %v940
    %961 = vmatprep.subr.bf16.mxu0 0
    %962 = vmatpush1.bf16.msra.mxu0 %v941
    %963 = vmatprep.subr.bf16.mxu0 0
    %964 = vmatpush1.bf16.msra.mxu0 %v942
    %965 = vmatprep.subr.bf16.mxu0 0
    %966 = vmatpush1.bf16.msra.mxu0 %v943
    %967 = vmatprep.subr.bf16.mxu0 0
    %968 = vmatpush1.bf16.msra.mxu0 %v944
    %969 = vmatprep.subr.bf16.mxu0 0
    %970 = vmatpush1.bf16.msra.mxu0 0
    %971 = vmatprep.subr.bf16.mxu0 0
    %972 = vmatpush1.bf16.msra.mxu0 0
    %973 = vmatprep.subr.bf16.mxu0 0
    %974 = vmatpush1.bf16.msra.mxu0 0
    %975 = vmatprep.subr.bf16.mxu0 0
    %976 = vmatpush1.bf16.msra.mxu0 0
    %977 = vmatprep.subr.bf16.mxu0 0
    %978 = vmatpush1.bf16.msra.mxu0 0
    %979 = vmatprep.subr.bf16.mxu0 0
    %980 = vmatpush1.bf16.msra.mxu0 0
    %981 = vmatprep.subr.bf16.mxu0 0
    %982 = vmatpush1.bf16.msra.mxu0 0
    %983 = vmatprep.subr.bf16.mxu0 0
    %984 = vmatpush1.bf16.msra.mxu0 0
    %985 = vmatprep.mubr.bf16.mxu0 0
    %986 = vmatmul.mubr.bf16.gmra.mrb[0].mxu0 %v736
    %v987 = vpop.f32.mrb[0].mxu0
    %v988 = vadd.f32 0.0, %v987
    %v989 = vpop.f32.mrb[0].mxu0
    %v990 = vpop.f32.mrb[0].mxu0
    %v991 = vpop.f32.mrb[0].mxu0
    %992 = vdwg.mxu0
    %v1025 = vunpack.c.l.b16 %v857
    %v1026 = vunpack.c.l.b16 %v858
    %v1027 = vunpack.c.l.b16 %v859
    %v1028 = vunpack.c.l.b16 %v860
    %v1029 = vunpack.c.l.b16 %v861
    %v1030 = vunpack.c.l.b16 %v862
    %v1031 = vunpack.c.l.b16 %v863
    %v1032 = vunpack.c.l.b16 %v864
    %v1033 = vunpack.c.l.b16 %v865
    %v1034 = vunpack.c.l.b16 %v866
    %v1035 = vunpack.c.l.b16 %v867
    %v1036 = vunpack.c.l.b16 %v868
    %v1037 = vunpack.c.l.b16 %v869
    %v1038 = vunpack.c.l.b16 %v870
    %v1039 = vunpack.c.l.b16 %v871
    %v1040 = vunpack.c.l.b16 %v872
    %v1041 = vunpack.c.l.b16 %v873
    %v1042 = vunpack.c.l.b16 %v874
    %v1043 = vunpack.c.l.b16 %v875
    %v1044 = vunpack.c.l.b16 %v876
    %v1045 = vunpack.c.l.b16 %v877
    %v1046 = vunpack.c.l.b16 %v878
    %v1047 = vunpack.c.l.b16 %v879
    %v1048 = vunpack.c.l.b16 %v880
    %v1049 = vunpack.c.l.b16 %v881
    %v1050 = vunpack.c.l.b16 %v882
    %v1051 = vunpack.c.l.b16 %v883
    %v1052 = vunpack.c.l.b16 %v884
    %v1053 = vunpack.c.l.b16 %v885
    %v1054 = vunpack.c.l.b16 %v886
    %v1055 = vunpack.c.l.b16 %v887
    %v1056 = vunpack.c.l.b16 %v888
    %v1057 = vpack.c.b16 %v1026, %v1025
    %v1058 = vpack.c.b16 %v1028, %v1027
    %v1059 = vpack.c.b16 %v1030, %v1029
    %v1060 = vpack.c.b16 %v1032, %v1031
    %v1061 = vpack.c.b16 %v1034, %v1033
    %v1062 = vpack.c.b16 %v1036, %v1035
    %v1063 = vpack.c.b16 %v1038, %v1037
    %v1064 = vpack.c.b16 %v1040, %v1039
    %v1065 = vpack.c.b16 %v1042, %v1041
    %v1066 = vpack.c.b16 %v1044, %v1043
    %v1067 = vpack.c.b16 %v1046, %v1045
    %v1068 = vpack.c.b16 %v1048, %v1047
    %v1069 = vpack.c.b16 %v1050, %v1049
    %v1070 = vpack.c.b16 %v1052, %v1051
    %v1071 = vpack.c.b16 %v1054, %v1053
    %v1072 = vpack.c.b16 %v1056, %v1055
    %1089 = vmatprep.subr.bf16.mxu0 0
    %1090 = vmatpush1.bf16.msra.mxu0 %v1057
    %1091 = vmatprep.subr.bf16.mxu0 0
    %1092 = vmatpush1.bf16.msra.mxu0 %v1058
    %1093 = vmatprep.subr.bf16.mxu0 0
    %1094 = vmatpush1.bf16.msra.mxu0 %v1059
    %1095 = vmatprep.subr.bf16.mxu0 0
    %1096 = vmatpush1.bf16.msra.mxu0 %v1060
    %1097 = vmatprep.subr.bf16.mxu0 0
    %1098 = vmatpush1.bf16.msra.mxu0 %v1061
    %1099 = vmatprep.subr.bf16.mxu0 0
    %1100 = vmatpush1.bf16.msra.mxu0 %v1062
    %1101 = vmatprep.subr.bf16.mxu0 0
    %1102 = vmatpush1.bf16.msra.mxu0 %v1063
    %1103 = vmatprep.subr.bf16.mxu0 0
    %1104 = vmatpush1.bf16.msra.mxu0 %v1064
    %1105 = vmatprep.subr.bf16.mxu0 0
    %1106 = vmatpush1.bf16.msra.mxu0 %v1065
    %1107 = vmatprep.subr.bf16.mxu0 0
    %1108 = vmatpush1.bf16.msra.mxu0 %v1066
    %1109 = vmatprep.subr.bf16.mxu0 0
    %1110 = vmatpush1.bf16.msra.mxu0 %v1067
    %1111 = vmatprep.subr.bf16.mxu0 0
    %1112 = vmatpush1.bf16.msra.mxu0 %v1068
    %1113 = vmatprep.subr.bf16.mxu0 0
    %1114 = vmatpush1.bf16.msra.mxu0 %v1069
    %1115 = vmatprep.subr.bf16.mxu0 0
    %1116 = vmatpush1.bf16.msra.mxu0 %v1070
    %1117 = vmatprep.subr.bf16.mxu0 0
    %1118 = vmatpush1.bf16.msra.mxu0 %v1071
    %1119 = vmatprep.subr.bf16.mxu0 0
    %1120 = vmatpush1.bf16.msra.mxu0 %v1072
    %1121 = vmatprep.mubr.bf16.mxu0 %v622
    %1122 = vmatmul.mubr.bf16.gmra.mrb[0].mxu0 %v621
    %v1123 = vpop.f32.mrb[0].mxu0
    %v1124 = vadd.f32 %v988, %v1123
    %v1125 = vpop.f32.mrb[0].mxu0
    %v1126 = vpop.f32.mrb[0].mxu0
    %v1127 = vpop.f32.mrb[0].mxu0
    %1128 = vdwg.mxu0
    %v1129 = vld [vmem:[#allocation25] sm:$0x1]
    %v1131 = vlaneseq
    %v1132 = vshrl.u32 %v1131, 7
    %v1133 = vsub.s32 0, %v1132
    %v1134 = vrot.slane %v1129, %v1133
    %v1136 = vadd.f32 %v1124, %v1134
    %v1137 = vrot.slane %v1136, 4
    %v1138 = vadd.f32 %v1136, %v1137
    %v1139 = vrot.slane %v1138, 2
    %v1140 = vadd.f32 %v1138, %v1139
    %v1141 = vrot.slane %v1140, 1
    %v1142 = vadd.f32 %v1140, %v1141
    %v1143 = vrcp.pop 8.0
    %v1144 = vmul.f32 %v1142, %v1143
    %v1145 = vmul.f32 %v1136, %v1136
    %v1146 = vrot.slane %v1145, 4
    %v1147 = vadd.f32 %v1145, %v1146
    %v1148 = vrot.slane %v1147, 2
    %v1149 = vadd.f32 %v1147, %v1148
    %v1150 = vrot.slane %v1149, 1
    %v1151 = vadd.f32 %v1149, %v1150
    %v1152 = vmul.f32 %v1151, %v1143
    %v1153 = vmul.f32 %v1144, %v1144
    %v1154 = vsub.f32 %v1152, %v1153
    %v1155 = vld [vmem:[#allocation26] sm:$0x1]
    %v1156 = vadd.f32 %v1154, 1e-05
    %v1157 = vrsqrt.pop %v1156
    %v1158 = vmul.f32 %v1155, %v1157
    %v1159 = vld [vmem:[#allocation28] sm:$0x1]
    %v1160 = vmul.f32 %v1144, %v1158
    %v1161 = vsub.f32 %v1159, %v1160
    %v1163 = vlaneseq
    %v1164 = vshrl.u32 %v1163, 7
    %v1165 = vsub.s32 0, %v1164
    %v1166 = vrot.slane %v1158, %v1165
    %v1168 = vmul.f32 %v1136, %v1166
    %v1170 = vlaneseq
    %v1171 = vshrl.u32 %v1170, 7
    %v1172 = vsub.s32 0, %v1171
    %v1173 = vrot.slane %v1161, %v1172
    %v1175 = vadd.f32 %v1168, %v1173
    %v1176 = vmax.f32 %v1175, 0.0
    %v1177 = vpack.c.bf16 %v1176, %v1176
    %v1178 = vld [vmem:[%s45] sm:$0xff]
    %v1179 = vld [vmem:[%s45 + $0x8] sm:$0xff]
    %v1180 = vld [vmem:[%s45 + $0x10] sm:$0xff]
    %v1181 = vld [vmem:[%s45 + $0x18] sm:$0xff]
    %v1182 = vld [vmem:[%s45 + $0x20] sm:$0xff]
    %v1183 = vld [vmem:[%s45 + $0x28] sm:$0xff]
    %v1184 = vld [vmem:[%s45 + $0x30] sm:$0xff]
    %v1185 = vld [vmem:[%s45 + $0x38] sm:$0xff]
    %v1186 = vld [vmem:[%s45 + $0x40] sm:$0xff]
    %v1187 = vld [vmem:[%s45 + $0x48] sm:$0xff]
    %v1188 = vld [vmem:[%s45 + $0x50] sm:$0xff]
    %v1189 = vld [vmem:[%s45 + $0x58] sm:$0xff]
    %v1190 = vld [vmem:[%s45 + $0x60] sm:$0xff]
    %v1191 = vld [vmem:[%s45 + $0x68] sm:$0xff]
    %v1192 = vld [vmem:[%s45 + $0x70] sm:$0xff]
    %v1193 = vld [vmem:[%s45 + $0x78] sm:$0xff]
    %v1194 = vld [vmem:[%s45 + $0x80] sm:$0xff]
    %v1195 = vld [vmem:[%s45 + $0x88] sm:$0xff]
    %v1196 = vld [vmem:[%s45 + $0x90] sm:$0xff]
    %v1197 = vld [vmem:[%s45 + $0x98] sm:$0xff]
    %v1198 = vld [vmem:[%s45 + $0xa0] sm:$0xff]
    %v1199 = vld [vmem:[%s45 + $0xa8] sm:$0xff]
    %v1200 = vld [vmem:[%s45 + $0xb0] sm:$0xff]
    %v1201 = vld [vmem:[%s45 + $0xb8] sm:$0xff]
    %v1202 = vld [vmem:[%s45 + $0xc0] sm:$0xff]
    %v1203 = vld [vmem:[%s45 + $0xc8] sm:$0xff]
    %v1204 = vld [vmem:[%s45 + $0xd0] sm:$0xff]
    %v1205 = vld [vmem:[%s45 + $0xd8] sm:$0xff]
    %v1206 = vld [vmem:[%s45 + $0xe0] sm:$0xff]
    %v1207 = vld [vmem:[%s45 + $0xe8] sm:$0xff]
    %v1208 = vld [vmem:[%s45 + $0xf0] sm:$0xff]
    %v1209 = vld [vmem:[%s45 + $0xf8] sm:$0xff]
    %v1210 = vld [vmem:[#allocation32] sm:$0x3]
    %v1212 = vlaneseq
    %v1213 = vshrl.u32 %v1212, 7
    %v1214 = vsub.s32 0, %v1213
    %v1215 = vrot.slane %v1210, %v1214
    %v1216 = vlaneseq
    %v1217 = vshrl.u32 %v1216, 7
    %v1218 = vsub.s32 1, %v1217
    %v1219 = vrot.slane %v1210, %v1218
    %v1254 = vunpack.c.l.b16 %v1178
    %v1255 = vunpack.c.h.b16 %v1178
    %v1256 = vunpack.c.l.b16 %v1179
    %v1257 = vunpack.c.h.b16 %v1179
    %v1258 = vunpack.c.l.b16 %v1180
    %v1259 = vunpack.c.h.b16 %v1180
    %v1260 = vunpack.c.l.b16 %v1181
    %v1261 = vunpack.c.h.b16 %v1181
    %v1262 = vunpack.c.l.b16 %v1182
    %v1263 = vunpack.c.h.b16 %v1182
    %v1264 = vunpack.c.l.b16 %v1183
    %v1265 = vunpack.c.h.b16 %v1183
    %v1266 = vunpack.c.l.b16 %v1184
    %v1267 = vunpack.c.h.b16 %v1184
    %v1268 = vunpack.c.l.b16 %v1185
    %v1269 = vunpack.c.h.b16 %v1185
    %v1270 = vunpack.c.l.b16 %v1186
    %v1271 = vunpack.c.h.b16 %v1186
    %v1272 = vunpack.c.l.b16 %v1187
    %v1273 = vunpack.c.h.b16 %v1187
    %v1274 = vunpack.c.l.b16 %v1188
    %v1275 = vunpack.c.h.b16 %v1188
    %v1276 = vunpack.c.l.b16 %v1189
    %v1277 = vunpack.c.h.b16 %v1189
    %v1278 = vunpack.c.l.b16 %v1190
    %v1279 = vunpack.c.h.b16 %v1190
    %v1280 = vunpack.c.l.b16 %v1191
    %v1281 = vunpack.c.h.b16 %v1191
    %v1282 = vunpack.c.l.b16 %v1192
    %v1283 = vunpack.c.h.b16 %v1192
    %v1284 = vunpack.c.l.b16 %v1193
    %v1285 = vunpack.c.h.b16 %v1193
    %v1286 = vunpack.c.l.b16 %v1194
    %v1287 = vunpack.c.h.b16 %v1194
    %v1288 = vunpack.c.l.b16 %v1195
    %v1289 = vunpack.c.h.b16 %v1195
    %v1290 = vunpack.c.l.b16 %v1196
    %v1291 = vunpack.c.h.b16 %v1196
    %v1292 = vunpack.c.l.b16 %v1197
    %v1293 = vunpack.c.h.b16 %v1197
    %v1294 = vunpack.c.l.b16 %v1198
    %v1295 = vunpack.c.h.b16 %v1198
    %v1296 = vunpack.c.l.b16 %v1199
    %v1297 = vunpack.c.h.b16 %v1199
    %v1298 = vunpack.c.l.b16 %v1200
    %v1299 = vunpack.c.h.b16 %v1200
    %v1300 = vunpack.c.l.b16 %v1201
    %v1301 = vunpack.c.h.b16 %v1201
    %v1302 = vunpack.c.l.b16 %v1202
    %v1303 = vunpack.c.h.b16 %v1202
    %v1304 = vunpack.c.l.b16 %v1203
    %v1305 = vunpack.c.h.b16 %v1203
    %v1306 = vunpack.c.l.b16 %v1204
    %v1307 = vunpack.c.h.b16 %v1204
    %v1308 = vunpack.c.l.b16 %v1205
    %v1309 = vunpack.c.h.b16 %v1205
    %v1310 = vunpack.c.l.b16 %v1206
    %v1311 = vunpack.c.h.b16 %v1206
    %v1312 = vunpack.c.l.b16 %v1207
    %v1313 = vunpack.c.h.b16 %v1207
    %v1314 = vunpack.c.l.b16 %v1208
    %v1315 = vunpack.c.h.b16 %v1208
    %v1316 = vunpack.c.l.b16 %v1209
    %v1317 = vunpack.c.h.b16 %v1209
    %v1318 = vpack.c.b16 %v1256, %v1254
    %v1319 = vpack.c.b16 %v1257, %v1255
    %v1320 = vpack.c.b16 %v1260, %v1258
    %v1321 = vpack.c.b16 %v1261, %v1259
    %v1322 = vpack.c.b16 %v1264, %v1262
    %v1323 = vpack.c.b16 %v1265, %v1263
    %v1324 = vpack.c.b16 %v1268, %v1266
    %v1325 = vpack.c.b16 %v1269, %v1267
    %v1326 = vpack.c.b16 %v1272, %v1270
    %v1327 = vpack.c.b16 %v1273, %v1271
    %v1328 = vpack.c.b16 %v1276, %v1274
    %v1329 = vpack.c.b16 %v1277, %v1275
    %v1330 = vpack.c.b16 %v1280, %v1278
    %v1331 = vpack.c.b16 %v1281, %v1279
    %v1332 = vpack.c.b16 %v1284, %v1282
    %v1333 = vpack.c.b16 %v1285, %v1283
    %v1334 = vpack.c.b16 %v1288, %v1286
    %v1335 = vpack.c.b16 %v1289, %v1287
    %v1336 = vpack.c.b16 %v1292, %v1290
    %v1337 = vpack.c.b16 %v1293, %v1291
    %v1338 = vpack.c.b16 %v1296, %v1294
    %v1339 = vpack.c.b16 %v1297, %v1295
    %v1340 = vpack.c.b16 %v1300, %v1298
    %v1341 = vpack.c.b16 %v1301, %v1299
    %v1342 = vpack.c.b16 %v1304, %v1302
    %v1343 = vpack.c.b16 %v1305, %v1303
    %v1344 = vpack.c.b16 %v1308, %v1306
    %v1345 = vpack.c.b16 %v1309, %v1307
    %v1346 = vpack.c.b16 %v1312, %v1310
    %v1347 = vpack.c.b16 %v1313, %v1311
    %v1348 = vpack.c.b16 %v1316, %v1314
    %v1349 = vpack.c.b16 %v1317, %v1315
    %1382 = vmatprep.subr.bf16.mxu0 %v1319
    %1383 = vmatpush1.bf16.msra.mxu0 %v1318
    %1384 = vmatprep.subr.bf16.mxu0 %v1321
    %1385 = vmatpush1.bf16.msra.mxu0 %v1320
    %1386 = vmatprep.subr.bf16.mxu0 %v1323
    %1387 = vmatpush1.bf16.msra.mxu0 %v1322
    %1388 = vmatprep.subr.bf16.mxu0 %v1325
    %1389 = vmatpush1.bf16.msra.mxu0 %v1324
    %1390 = vmatprep.subr.bf16.mxu0 %v1327
    %1391 = vmatpush1.bf16.msra.mxu0 %v1326
    %1392 = vmatprep.subr.bf16.mxu0 %v1329
    %1393 = vmatpush1.bf16.msra.mxu0 %v1328
    %1394 = vmatprep.subr.bf16.mxu0 %v1331
    %1395 = vmatpush1.bf16.msra.mxu0 %v1330
    %1396 = vmatprep.subr.bf16.mxu0 %v1333
    %1397 = vmatpush1.bf16.msra.mxu0 %v1332
    %1398 = vmatprep.subr.bf16.mxu0 %v1335
    %1399 = vmatpush1.bf16.msra.mxu0 %v1334
    %1400 = vmatprep.subr.bf16.mxu0 %v1337
    %1401 = vmatpush1.bf16.msra.mxu0 %v1336
    %1402 = vmatprep.subr.bf16.mxu0 %v1339
    %1403 = vmatpush1.bf16.msra.mxu0 %v1338
    %1404 = vmatprep.subr.bf16.mxu0 %v1341
    %1405 = vmatpush1.bf16.msra.mxu0 %v1340
    %1406 = vmatprep.subr.bf16.mxu0 %v1343
    %1407 = vmatpush1.bf16.msra.mxu0 %v1342
    %1408 = vmatprep.subr.bf16.mxu0 %v1345
    %1409 = vmatpush1.bf16.msra.mxu0 %v1344
    %1410 = vmatprep.subr.bf16.mxu0 %v1347
    %1411 = vmatpush1.bf16.msra.mxu0 %v1346
    %1412 = vmatprep.subr.bf16.mxu0 %v1349
    %1413 = vmatpush1.bf16.msra.mxu0 %v1348
    %1414 = vmatprep.mubr.bf16.mxu0 %v736
    %1415 = vmatmul.mubr.bf16.gmra.mrb[0].mxu0 %v1177
    %v1416 = vpop.f32.mrb[0].mxu0
    %v1417 = vadd.f32 %v1215, %v1416
    %v1418 = vpop.f32.mrb[0].mxu0
    %v1419 = vadd.f32 %v1219, %v1418
    %v1420 = vpop.f32.mrb[0].mxu0
    %v1421 = vpop.f32.mrb[0].mxu0
    %1422 = vdwg.mxu0
    %vm1423 = vcmask 64512
    %v1425 = vsel %vm1423, %v851, 0
    %vm1427 = vcmask 1043456
    %v1429 = vsel %vm1427, %v1177, 0
    %1431 = vmatprep.subr.bf16.mxu0 0
    %1432 = vmatpush1.bf16.msra.mxu0 %v1429
    %1433 = vmatprep.subr.bf16.mxu0 0
    %1434 = vmatpush1.bf16.msra.mxu0 0
    %1435 = vmatprep.subr.bf16.mxu0 0
    %1436 = vmatpush1.bf16.msra.mxu0 0
    %1437 = vmatprep.subr.bf16.mxu0 0
    %1438 = vmatpush1.bf16.msra.mxu0 0
    %1439 = vmatprep.subr.bf16.mxu0 0
    %1440 = vmatpush1.bf16.msra.mxu0 0
    %1441 = vmatprep.subr.bf16.mxu0 0
    %1442 = vmatpush1.bf16.msra.mxu0 0
    %1443 = vmatprep.subr.bf16.mxu0 0
    %1444 = vmatpush1.bf16.msra.mxu0 0
    %1445 = vmatprep.subr.bf16.mxu0 0
    %1446 = vmatpush1.bf16.msra.mxu0 0
    %1447 = vmatprep.subr.bf16.mxu0 0
    %1448 = vmatpush1.bf16.msra.mxu0 0
    %1449 = vmatprep.subr.bf16.mxu0 0
    %1450 = vmatpush1.bf16.msra.mxu0 0
    %1451 = vmatprep.subr.bf16.mxu0 0
    %1452 = vmatpush1.bf16.msra.mxu0 0
    %1453 = vmatprep.subr.bf16.mxu0 0
    %1454 = vmatpush1.bf16.msra.mxu0 0
    %1455 = vmatprep.subr.bf16.mxu0 0
    %1456 = vmatpush1.bf16.msra.mxu0 0
    %1457 = vmatprep.subr.bf16.mxu0 0
    %1458 = vmatpush1.bf16.msra.mxu0 0
    %1459 = vmatprep.subr.bf16.mxu0 0
    %1460 = vmatpush1.bf16.msra.mxu0 0
    %1461 = vmatprep.subr.bf16.mxu0 0
    %1462 = vmatpush1.bf16.msra.mxu0 0
    %1463 = vmatprep.mubr.bf16.mxu0 0
    %1464 = vmatmul.mubr.bf16.gmra.mrb[0].mxu0 %v1425
    %v1465 = vpop.f32.mrb[0].mxu0
    %v1466 = vadd.f32 0.0, %v1465
    %v1467 = vpop.f32.mrb[0].mxu0
    %v1468 = vpop.f32.mrb[0].mxu0
    %v1469 = vpop.f32.mrb[0].mxu0
    %1470 = vdwg.mxu0
    %1472 = vset.pattern.permute.xlu0 0
    %1473 = vperm.xlu0 %1472, %v853
    %v1474 = vpop.permute.xlu0 %1473
    %v1476 = vmul.f32 %v1466, %v1474
    %v1477 = vpack.c.bf16 %v1476, %v1476
    %v1478 = vld [vmem:[#allocation29] sm:$0xf]
    %v1479 = vld [vmem:[#allocation29 + $0x4] sm:$0xf]
    %v1480 = vld [vmem:[#allocation29 + $0x8] sm:$0xf]
    %v1481 = vld [vmem:[#allocation29 + $0xc] sm:$0xf]
    %v1482 = vld [vmem:[#allocation29 + $0x10] sm:$0xf]
    %v1483 = vld [vmem:[#allocation29 + $0x14] sm:$0xf]
    %v1484 = vld [vmem:[#allocation29 + $0x18] sm:$0xf]
    %v1485 = vld [vmem:[#allocation29 + $0x1c] sm:$0xf]
    %v1486 = vld [vmem:[#allocation29 + $0x20] sm:$0xf]
    %v1487 = vld [vmem:[#allocation29 + $0x24] sm:$0xf]
    %v1488 = vld [vmem:[#allocation29 + $0x28] sm:$0xf]
    %v1489 = vld [vmem:[#allocation29 + $0x2c] sm:$0xf]
    %v1490 = vld [vmem:[#allocation29 + $0x30] sm:$0xf]
    %v1491 = vld [vmem:[#allocation29 + $0x34] sm:$0xf]
    %v1492 = vld [vmem:[#allocation29 + $0x38] sm:$0xf]
    %v1493 = vld [vmem:[#allocation29 + $0x3c] sm:$0xf]
    %v1510 = vunpack.c.l.b16 %v1478
    %v1511 = vunpack.c.l.b16 %v1479
    %v1512 = vunpack.c.l.b16 %v1480
    %v1513 = vunpack.c.l.b16 %v1481
    %v1514 = vunpack.c.l.b16 %v1482
    %v1515 = vunpack.c.l.b16 %v1483
    %v1516 = vunpack.c.l.b16 %v1484
    %v1517 = vunpack.c.l.b16 %v1485
    %v1518 = vunpack.c.l.b16 %v1486
    %v1519 = vunpack.c.l.b16 %v1487
    %v1520 = vunpack.c.l.b16 %v1488
    %v1521 = vunpack.c.l.b16 %v1489
    %v1522 = vunpack.c.l.b16 %v1490
    %v1523 = vunpack.c.l.b16 %v1491
    %v1524 = vunpack.c.l.b16 %v1492
    %v1525 = vunpack.c.l.b16 %v1493
    %v1526 = vpack.c.b16 %v1511, %v1510
    %v1527 = vpack.c.b16 %v1513, %v1512
    %v1528 = vpack.c.b16 %v1515, %v1514
    %v1529 = vpack.c.b16 %v1517, %v1516
    %v1530 = vpack.c.b16 %v1519, %v1518
    %v1531 = vpack.c.b16 %v1521, %v1520
    %v1532 = vpack.c.b16 %v1523, %v1522
    %v1533 = vpack.c.b16 %v1525, %v1524
    %1542 = vmatprep.subr.bf16.mxu0 0
    %1543 = vmatpush1.bf16.msra.mxu0 %v1526
    %1544 = vmatprep.subr.bf16.mxu0 0
    %1545 = vmatpush1.bf16.msra.mxu0 %v1527
    %1546 = vmatprep.subr.bf16.mxu0 0
    %1547 = vmatpush1.bf16.msra.mxu0 %v1528
    %1548 = vmatprep.subr.bf16.mxu0 0
    %1549 = vmatpush1.bf16.msra.mxu0 %v1529
    %1550 = vmatprep.subr.bf16.mxu0 0
    %1551 = vmatpush1.bf16.msra.mxu0 %v1530
    %1552 = vmatprep.subr.bf16.mxu0 0
    %1553 = vmatpush1.bf16.msra.mxu0 %v1531
    %1554 = vmatprep.subr.bf16.mxu0 0
    %1555 = vmatpush1.bf16.msra.mxu0 %v1532
    %1556 = vmatprep.subr.bf16.mxu0 0
    %1557 = vmatpush1.bf16.msra.mxu0 %v1533
    %1558 = vmatprep.subr.bf16.mxu0 0
    %1559 = vmatpush1.bf16.msra.mxu0 0
    %1560 = vmatprep.subr.bf16.mxu0 0
    %1561 = vmatpush1.bf16.msra.mxu0 0
    %1562 = vmatprep.subr.bf16.mxu0 0
    %1563 = vmatpush1.bf16.msra.mxu0 0
    %1564 = vmatprep.subr.bf16.mxu0 0
    %1565 = vmatpush1.bf16.msra.mxu0 0
    %1566 = vmatprep.subr.bf16.mxu0 0
    %1567 = vmatpush1.bf16.msra.mxu0 0
    %1568 = vmatprep.subr.bf16.mxu0 0
    %1569 = vmatpush1.bf16.msra.mxu0 0
    %1570 = vmatprep.subr.bf16.mxu0 0
    %1571 = vmatpush1.bf16.msra.mxu0 0
    %1572 = vmatprep.subr.bf16.mxu0 0
    %1573 = vmatpush1.bf16.msra.mxu0 0
    %1574 = vmatprep.mubr.bf16.mxu0 0
    %1575 = vmatmul.mubr.bf16.gmra.mrb[0].mxu0 %v1477
    %v1576 = vpop.f32.mrb[0].mxu0
    %v1577 = vadd.f32 0.0, %v1576
    %v1578 = vpop.f32.mrb[0].mxu0
    %v1579 = vpop.f32.mrb[0].mxu0
    %v1580 = vpop.f32.mrb[0].mxu0
    %1581 = vdwg.mxu0
    %v1582 = vpack.c.bf16 %v1577, %v1577
    %v1584 = vsel %vm1423, %v852, 0
    %v1587 = vsel %vm1427, %v1582, 0
    %1589 = vmatprep.subr.bf16.mxu0 0
    %1590 = vmatpush1.bf16.msra.mxu0 %v1587
    %1591 = vmatprep.subr.bf16.mxu0 0
    %1592 = vmatpush1.bf16.msra.mxu0 0
    %1593 = vmatprep.subr.bf16.mxu0 0
    %1594 = vmatpush1.bf16.msra.mxu0 0
    %1595 = vmatprep.subr.bf16.mxu0 0
    %1596 = vmatpush1.bf16.msra.mxu0 0
    %1597 = vmatprep.subr.bf16.mxu0 0
    %1598 = vmatpush1.bf16.msra.mxu0 0
    %1599 = vmatprep.subr.bf16.mxu0 0
    %1600 = vmatpush1.bf16.msra.mxu0 0
    %1601 = vmatprep.subr.bf16.mxu0 0
    %1602 = vmatpush1.bf16.msra.mxu0 0
    %1603 = vmatprep.subr.bf16.mxu0 0
    %1604 = vmatpush1.bf16.msra.mxu0 0
    %1605 = vmatprep.subr.bf16.mxu0 0
    %1606 = vmatpush1.bf16.msra.mxu0 0
    %1607 = vmatprep.subr.bf16.mxu0 0
    %1608 = vmatpush1.bf16.msra.mxu0 0
    %1609 = vmatprep.subr.bf16.mxu0 0
    %1610 = vmatpush1.bf16.msra.mxu0 0
    %1611 = vmatprep.subr.bf16.mxu0 0
    %1612 = vmatpush1.bf16.msra.mxu0 0
    %1613 = vmatprep.subr.bf16.mxu0 0
    %1614 = vmatpush1.bf16.msra.mxu0 0
    %1615 = vmatprep.subr.bf16.mxu0 0
    %1616 = vmatpush1.bf16.msra.mxu0 0
    %1617 = vmatprep.subr.bf16.mxu0 0
    %1618 = vmatpush1.bf16.msra.mxu0 0
    %1619 = vmatprep.subr.bf16.mxu0 0
    %1620 = vmatpush1.bf16.msra.mxu0 0
    %1621 = vmatprep.mubr.bf16.mxu0 0
    %1622 = vmatmul.mubr.bf16.gmra.mrb[0].mxu0 %v1584
    %v1623 = vpop.f32.mrb[0].mxu0
    %v1624 = vadd.f32 0.0, %v1623
    %v1625 = vpop.f32.mrb[0].mxu0
    %v1626 = vpop.f32.mrb[0].mxu0
    %v1627 = vpop.f32.mrb[0].mxu0
    %1628 = vdwg.mxu0
    %v1630 = vsel %vm1423, %v854, 0
    %1632 = vmatprep.subr.bf16.mxu0 0
    %1633 = vmatpush1.bf16.msra.mxu0 %v1429
    %1634 = vmatprep.subr.bf16.mxu0 0
    %1635 = vmatpush1.bf16.msra.mxu0 0
    %1636 = vmatprep.subr.bf16.mxu0 0
    %1637 = vmatpush1.bf16.msra.mxu0 0
    %1638 = vmatprep.subr.bf16.mxu0 0
    %1639 = vmatpush1.bf16.msra.mxu0 0
    %1640 = vmatprep.subr.bf16.mxu0 0
    %1641 = vmatpush1.bf16.msra.mxu0 0
    %1642 = vmatprep.subr.bf16.mxu0 0
    %1643 = vmatpush1.bf16.msra.mxu0 0
    %1644 = vmatprep.subr.bf16.mxu0 0
    %1645 = vmatpush1.bf16.msra.mxu0 0
    %1646 = vmatprep.subr.bf16.mxu0 0
    %1647 = vmatpush1.bf16.msra.mxu0 0
    %1648 = vmatprep.subr.bf16.mxu0 0
    %1649 = vmatpush1.bf16.msra.mxu0 0
    %1650 = vmatprep.subr.bf16.mxu0 0
    %1651 = vmatpush1.bf16.msra.mxu0 0
    %1652 = vmatprep.subr.bf16.mxu0 0
    %1653 = vmatpush1.bf16.msra.mxu0 0
    %1654 = vmatprep.subr.bf16.mxu0 0
    %1655 = vmatpush1.bf16.msra.mxu0 0
    %1656 = vmatprep.subr.bf16.mxu0 0
    %1657 = vmatpush1.bf16.msra.mxu0 0
    %1658 = vmatprep.subr.bf16.mxu0 0
    %1659 = vmatpush1.bf16.msra.mxu0 0
    %1660 = vmatprep.subr.bf16.mxu0 0
    %1661 = vmatpush1.bf16.msra.mxu0 0
    %1662 = vmatprep.subr.bf16.mxu0 0
    %1663 = vmatpush1.bf16.msra.mxu0 0
    %1664 = vmatprep.mubr.bf16.mxu0 0
    %1665 = vmatmul.mubr.bf16.gmra.mrb[0].mxu0 %v1630
    %v1666 = vpop.f32.mrb[0].mxu0
    %v1667 = vadd.f32 0.0, %v1666
    %v1668 = vpop.f32.mrb[0].mxu0
    %v1669 = vpop.f32.mrb[0].mxu0
    %v1670 = vpop.f32.mrb[0].mxu0
    %1671 = vdwg.mxu0
    %1673 = vset.pattern.permute.xlu0 0
    %1674 = vperm.xlu0 %1673, %v856
    %v1675 = vpop.permute.xlu0 %1674
    %v1677 = vmul.f32 %v1667, %v1675
    %v1678 = vpack.c.bf16 %v1677, %v1677
    %v1679 = vld [vmem:[#allocation31] sm:$0xf]
    %v1680 = vld [vmem:[#allocation31 + $0x4] sm:$0xf]
    %v1681 = vld [vmem:[#allocation31 + $0x8] sm:$0xf]
    %v1682 = vld [vmem:[#allocation31 + $0xc] sm:$0xf]
    %v1683 = vld [vmem:[#allocation31 + $0x10] sm:$0xf]
    %v1684 = vld [vmem:[#allocation31 + $0x14] sm:$0xf]
    %v1685 = vld [vmem:[#allocation31 + $0x18] sm:$0xf]
    %v1686 = vld [vmem:[#allocation31 + $0x1c] sm:$0xf]
    %v1687 = vld [vmem:[#allocation31 + $0x20] sm:$0xf]
    %v1688 = vld [vmem:[#allocation31 + $0x24] sm:$0xf]
    %v1689 = vld [vmem:[#allocation31 + $0x28] sm:$0xf]
    %v1690 = vld [vmem:[#allocation31 + $0x2c] sm:$0xf]
    %v1691 = vld [vmem:[#allocation31 + $0x30] sm:$0xf]
    %v1692 = vld [vmem:[#allocation31 + $0x34] sm:$0xf]
    %v1693 = vld [vmem:[#allocation31 + $0x38] sm:$0xf]
    %v1694 = vld [vmem:[#allocation31 + $0x3c] sm:$0xf]
    %v1711 = vunpack.c.l.b16 %v1679
    %v1712 = vunpack.c.l.b16 %v1680
    %v1713 = vunpack.c.l.b16 %v1681
    %v1714 = vunpack.c.l.b16 %v1682
    %v1715 = vunpack.c.l.b16 %v1683
    %v1716 = vunpack.c.l.b16 %v1684
    %v1717 = vunpack.c.l.b16 %v1685
    %v1718 = vunpack.c.l.b16 %v1686
    %v1719 = vunpack.c.l.b16 %v1687
    %v1720 = vunpack.c.l.b16 %v1688
    %v1721 = vunpack.c.l.b16 %v1689
    %v1722 = vunpack.c.l.b16 %v1690
    %v1723 = vunpack.c.l.b16 %v1691
    %v1724 = vunpack.c.l.b16 %v1692
    %v1725 = vunpack.c.l.b16 %v1693
    %v1726 = vunpack.c.l.b16 %v1694
    %v1727 = vpack.c.b16 %v1712, %v1711
    %v1728 = vpack.c.b16 %v1714, %v1713
    %v1729 = vpack.c.b16 %v1716, %v1715
    %v1730 = vpack.c.b16 %v1718, %v1717
    %v1731 = vpack.c.b16 %v1720, %v1719
    %v1732 = vpack.c.b16 %v1722, %v1721
    %v1733 = vpack.c.b16 %v1724, %v1723
    %v1734 = vpack.c.b16 %v1726, %v1725
    %1743 = vmatprep.subr.bf16.mxu0 0
    %1744 = vmatpush1.bf16.msra.mxu0 %v1727
    %1745 = vmatprep.subr.bf16.mxu0 0
    %1746 = vmatpush1.bf16.msra.mxu0 %v1728
    %1747 = vmatprep.subr.bf16.mxu0 0
    %1748 = vmatpush1.bf16.msra.mxu0 %v1729
    %1749 = vmatprep.subr.bf16.mxu0 0
    %1750 = vmatpush1.bf16.msra.mxu0 %v1730
    %1751 = vmatprep.subr.bf16.mxu0 0
    %1752 = vmatpush1.bf16.msra.mxu0 %v1731
    %1753 = vmatprep.subr.bf16.mxu0 0
    %1754 = vmatpush1.bf16.msra.mxu0 %v1732
    %1755 = vmatprep.subr.bf16.mxu0 0
    %1756 = vmatpush1.bf16.msra.mxu0 %v1733
    %1757 = vmatprep.subr.bf16.mxu0 0
    %1758 = vmatpush1.bf16.msra.mxu0 %v1734
    %1759 = vmatprep.subr.bf16.mxu0 0
    %1760 = vmatpush1.bf16.msra.mxu0 0
    %1761 = vmatprep.subr.bf16.mxu0 0
    %1762 = vmatpush1.bf16.msra.mxu0 0
    %1763 = vmatprep.subr.bf16.mxu0 0
    %1764 = vmatpush1.bf16.msra.mxu0 0
    %1765 = vmatprep.subr.bf16.mxu0 0
    %1766 = vmatpush1.bf16.msra.mxu0 0
    %1767 = vmatprep.subr.bf16.mxu0 0
    %1768 = vmatpush1.bf16.msra.mxu0 0
    %1769 = vmatprep.subr.bf16.mxu0 0
    %1770 = vmatpush1.bf16.msra.mxu0 0
    %1771 = vmatprep.subr.bf16.mxu0 0
    %1772 = vmatpush1.bf16.msra.mxu0 0
    %1773 = vmatprep.subr.bf16.mxu0 0
    %1774 = vmatpush1.bf16.msra.mxu0 0
    %1775 = vmatprep.mubr.bf16.mxu0 0
    %1776 = vmatmul.mubr.bf16.gmra.mrb[0].mxu0 %v1678
    %v1777 = vpop.f32.mrb[0].mxu0
    %v1778 = vadd.f32 0.0, %v1777
    %v1779 = vpop.f32.mrb[0].mxu0
    %v1780 = vpop.f32.mrb[0].mxu0
    %v1781 = vpop.f32.mrb[0].mxu0
    %1782 = vdwg.mxu0
    %v1783 = vpack.c.bf16 %v1778, %v1778
    %v1785 = vsel %vm1423, %v855, 0
    %v1788 = vsel %vm1427, %v1783, 0
    %1790 = vmatprep.subr.bf16.mxu0 0
    %1791 = vmatpush1.bf16.msra.mxu0 %v1788
    %1792 = vmatprep.subr.bf16.mxu0 0
    %1793 = vmatpush1.bf16.msra.mxu0 0
    %1794 = vmatprep.subr.bf16.mxu0 0
    %1795 = vmatpush1.bf16.msra.mxu0 0
    %1796 = vmatprep.subr.bf16.mxu0 0
    %1797 = vmatpush1.bf16.msra.mxu0 0
    %1798 = vmatprep.subr.bf16.mxu0 0
    %1799 = vmatpush1.bf16.msra.mxu0 0
    %1800 = vmatprep.subr.bf16.mxu0 0
    %1801 = vmatpush1.bf16.msra.mxu0 0
    %1802 = vmatprep.subr.bf16.mxu0 0
    %1803 = vmatpush1.bf16.msra.mxu0 0
    %1804 = vmatprep.subr.bf16.mxu0 0
    %1805 = vmatpush1.bf16.msra.mxu0 0
    %1806 = vmatprep.subr.bf16.mxu0 0
    %1807 = vmatpush1.bf16.msra.mxu0 0
    %1808 = vmatprep.subr.bf16.mxu0 0
    %1809 = vmatpush1.bf16.msra.mxu0 0
    %1810 = vmatprep.subr.bf16.mxu0 0
    %1811 = vmatpush1.bf16.msra.mxu0 0
    %1812 = vmatprep.subr.bf16.mxu0 0
    %1813 = vmatpush1.bf16.msra.mxu0 0
    %1814 = vmatprep.subr.bf16.mxu0 0
    %1815 = vmatpush1.bf16.msra.mxu0 0
    %1816 = vmatprep.subr.bf16.mxu0 0
    %1817 = vmatpush1.bf16.msra.mxu0 0
    %1818 = vmatprep.subr.bf16.mxu0 0
    %1819 = vmatpush1.bf16.msra.mxu0 0
    %1820 = vmatprep.subr.bf16.mxu0 0
    %1821 = vmatpush1.bf16.msra.mxu0 0
    %1822 = vmatprep.mubr.bf16.mxu0 0
    %1823 = vmatmul.mubr.bf16.gmra.mrb[0].mxu0 %v1785
    %v1824 = vpop.f32.mrb[0].mxu0
    %v1825 = vadd.f32 0.0, %v1824
    %v1826 = vpop.f32.mrb[0].mxu0
    %v1827 = vpop.f32.mrb[0].mxu0
    %v1828 = vpop.f32.mrb[0].mxu0
    %1829 = vdwg.mxu0
    %v1830 = vadd.f32 %v1417, %v1624
    %v1831 = vmax.f32 %v1830, 0.0
    %v1832 = vadd.f32 %v1419, %v1825
    %v1833 = vmax.f32 %v1832, 0.0
    %v1834 = vpack.c.bf16 %v1831, %v1831
    %v1835 = vpack.c.bf16 %v1833, %v1833
    %v1836 = vld [vmem:[#allocation34] sm:$0xf]
    %v1837 = vld [vmem:[#allocation34 + $0x4] sm:$0xf]
    %v1838 = vld [vmem:[#allocation34 + $0x8] sm:$0xf]
    %v1839 = vld [vmem:[#allocation34 + $0xc] sm:$0xf]
    %v1840 = vld [vmem:[#allocation34 + $0x10] sm:$0xf]
    %v1841 = vld [vmem:[#allocation34 + $0x14] sm:$0xf]
    %v1842 = vld [vmem:[#allocation34 + $0x18] sm:$0xf]
    %v1843 = vld [vmem:[#allocation34 + $0x1c] sm:$0xf]
    %v1844 = vld [vmem:[#allocation34 + $0x20] sm:$0xf]
    %v1845 = vld [vmem:[#allocation34 + $0x24] sm:$0xf]
    %v1846 = vld [vmem:[#allocation34 + $0x28] sm:$0xf]
    %v1847 = vld [vmem:[#allocation34 + $0x2c] sm:$0xf]
    %v1848 = vld [vmem:[#allocation34 + $0x30] sm:$0xf]
    %v1849 = vld [vmem:[#allocation34 + $0x34] sm:$0xf]
    %v1850 = vld [vmem:[#allocation34 + $0x38] sm:$0xf]
    %v1851 = vld [vmem:[#allocation34 + $0x3c] sm:$0xf]
    %v1852 = vld [vmem:[#allocation34 + $0x40] sm:$0xf]
    %v1853 = vld [vmem:[#allocation34 + $0x44] sm:$0xf]
    %v1854 = vld [vmem:[#allocation34 + $0x48] sm:$0xf]
    %v1855 = vld [vmem:[#allocation34 + $0x4c] sm:$0xf]
    %v1856 = vld [vmem:[#allocation34 + $0x50] sm:$0xf]
    %v1857 = vld [vmem:[#allocation34 + $0x54] sm:$0xf]
    %v1858 = vld [vmem:[#allocation34 + $0x58] sm:$0xf]
    %v1859 = vld [vmem:[#allocation34 + $0x5c] sm:$0xf]
    %v1860 = vld [vmem:[#allocation34 + $0x60] sm:$0xf]
    %v1861 = vld [vmem:[#allocation34 + $0x64] sm:$0xf]
    %v1862 = vld [vmem:[#allocation34 + $0x68] sm:$0xf]
    %v1863 = vld [vmem:[#allocation34 + $0x6c] sm:$0xf]
    %v1864 = vld [vmem:[#allocation34 + $0x70] sm:$0xf]
    %v1865 = vld [vmem:[#allocation34 + $0x74] sm:$0xf]
    %v1866 = vld [vmem:[#allocation34 + $0x78] sm:$0xf]
    %v1867 = vld [vmem:[#allocation34 + $0x7c] sm:$0xf]
    %v1868 = vld [vmem:[#allocation35] sm:$0xf]
    %v1869 = vld [vmem:[#allocation35 + $0x4] sm:$0xf]
    %v1870 = vld [vmem:[#allocation35 + $0x8] sm:$0xf]
    %v1871 = vld [vmem:[#allocation35 + $0xc] sm:$0xf]
    %v1872 = vld [vmem:[#allocation35 + $0x10] sm:$0xf]
    %v1873 = vld [vmem:[#allocation35 + $0x14] sm:$0xf]
    %v1874 = vld [vmem:[#allocation35 + $0x18] sm:$0xf]
    %v1875 = vld [vmem:[#allocation35 + $0x1c] sm:$0xf]
    %v1876 = vld [vmem:[#allocation35 + $0x20] sm:$0xf]
    %v1877 = vld [vmem:[#allocation35 + $0x24] sm:$0xf]
    %v1878 = vld [vmem:[#allocation35 + $0x28] sm:$0xf]
    %v1879 = vld [vmem:[#allocation35 + $0x2c] sm:$0xf]
    %v1880 = vld [vmem:[#allocation35 + $0x30] sm:$0xf]
    %v1881 = vld [vmem:[#allocation35 + $0x34] sm:$0xf]
    %v1882 = vld [vmem:[#allocation35 + $0x38] sm:$0xf]
    %v1883 = vld [vmem:[#allocation35 + $0x3c] sm:$0xf]
    %v1900 = vunpack.c.l.b16 %v1868
    %v1901 = vunpack.c.l.b16 %v1869
    %v1902 = vunpack.c.l.b16 %v1870
    %v1903 = vunpack.c.l.b16 %v1871
    %v1904 = vunpack.c.l.b16 %v1872
    %v1905 = vunpack.c.l.b16 %v1873
    %v1906 = vunpack.c.l.b16 %v1874
    %v1907 = vunpack.c.l.b16 %v1875
    %v1908 = vunpack.c.l.b16 %v1876
    %v1909 = vunpack.c.l.b16 %v1877
    %v1910 = vunpack.c.l.b16 %v1878
    %v1911 = vunpack.c.l.b16 %v1879
    %v1912 = vunpack.c.l.b16 %v1880
    %v1913 = vunpack.c.l.b16 %v1881
    %v1914 = vunpack.c.l.b16 %v1882
    %v1915 = vunpack.c.l.b16 %v1883
    %v1916 = vpack.c.b16 %v1901, %v1900
    %v1917 = vpack.c.b16 %v1903, %v1902
    %v1918 = vpack.c.b16 %v1905, %v1904
    %v1919 = vpack.c.b16 %v1907, %v1906
    %v1920 = vpack.c.b16 %v1909, %v1908
    %v1921 = vpack.c.b16 %v1911, %v1910
    %v1922 = vpack.c.b16 %v1913, %v1912
    %v1923 = vpack.c.b16 %v1915, %v1914
    %1932 = vmatprep.subr.bf16.mxu0 0
    %1933 = vmatpush1.bf16.msra.mxu0 %v1916
    %1934 = vmatprep.subr.bf16.mxu0 0
    %1935 = vmatpush1.bf16.msra.mxu0 %v1917
    %1936 = vmatprep.subr.bf16.mxu0 0
    %1937 = vmatpush1.bf16.msra.mxu0 %v1918
    %1938 = vmatprep.subr.bf16.mxu0 0
    %1939 = vmatpush1.bf16.msra.mxu0 %v1919
    %1940 = vmatprep.subr.bf16.mxu0 0
    %1941 = vmatpush1.bf16.msra.mxu0 %v1920
    %1942 = vmatprep.subr.bf16.mxu0 0
    %1943 = vmatpush1.bf16.msra.mxu0 %v1921
    %1944 = vmatprep.subr.bf16.mxu0 0
    %1945 = vmatpush1.bf16.msra.mxu0 %v1922
    %1946 = vmatprep.subr.bf16.mxu0 0
    %1947 = vmatpush1.bf16.msra.mxu0 %v1923
    %1948 = vmatprep.subr.bf16.mxu0 0
    %1949 = vmatpush1.bf16.msra.mxu0 0
    %1950 = vmatprep.subr.bf16.mxu0 0
    %1951 = vmatpush1.bf16.msra.mxu0 0
    %1952 = vmatprep.subr.bf16.mxu0 0
    %1953 = vmatpush1.bf16.msra.mxu0 0
    %1954 = vmatprep.subr.bf16.mxu0 0
    %1955 = vmatpush1.bf16.msra.mxu0 0
    %1956 = vmatprep.subr.bf16.mxu0 0
    %1957 = vmatpush1.bf16.msra.mxu0 0
    %1958 = vmatprep.subr.bf16.mxu0 0
    %1959 = vmatpush1.bf16.msra.mxu0 0
    %1960 = vmatprep.subr.bf16.mxu0 0
    %1961 = vmatpush1.bf16.msra.mxu0 0
    %1962 = vmatprep.subr.bf16.mxu0 0
    %1963 = vmatpush1.bf16.msra.mxu0 0
    %1964 = vmatprep.mubr.bf16.mxu0 0
    %1965 = vmatmul.mubr.bf16.gmra.mrb[0].mxu0 %v850
    %v1966 = vpop.f32.mrb[0].mxu0
    %v1967 = vadd.f32 0.0, %v1966
    %v1968 = vpop.f32.mrb[0].mxu0
    %v1969 = vpop.f32.mrb[0].mxu0
    %v1970 = vpop.f32.mrb[0].mxu0
    %1971 = vdwg.mxu0
    %v2004 = vunpack.c.l.b16 %v1836
    %v2005 = vunpack.c.l.b16 %v1837
    %v2006 = vunpack.c.l.b16 %v1838
    %v2007 = vunpack.c.l.b16 %v1839
    %v2008 = vunpack.c.l.b16 %v1840
    %v2009 = vunpack.c.l.b16 %v1841
    %v2010 = vunpack.c.l.b16 %v1842
    %v2011 = vunpack.c.l.b16 %v1843
    %v2012 = vunpack.c.l.b16 %v1844
    %v2013 = vunpack.c.l.b16 %v1845
    %v2014 = vunpack.c.l.b16 %v1846
    %v2015 = vunpack.c.l.b16 %v1847
    %v2016 = vunpack.c.l.b16 %v1848
    %v2017 = vunpack.c.l.b16 %v1849
    %v2018 = vunpack.c.l.b16 %v1850
    %v2019 = vunpack.c.l.b16 %v1851
    %v2020 = vunpack.c.l.b16 %v1852
    %v2021 = vunpack.c.l.b16 %v1853
    %v2022 = vunpack.c.l.b16 %v1854
    %v2023 = vunpack.c.l.b16 %v1855
    %v2024 = vunpack.c.l.b16 %v1856
    %v2025 = vunpack.c.l.b16 %v1857
    %v2026 = vunpack.c.l.b16 %v1858
    %v2027 = vunpack.c.l.b16 %v1859
    %v2028 = vunpack.c.l.b16 %v1860
    %v2029 = vunpack.c.l.b16 %v1861
    %v2030 = vunpack.c.l.b16 %v1862
    %v2031 = vunpack.c.l.b16 %v1863
    %v2032 = vunpack.c.l.b16 %v1864
    %v2033 = vunpack.c.l.b16 %v1865
    %v2034 = vunpack.c.l.b16 %v1866
    %v2035 = vunpack.c.l.b16 %v1867
    %v2036 = vpack.c.b16 %v2005, %v2004
    %v2037 = vpack.c.b16 %v2007, %v2006
    %v2038 = vpack.c.b16 %v2009, %v2008
    %v2039 = vpack.c.b16 %v2011, %v2010
    %v2040 = vpack.c.b16 %v2013, %v2012
    %v2041 = vpack.c.b16 %v2015, %v2014
    %v2042 = vpack.c.b16 %v2017, %v2016
    %v2043 = vpack.c.b16 %v2019, %v2018
    %v2044 = vpack.c.b16 %v2021, %v2020
    %v2045 = vpack.c.b16 %v2023, %v2022
    %v2046 = vpack.c.b16 %v2025, %v2024
    %v2047 = vpack.c.b16 %v2027, %v2026
    %v2048 = vpack.c.b16 %v2029, %v2028
    %v2049 = vpack.c.b16 %v2031, %v2030
    %v2050 = vpack.c.b16 %v2033, %v2032
    %v2051 = vpack.c.b16 %v2035, %v2034
    %2068 = vmatprep.subr.bf16.mxu0 0
    %2069 = vmatpush1.bf16.msra.mxu0 %v2036
    %2070 = vmatprep.subr.bf16.mxu0 0
    %2071 = vmatpush1.bf16.msra.mxu0 %v2037
    %2072 = vmatprep.subr.bf16.mxu0 0
    %2073 = vmatpush1.bf16.msra.mxu0 %v2038
    %2074 = vmatprep.subr.bf16.mxu0 0
    %2075 = vmatpush1.bf16.msra.mxu0 %v2039
    %2076 = vmatprep.subr.bf16.mxu0 0
    %2077 = vmatpush1.bf16.msra.mxu0 %v2040
    %2078 = vmatprep.subr.bf16.mxu0 0
    %2079 = vmatpush1.bf16.msra.mxu0 %v2041
    %2080 = vmatprep.subr.bf16.mxu0 0
    %2081 = vmatpush1.bf16.msra.mxu0 %v2042
    %2082 = vmatprep.subr.bf16.mxu0 0
    %2083 = vmatpush1.bf16.msra.mxu0 %v2043
    %2084 = vmatprep.subr.bf16.mxu0 0
    %2085 = vmatpush1.bf16.msra.mxu0 %v2044
    %2086 = vmatprep.subr.bf16.mxu0 0
    %2087 = vmatpush1.bf16.msra.mxu0 %v2045
    %2088 = vmatprep.subr.bf16.mxu0 0
    %2089 = vmatpush1.bf16.msra.mxu0 %v2046
    %2090 = vmatprep.subr.bf16.mxu0 0
    %2091 = vmatpush1.bf16.msra.mxu0 %v2047
    %2092 = vmatprep.subr.bf16.mxu0 0
    %2093 = vmatpush1.bf16.msra.mxu0 %v2048
    %2094 = vmatprep.subr.bf16.mxu0 0
    %2095 = vmatpush1.bf16.msra.mxu0 %v2049
    %2096 = vmatprep.subr.bf16.mxu0 0
    %2097 = vmatpush1.bf16.msra.mxu0 %v2050
    %2098 = vmatprep.subr.bf16.mxu0 0
    %2099 = vmatpush1.bf16.msra.mxu0 %v2051
    %2100 = vmatprep.mubr.bf16.mxu0 %v622
    %2101 = vmatmul.mubr.bf16.gmra.mrb[0].mxu0 %v621
    %v2102 = vpop.f32.mrb[0].mxu0
    %v2103 = vadd.f32 %v1967, %v2102
    %v2104 = vpop.f32.mrb[0].mxu0
    %v2105 = vpop.f32.mrb[0].mxu0
    %v2106 = vpop.f32.mrb[0].mxu0
    %2107 = vdwg.mxu0
    %v2108 = vld [vmem:[%s57] sm:$0x1]
    %v2110 = vlaneseq
    %v2111 = vshrl.u32 %v2110, 7
    %v2112 = vsub.s32 0, %v2111
    %v2113 = vrot.slane %v2108, %v2112
    %v2115 = vadd.f32 %v2103, %v2113
    %v2116 = vrot.slane %v2115, 4
    %v2117 = vadd.f32 %v2115, %v2116
    %v2118 = vrot.slane %v2117, 2
    %v2119 = vadd.f32 %v2117, %v2118
    %v2120 = vrot.slane %v2119, 1
    %v2121 = vadd.f32 %v2119, %v2120
    %v2122 = vmul.f32 %v2121, %v1143
    %v2123 = vmul.f32 %v2115, %v2115
    %v2124 = vrot.slane %v2123, 4
    %v2125 = vadd.f32 %v2123, %v2124
    %v2126 = vrot.slane %v2125, 2
    %v2127 = vadd.f32 %v2125, %v2126
    %v2128 = vrot.slane %v2127, 1
    %v2129 = vadd.f32 %v2127, %v2128
    %v2130 = vmul.f32 %v2129, %v1143
    %v2131 = vmul.f32 %v2122, %v2122
    %v2132 = vsub.f32 %v2130, %v2131
    %v2133 = vld [vmem:[#allocation37] sm:$0x1]
    %v2134 = vadd.f32 %v2132, 1e-05
    %v2135 = vrsqrt.pop %v2134
    %v2136 = vmul.f32 %v2133, %v2135
    %v2137 = vld [vmem:[#allocation38] sm:$0x1]
    %v2138 = vmul.f32 %v2122, %v2136
    %v2139 = vsub.f32 %v2137, %v2138
    %v2141 = vlaneseq
    %v2142 = vshrl.u32 %v2141, 7
    %v2143 = vsub.s32 0, %v2142
    %v2144 = vrot.slane %v2136, %v2143
    %v2146 = vmul.f32 %v2115, %v2144
    %v2148 = vlaneseq
    %v2149 = vshrl.u32 %v2148, 7
    %v2150 = vsub.s32 0, %v2149
    %v2151 = vrot.slane %v2139, %v2150
    %v2153 = vadd.f32 %v2146, %v2151
    %v2154 = vmax.f32 %v2153, 0.0
    %v2155 = vpack.c.bf16 %v2154, %v2154
    %v2156 = vld [vmem:[#allocation40] sm:$0xff]
    %v2157 = vld [vmem:[#allocation40 + $0x8] sm:$0xff]
    %v2158 = vld [vmem:[#allocation40 + $0x10] sm:$0xff]
    %v2159 = vld [vmem:[#allocation40 + $0x18] sm:$0xff]
    %v2160 = vld [vmem:[#allocation40 + $0x20] sm:$0xff]
    %v2161 = vld [vmem:[#allocation40 + $0x28] sm:$0xff]
    %v2162 = vld [vmem:[#allocation40 + $0x30] sm:$0xff]
    %v2163 = vld [vmem:[#allocation40 + $0x38] sm:$0xff]
    %v2164 = vld [vmem:[#allocation40 + $0x40] sm:$0xff]
    %v2165 = vld [vmem:[#allocation40 + $0x48] sm:$0xff]
    %v2166 = vld [vmem:[#allocation40 + $0x50] sm:$0xff]
    %v2167 = vld [vmem:[#allocation40 + $0x58] sm:$0xff]
    %v2168 = vld [vmem:[#allocation40 + $0x60] sm:$0xff]
    %v2169 = vld [vmem:[#allocation40 + $0x68] sm:$0xff]
    %v2170 = vld [vmem:[#allocation40 + $0x70] sm:$0xff]
    %v2171 = vld [vmem:[#allocation40 + $0x78] sm:$0xff]
    %v2172 = vld [vmem:[#allocation40 + $0x80] sm:$0xff]
    %v2173 = vld [vmem:[#allocation40 + $0x88] sm:$0xff]
    %v2174 = vld [vmem:[#allocation40 + $0x90] sm:$0xff]
    %v2175 = vld [vmem:[#allocation40 + $0x98] sm:$0xff]
    %v2176 = vld [vmem:[#allocation40 + $0xa0] sm:$0xff]
    %v2177 = vld [vmem:[#allocation40 + $0xa8] sm:$0xff]
    %v2178 = vld [vmem:[#allocation40 + $0xb0] sm:$0xff]
    %v2179 = vld [vmem:[#allocation40 + $0xb8] sm:$0xff]
    %v2180 = vld [vmem:[#allocation40 + $0xc0] sm:$0xff]
    %v2181 = vld [vmem:[#allocation40 + $0xc8] sm:$0xff]
    %v2182 = vld [vmem:[#allocation40 + $0xd0] sm:$0xff]
    %v2183 = vld [vmem:[#allocation40 + $0xd8] sm:$0xff]
    %v2184 = vld [vmem:[#allocation40 + $0xe0] sm:$0xff]
    %v2185 = vld [vmem:[#allocation40 + $0xe8] sm:$0xff]
    %v2186 = vld [vmem:[#allocation40 + $0xf0] sm:$0xff]
    %v2187 = vld [vmem:[#allocation40 + $0xf8] sm:$0xff]
    %v2188 = vld [vmem:[%s69] sm:$0x3]
    %v2190 = vlaneseq
    %v2191 = vshrl.u32 %v2190, 7
    %v2192 = vsub.s32 0, %v2191
    %v2193 = vrot.slane %v2188, %v2192
    %v2194 = vlaneseq
    %v2195 = vshrl.u32 %v2194, 7
    %v2196 = vsub.s32 1, %v2195
    %v2197 = vrot.slane %v2188, %v2196
    %v2232 = vunpack.c.l.b16 %v2156
    %v2233 = vunpack.c.h.b16 %v2156
    %v2234 = vunpack.c.l.b16 %v2157
    %v2235 = vunpack.c.h.b16 %v2157
    %v2236 = vunpack.c.l.b16 %v2158
    %v2237 = vunpack.c.h.b16 %v2158
    %v2238 = vunpack.c.l.b16 %v2159
    %v2239 = vunpack.c.h.b16 %v2159
    %v2240 = vunpack.c.l.b16 %v2160
    %v2241 = vunpack.c.h.b16 %v2160
    %v2242 = vunpack.c.l.b16 %v2161
    %v2243 = vunpack.c.h.b16 %v2161
    %v2244 = vunpack.c.l.b16 %v2162
    %v2245 = vunpack.c.h.b16 %v2162
    %v2246 = vunpack.c.l.b16 %v2163
    %v2247 = vunpack.c.h.b16 %v2163
    %v2248 = vunpack.c.l.b16 %v2164
    %v2249 = vunpack.c.h.b16 %v2164
    %v2250 = vunpack.c.l.b16 %v2165
    %v2251 = vunpack.c.h.b16 %v2165
    %v2252 = vunpack.c.l.b16 %v2166
    %v2253 = vunpack.c.h.b16 %v2166
    %v2254 = vunpack.c.l.b16 %v2167
    %v2255 = vunpack.c.h.b16 %v2167
    %v2256 = vunpack.c.l.b16 %v2168
    %v2257 = vunpack.c.h.b16 %v2168
    %v2258 = vunpack.c.l.b16 %v2169
    %v2259 = vunpack.c.h.b16 %v2169
    %v2260 = vunpack.c.l.b16 %v2170
    %v2261 = vunpack.c.h.b16 %v2170
    %v2262 = vunpack.c.l.b16 %v2171
    %v2263 = vunpack.c.h.b16 %v2171
    %v2264 = vunpack.c.l.b16 %v2172
    %v2265 = vunpack.c.h.b16 %v2172
    %v2266 = vunpack.c.l.b16 %v2173
    %v2267 = vunpack.c.h.b16 %v2173
    %v2268 = vunpack.c.l.b16 %v2174
    %v2269 = vunpack.c.h.b16 %v2174
    %v2270 = vunpack.c.l.b16 %v2175
    %v2271 = vunpack.c.h.b16 %v2175
    %v2272 = vunpack.c.l.b16 %v2176
    %v2273 = vunpack.c.h.b16 %v2176
    %v2274 = vunpack.c.l.b16 %v2177
    %v2275 = vunpack.c.h.b16 %v2177
    %v2276 = vunpack.c.l.b16 %v2178
    %v2277 = vunpack.c.h.b16 %v2178
    %v2278 = vunpack.c.l.b16 %v2179
    %v2279 = vunpack.c.h.b16 %v2179
    %v2280 = vunpack.c.l.b16 %v2180
    %v2281 = vunpack.c.h.b16 %v2180
    %v2282 = vunpack.c.l.b16 %v2181
    %v2283 = vunpack.c.h.b16 %v2181
    %v2284 = vunpack.c.l.b16 %v2182
    %v2285 = vunpack.c.h.b16 %v2182
    %v2286 = vunpack.c.l.b16 %v2183
    %v2287 = vunpack.c.h.b16 %v2183
    %v2288 = vunpack.c.l.b16 %v2184
    %v2289 = vunpack.c.h.b16 %v2184
    %v2290 = vunpack.c.l.b16 %v2185
    %v2291 = vunpack.c.h.b16 %v2185
    %v2292 = vunpack.c.l.b16 %v2186
    %v2293 = vunpack.c.h.b16 %v2186
    %v2294 = vunpack.c.l.b16 %v2187
    %v2295 = vunpack.c.h.b16 %v2187
    %v2296 = vpack.c.b16 %v2234, %v2232
    %v2297 = vpack.c.b16 %v2235, %v2233
    %v2298 = vpack.c.b16 %v2238, %v2236
    %v2299 = vpack.c.b16 %v2239, %v2237
    %v2300 = vpack.c.b16 %v2242, %v2240
    %v2301 = vpack.c.b16 %v2243, %v2241
    %v2302 = vpack.c.b16 %v2246, %v2244
    %v2303 = vpack.c.b16 %v2247, %v2245
    %v2304 = vpack.c.b16 %v2250, %v2248
    %v2305 = vpack.c.b16 %v2251, %v2249
    %v2306 = vpack.c.b16 %v2254, %v2252
    %v2307 = vpack.c.b16 %v2255, %v2253
    %v2308 = vpack.c.b16 %v2258, %v2256
    %v2309 = vpack.c.b16 %v2259, %v2257
    %v2310 = vpack.c.b16 %v2262, %v2260
    %v2311 = vpack.c.b16 %v2263, %v2261
    %v2312 = vpack.c.b16 %v2266, %v2264
    %v2313 = vpack.c.b16 %v2267, %v2265
    %v2314 = vpack.c.b16 %v2270, %v2268
    %v2315 = vpack.c.b16 %v2271, %v2269
    %v2316 = vpack.c.b16 %v2274, %v2272
    %v2317 = vpack.c.b16 %v2275, %v2273
    %v2318 = vpack.c.b16 %v2278, %v2276
    %v2319 = vpack.c.b16 %v2279, %v2277
    %v2320 = vpack.c.b16 %v2282, %v2280
    %v2321 = vpack.c.b16 %v2283, %v2281
    %v2322 = vpack.c.b16 %v2286, %v2284
    %v2323 = vpack.c.b16 %v2287, %v2285
    %v2324 = vpack.c.b16 %v2290, %v2288
    %v2325 = vpack.c.b16 %v2291, %v2289
    %v2326 = vpack.c.b16 %v2294, %v2292
    %v2327 = vpack.c.b16 %v2295, %v2293
    %2360 = vmatprep.subr.bf16.mxu0 %v2297
    %2361 = vmatpush1.bf16.msra.mxu0 %v2296
    %2362 = vmatprep.subr.bf16.mxu0 %v2299
    %2363 = vmatpush1.bf16.msra.mxu0 %v2298
    %2364 = vmatprep.subr.bf16.mxu0 %v2301
    %2365 = vmatpush1.bf16.msra.mxu0 %v2300
    %2366 = vmatprep.subr.bf16.mxu0 %v2303
    %2367 = vmatpush1.bf16.msra.mxu0 %v2302
    %2368 = vmatprep.subr.bf16.mxu0 %v2305
    %2369 = vmatpush1.bf16.msra.mxu0 %v2304
    %2370 = vmatprep.subr.bf16.mxu0 %v2307
    %2371 = vmatpush1.bf16.msra.mxu0 %v2306
    %2372 = vmatprep.subr.bf16.mxu0 %v2309
    %2373 = vmatpush1.bf16.msra.mxu0 %v2308
    %2374 = vmatprep.subr.bf16.mxu0 %v2311
    %2375 = vmatpush1.bf16.msra.mxu0 %v2310
    %2376 = vmatprep.subr.bf16.mxu0 %v2313
    %2377 = vmatpush1.bf16.msra.mxu0 %v2312
    %2378 = vmatprep.subr.bf16.mxu0 %v2315
    %2379 = vmatpush1.bf16.msra.mxu0 %v2314
    %2380 = vmatprep.subr.bf16.mxu0 %v2317
    %2381 = vmatpush1.bf16.msra.mxu0 %v2316
    %2382 = vmatprep.subr.bf16.mxu0 %v2319
    %2383 = vmatpush1.bf16.msra.mxu0 %v2318
    %2384 = vmatprep.subr.bf16.mxu0 %v2321
    %2385 = vmatpush1.bf16.msra.mxu0 %v2320
    %2386 = vmatprep.subr.bf16.mxu0 %v2323
    %2387 = vmatpush1.bf16.msra.mxu0 %v2322
    %2388 = vmatprep.subr.bf16.mxu0 %v2325
    %2389 = vmatpush1.bf16.msra.mxu0 %v2324
    %2390 = vmatprep.subr.bf16.mxu0 %v2327
    %2391 = vmatpush1.bf16.msra.mxu0 %v2326
    %2392 = vmatprep.mubr.bf16.mxu0 %v850
    %2393 = vmatmul.mubr.bf16.gmra.mrb[0].mxu0 %v2155
    %v2394 = vpop.f32.mrb[0].mxu0
    %v2395 = vadd.f32 %v2193, %v2394
    %v2396 = vpop.f32.mrb[0].mxu0
    %v2397 = vadd.f32 %v2197, %v2396
    %v2398 = vpop.f32.mrb[0].mxu0
    %v2399 = vpop.f32.mrb[0].mxu0
    %2400 = vdwg.mxu0
    %v2402 = vsel %vm1427, %v2155, 0
    %2404 = vmatprep.subr.bf16.mxu0 0
    %2405 = vmatpush1.bf16.msra.mxu0 %v2402
    %2406 = vmatprep.subr.bf16.mxu0 0
    %2407 = vmatpush1.bf16.msra.mxu0 0
    %2408 = vmatprep.subr.bf16.mxu0 0
    %2409 = vmatpush1.bf16.msra.mxu0 0
    %2410 = vmatprep.subr.bf16.mxu0 0
    %2411 = vmatpush1.bf16.msra.mxu0 0
    %2412 = vmatprep.subr.bf16.mxu0 0
    %2413 = vmatpush1.bf16.msra.mxu0 0
    %2414 = vmatprep.subr.bf16.mxu0 0
    %2415 = vmatpush1.bf16.msra.mxu0 0
    %2416 = vmatprep.subr.bf16.mxu0 0
    %2417 = vmatpush1.bf16.msra.mxu0 0
    %2418 = vmatprep.subr.bf16.mxu0 0
    %2419 = vmatpush1.bf16.msra.mxu0 0
    %2420 = vmatprep.subr.bf16.mxu0 0
    %2421 = vmatpush1.bf16.msra.mxu0 0
    %2422 = vmatprep.subr.bf16.mxu0 0
    %2423 = vmatpush1.bf16.msra.mxu0 0
    %2424 = vmatprep.subr.bf16.mxu0 0
    %2425 = vmatpush1.bf16.msra.mxu0 0
    %2426 = vmatprep.subr.bf16.mxu0 0
    %2427 = vmatpush1.bf16.msra.mxu0 0
    %2428 = vmatprep.subr.bf16.mxu0 0
    %2429 = vmatpush1.bf16.msra.mxu0 0
    %2430 = vmatprep.subr.bf16.mxu0 0
    %2431 = vmatpush1.bf16.msra.mxu0 0
    %2432 = vmatprep.subr.bf16.mxu0 0
    %2433 = vmatpush1.bf16.msra.mxu0 0
    %2434 = vmatprep.subr.bf16.mxu0 0
    %2435 = vmatpush1.bf16.msra.mxu0 0
    %2436 = vmatprep.mubr.bf16.mxu0 0
    %2437 = vmatmul.mubr.bf16.gmra.mrb[0].mxu0 %v1425
    %v2438 = vpop.f32.mrb[0].mxu0
    %v2439 = vadd.f32 0.0, %v2438
    %v2440 = vpop.f32.mrb[0].mxu0
    %v2441 = vpop.f32.mrb[0].mxu0
    %v2442 = vpop.f32.mrb[0].mxu0
    %2443 = vdwg.mxu0
    %v2444 = vmul.f32 %v2439, %v1474
    %v2445 = vpack.c.bf16 %v2444, %v2444
    %v2446 = vld [vmem:[#allocation41] sm:$0xf]
    %v2447 = vld [vmem:[#allocation41 + $0x4] sm:$0xf]
    %v2448 = vld [vmem:[#allocation41 + $0x8] sm:$0xf]
    %v2449 = vld [vmem:[#allocation41 + $0xc] sm:$0xf]
    %v2450 = vld [vmem:[#allocation41 + $0x10] sm:$0xf]
    %v2451 = vld [vmem:[#allocation41 + $0x14] sm:$0xf]
    %v2452 = vld [vmem:[#allocation41 + $0x18] sm:$0xf]
    %v2453 = vld [vmem:[#allocation41 + $0x1c] sm:$0xf]
    %v2454 = vld [vmem:[#allocation41 + $0x20] sm:$0xf]
    %v2455 = vld [vmem:[#allocation41 + $0x24] sm:$0xf]
    %v2456 = vld [vmem:[#allocation41 + $0x28] sm:$0xf]
    %v2457 = vld [vmem:[#allocation41 + $0x2c] sm:$0xf]
    %v2458 = vld [vmem:[#allocation41 + $0x30] sm:$0xf]
    %v2459 = vld [vmem:[#allocation41 + $0x34] sm:$0xf]
    %v2460 = vld [vmem:[#allocation41 + $0x38] sm:$0xf]
    %v2461 = vld [vmem:[#allocation41 + $0x3c] sm:$0xf]
    %v2478 = vunpack.c.l.b16 %v2446
    %v2479 = vunpack.c.l.b16 %v2447
    %v2480 = vunpack.c.l.b16 %v2448
    %v2481 = vunpack.c.l.b16 %v2449
    %v2482 = vunpack.c.l.b16 %v2450
    %v2483 = vunpack.c.l.b16 %v2451
    %v2484 = vunpack.c.l.b16 %v2452
    %v2485 = vunpack.c.l.b16 %v2453
    %v2486 = vunpack.c.l.b16 %v2454
    %v2487 = vunpack.c.l.b16 %v2455
    %v2488 = vunpack.c.l.b16 %v2456
    %v2489 = vunpack.c.l.b16 %v2457
    %v2490 = vunpack.c.l.b16 %v2458
    %v2491 = vunpack.c.l.b16 %v2459
    %v2492 = vunpack.c.l.b16 %v2460
    %v2493 = vunpack.c.l.b16 %v2461
    %v2494 = vpack.c.b16 %v2479, %v2478
    %v2495 = vpack.c.b16 %v2481, %v2480
    %v2496 = vpack.c.b16 %v2483, %v2482
    %v2497 = vpack.c.b16 %v2485, %v2484
    %v2498 = vpack.c.b16 %v2487, %v2486
    %v2499 = vpack.c.b16 %v2489, %v2488
    %v2500 = vpack.c.b16 %v2491, %v2490
    %v2501 = vpack.c.b16 %v2493, %v2492
    %2510 = vmatprep.subr.bf16.mxu0 0
    %2511 = vmatpush1.bf16.msra.mxu0 %v2494
    %2512 = vmatprep.subr.bf16.mxu0 0
    %2513 = vmatpush1.bf16.msra.mxu0 %v2495
    %2514 = vmatprep.subr.bf16.mxu0 0
    %2515 = vmatpush1.bf16.msra.mxu0 %v2496
    %2516 = vmatprep.subr.bf16.mxu0 0
    %2517 = vmatpush1.bf16.msra.mxu0 %v2497
    %2518 = vmatprep.subr.bf16.mxu0 0
    %2519 = vmatpush1.bf16.msra.mxu0 %v2498
    %2520 = vmatprep.subr.bf16.mxu0 0
    %2521 = vmatpush1.bf16.msra.mxu0 %v2499
    %2522 = vmatprep.subr.bf16.mxu0 0
    %2523 = vmatpush1.bf16.msra.mxu0 %v2500
    %2524 = vmatprep.subr.bf16.mxu0 0
    %2525 = vmatpush1.bf16.msra.mxu0 %v2501
    %2526 = vmatprep.subr.bf16.mxu0 0
    %2527 = vmatpush1.bf16.msra.mxu0 0
    %2528 = vmatprep.subr.bf16.mxu0 0
    %2529 = vmatpush1.bf16.msra.mxu0 0
    %2530 = vmatprep.subr.bf16.mxu0 0
    %2531 = vmatpush1.bf16.msra.mxu0 0
    %2532 = vmatprep.subr.bf16.mxu0 0
    %2533 = vmatpush1.bf16.msra.mxu0 0
    %2534 = vmatprep.subr.bf16.mxu0 0
    %2535 = vmatpush1.bf16.msra.mxu0 0
    %2536 = vmatprep.subr.bf16.mxu0 0
    %2537 = vmatpush1.bf16.msra.mxu0 0
    %2538 = vmatprep.subr.bf16.mxu0 0
    %2539 = vmatpush1.bf16.msra.mxu0 0
    %2540 = vmatprep.subr.bf16.mxu0 0
    %2541 = vmatpush1.bf16.msra.mxu0 0
    %2542 = vmatprep.mubr.bf16.mxu0 0
    %2543 = vmatmul.mubr.bf16.gmra.mrb[0].mxu0 %v2445
    %v2544 = vpop.f32.mrb[0].mxu0
    %v2545 = vadd.f32 0.0, %v2544
    %v2546 = vpop.f32.mrb[0].mxu0
    %v2547 = vpop.f32.mrb[0].mxu0
    %v2548 = vpop.f32.mrb[0].mxu0
    %2549 = vdwg.mxu0
    %v2550 = vpack.c.bf16 %v2545, %v2545
    %v2552 = vsel %vm1427, %v2550, 0
    %2554 = vmatprep.subr.bf16.mxu0 0
    %2555 = vmatpush1.bf16.msra.mxu0 %v2552
    %2556 = vmatprep.subr.bf16.mxu0 0
    %2557 = vmatpush1.bf16.msra.mxu0 0
    %2558 = vmatprep.subr.bf16.mxu0 0
    %2559 = vmatpush1.bf16.msra.mxu0 0
    %2560 = vmatprep.subr.bf16.mxu0 0
    %2561 = vmatpush1.bf16.msra.mxu0 0
    %2562 = vmatprep.subr.bf16.mxu0 0
    %2563 = vmatpush1.bf16.msra.mxu0 0
    %2564 = vmatprep.subr.bf16.mxu0 0
    %2565 = vmatpush1.bf16.msra.mxu0 0
    %2566 = vmatprep.subr.bf16.mxu0 0
    %2567 = vmatpush1.bf16.msra.mxu0 0
    %2568 = vmatprep.subr.bf16.mxu0 0
    %2569 = vmatpush1.bf16.msra.mxu0 0
    %2570 = vmatprep.subr.bf16.mxu0 0
    %2571 = vmatpush1.bf16.msra.mxu0 0
    %2572 = vmatprep.subr.bf16.mxu0 0
    %2573 = vmatpush1.bf16.msra.mxu0 0
    %2574 = vmatprep.subr.bf16.mxu0 0
    %2575 = vmatpush1.bf16.msra.mxu0 0
    %2576 = vmatprep.subr.bf16.mxu0 0
    %2577 = vmatpush1.bf16.msra.mxu0 0
    %2578 = vmatprep.subr.bf16.mxu0 0
    %2579 = vmatpush1.bf16.msra.mxu0 0
    %2580 = vmatprep.subr.bf16.mxu0 0
    %2581 = vmatpush1.bf16.msra.mxu0 0
    %2582 = vmatprep.subr.bf16.mxu0 0
    %2583 = vmatpush1.bf16.msra.mxu0 0
    %2584 = vmatprep.subr.bf16.mxu0 0
    %2585 = vmatpush1.bf16.msra.mxu0 0
    %2586 = vmatprep.mubr.bf16.mxu0 0
    %2587 = vmatmul.mubr.bf16.gmra.mrb[0].mxu0 %v1584
    %v2588 = vpop.f32.mrb[0].mxu0
    %v2589 = vadd.f32 0.0, %v2588
    %v2590 = vpop.f32.mrb[0].mxu0
    %v2591 = vpop.f32.mrb[0].mxu0
    %v2592 = vpop.f32.mrb[0].mxu0
    %2593 = vdwg.mxu0
    %2594 = vmatprep.subr.bf16.mxu0 0
    %2595 = vmatpush1.bf16.msra.mxu0 %v2402
    %2596 = vmatprep.subr.bf16.mxu0 0
    %2597 = vmatpush1.bf16.msra.mxu0 0
    %2598 = vmatprep.subr.bf16.mxu0 0
    %2599 = vmatpush1.bf16.msra.mxu0 0
    %2600 = vmatprep.subr.bf16.mxu0 0
    %2601 = vmatpush1.bf16.msra.mxu0 0
    %2602 = vmatprep.subr.bf16.mxu0 0
    %2603 = vmatpush1.bf16.msra.mxu0 0
    %2604 = vmatprep.subr.bf16.mxu0 0
    %2605 = vmatpush1.bf16.msra.mxu0 0
    %2606 = vmatprep.subr.bf16.mxu0 0
    %2607 = vmatpush1.bf16.msra.mxu0 0
    %2608 = vmatprep.subr.bf16.mxu0 0
    %2609 = vmatpush1.bf16.msra.mxu0 0
    %2610 = vmatprep.subr.bf16.mxu0 0
    %2611 = vmatpush1.bf16.msra.mxu0 0
    %2612 = vmatprep.subr.bf16.mxu0 0
    %2613 = vmatpush1.bf16.msra.mxu0 0
    %2614 = vmatprep.subr.bf16.mxu0 0
    %2615 = vmatpush1.bf16.msra.mxu0 0
    %2616 = vmatprep.subr.bf16.mxu0 0
    %2617 = vmatpush1.bf16.msra.mxu0 0
    %2618 = vmatprep.subr.bf16.mxu0 0
    %2619 = vmatpush1.bf16.msra.mxu0 0
    %2620 = vmatprep.subr.bf16.mxu0 0
    %2621 = vmatpush1.bf16.msra.mxu0 0
    %2622 = vmatprep.subr.bf16.mxu0 0
    %2623 = vmatpush1.bf16.msra.mxu0 0
    %2624 = vmatprep.subr.bf16.mxu0 0
    %2625 = vmatpush1.bf16.msra.mxu0 0
    %2626 = vmatprep.mubr.bf16.mxu0 0
    %2627 = vmatmul.mubr.bf16.gmra.mrb[0].mxu0 %v1630
    %v2628 = vpop.f32.mrb[0].mxu0
    %v2629 = vadd.f32 0.0, %v2628
    %v2630 = vpop.f32.mrb[0].mxu0
    %v2631 = vpop.f32.mrb[0].mxu0
    %v2632 = vpop.f32.mrb[0].mxu0
    %2633 = vdwg.mxu0
    %v2634 = vmul.f32 %v2629, %v1675
    %v2635 = vpack.c.bf16 %v2634, %v2634
    %v2636 = vld [vmem:[#allocation43] sm:$0xf]
    %v2637 = vld [vmem:[#allocation43 + $0x4] sm:$0xf]
    %v2638 = vld [vmem:[#allocation43 + $0x8] sm:$0xf]
    %v2639 = vld [vmem:[#allocation43 + $0xc] sm:$0xf]
    %v2640 = vld [vmem:[#allocation43 + $0x10] sm:$0xf]
    %v2641 = vld [vmem:[#allocation43 + $0x14] sm:$0xf]
    %v2642 = vld [vmem:[#allocation43 + $0x18] sm:$0xf]
    %v2643 = vld [vmem:[#allocation43 + $0x1c] sm:$0xf]
    %v2644 = vld [vmem:[#allocation43 + $0x20] sm:$0xf]
    %v2645 = vld [vmem:[#allocation43 + $0x24] sm:$0xf]
    %v2646 = vld [vmem:[#allocation43 + $0x28] sm:$0xf]
    %v2647 = vld [vmem:[#allocation43 + $0x2c] sm:$0xf]
    %v2648 = vld [vmem:[#allocation43 + $0x30] sm:$0xf]
    %v2649 = vld [vmem:[#allocation43 + $0x34] sm:$0xf]
    %v2650 = vld [vmem:[#allocation43 + $0x38] sm:$0xf]
    %v2651 = vld [vmem:[#allocation43 + $0x3c] sm:$0xf]
    %v2668 = vunpack.c.l.b16 %v2636
    %v2669 = vunpack.c.l.b16 %v2637
    %v2670 = vunpack.c.l.b16 %v2638
    %v2671 = vunpack.c.l.b16 %v2639
    %v2672 = vunpack.c.l.b16 %v2640
    %v2673 = vunpack.c.l.b16 %v2641
    %v2674 = vunpack.c.l.b16 %v2642
    %v2675 = vunpack.c.l.b16 %v2643
    %v2676 = vunpack.c.l.b16 %v2644
    %v2677 = vunpack.c.l.b16 %v2645
    %v2678 = vunpack.c.l.b16 %v2646
    %v2679 = vunpack.c.l.b16 %v2647
    %v2680 = vunpack.c.l.b16 %v2648
    %v2681 = vunpack.c.l.b16 %v2649
    %v2682 = vunpack.c.l.b16 %v2650
    %v2683 = vunpack.c.l.b16 %v2651
    %v2684 = vpack.c.b16 %v2669, %v2668
    %v2685 = vpack.c.b16 %v2671, %v2670
    %v2686 = vpack.c.b16 %v2673, %v2672
    %v2687 = vpack.c.b16 %v2675, %v2674
    %v2688 = vpack.c.b16 %v2677, %v2676
    %v2689 = vpack.c.b16 %v2679, %v2678
    %v2690 = vpack.c.b16 %v2681, %v2680
    %v2691 = vpack.c.b16 %v2683, %v2682
    %2700 = vmatprep.subr.bf16.mxu0 0
    %2701 = vmatpush1.bf16.msra.mxu0 %v2684
    %2702 = vmatprep.subr.bf16.mxu0 0
    %2703 = vmatpush1.bf16.msra.mxu0 %v2685
    %2704 = vmatprep.subr.bf16.mxu0 0
    %2705 = vmatpush1.bf16.msra.mxu0 %v2686
    %2706 = vmatprep.subr.bf16.mxu0 0
    %2707 = vmatpush1.bf16.msra.mxu0 %v2687
    %2708 = vmatprep.subr.bf16.mxu0 0
    %2709 = vmatpush1.bf16.msra.mxu0 %v2688
    %2710 = vmatprep.subr.bf16.mxu0 0
    %2711 = vmatpush1.bf16.msra.mxu0 %v2689
    %2712 = vmatprep.subr.bf16.mxu0 0
    %2713 = vmatpush1.bf16.msra.mxu0 %v2690
    %2714 = vmatprep.subr.bf16.mxu0 0
    %2715 = vmatpush1.bf16.msra.mxu0 %v2691
    %2716 = vmatprep.subr.bf16.mxu0 0
    %2717 = vmatpush1.bf16.msra.mxu0 0
    %2718 = vmatprep.subr.bf16.mxu0 0
    %2719 = vmatpush1.bf16.msra.mxu0 0
    %2720 = vmatprep.subr.bf16.mxu0 0
    %2721 = vmatpush1.bf16.msra.mxu0 0
    %2722 = vmatprep.subr.bf16.mxu0 0
    %2723 = vmatpush1.bf16.msra.mxu0 0
    %2724 = vmatprep.subr.bf16.mxu0 0
    %2725 = vmatpush1.bf16.msra.mxu0 0
    %2726 = vmatprep.subr.bf16.mxu0 0
    %2727 = vmatpush1.bf16.msra.mxu0 0
    %2728 = vmatprep.subr.bf16.mxu0 0
    %2729 = vmatpush1.bf16.msra.mxu0 0
    %2730 = vmatprep.subr.bf16.mxu0 0
    %2731 = vmatpush1.bf16.msra.mxu0 0
    %2732 = vmatprep.mubr.bf16.mxu0 0
    %2733 = vmatmul.mubr.bf16.gmra.mrb[0].mxu0 %v2635
    %v2734 = vpop.f32.mrb[0].mxu0
    %v2735 = vadd.f32 0.0, %v2734
    %v2736 = vpop.f32.mrb[0].mxu0
    %v2737 = vpop.f32.mrb[0].mxu0
    %v2738 = vpop.f32.mrb[0].mxu0
    %2739 = vdwg.mxu0
    %v2740 = vpack.c.bf16 %v2735, %v2735
    %v2742 = vsel %vm1427, %v2740, 0
    %2744 = vmatprep.subr.bf16.mxu0 0
    %2745 = vmatpush1.bf16.msra.mxu0 %v2742
    %2746 = vmatprep.subr.bf16.mxu0 0
    %2747 = vmatpush1.bf16.msra.mxu0 0
    %2748 = vmatprep.subr.bf16.mxu0 0
    %2749 = vmatpush1.bf16.msra.mxu0 0
    %2750 = vmatprep.subr.bf16.mxu0 0
    %2751 = vmatpush1.bf16.msra.mxu0 0
    %2752 = vmatprep.subr.bf16.mxu0 0
    %2753 = vmatpush1.bf16.msra.mxu0 0
    %2754 = vmatprep.subr.bf16.mxu0 0
    %2755 = vmatpush1.bf16.msra.mxu0 0
    %2756 = vmatprep.subr.bf16.mxu0 0
    %2757 = vmatpush1.bf16.msra.mxu0 0
    %2758 = vmatprep.subr.bf16.mxu0 0
    %2759 = vmatpush1.bf16.msra.mxu0 0
    %2760 = vmatprep.subr.bf16.mxu0 0
    %2761 = vmatpush1.bf16.msra.mxu0 0
    %2762 = vmatprep.subr.bf16.mxu0 0
    %2763 = vmatpush1.bf16.msra.mxu0 0
    %2764 = vmatprep.subr.bf16.mxu0 0
    %2765 = vmatpush1.bf16.msra.mxu0 0
    %2766 = vmatprep.subr.bf16.mxu0 0
    %2767 = vmatpush1.bf16.msra.mxu0 0
    %2768 = vmatprep.subr.bf16.mxu0 0
    %2769 = vmatpush1.bf16.msra.mxu0 0
    %2770 = vmatprep.subr.bf16.mxu0 0
    %2771 = vmatpush1.bf16.msra.mxu0 0
    %2772 = vmatprep.subr.bf16.mxu0 0
    %2773 = vmatpush1.bf16.msra.mxu0 0
    %2774 = vmatprep.subr.bf16.mxu0 0
    %2775 = vmatpush1.bf16.msra.mxu0 0
    %2776 = vmatprep.mubr.bf16.mxu0 0
    %2777 = vmatmul.mubr.bf16.gmra.mrb[0].mxu0 %v1785
    %v2778 = vpop.f32.mrb[0].mxu0
    %v2779 = vadd.f32 0.0, %v2778
    %v2780 = vpop.f32.mrb[0].mxu0
    %v2781 = vpop.f32.mrb[0].mxu0
    %v2782 = vpop.f32.mrb[0].mxu0
    %2783 = vdwg.mxu0
    %v2784 = vadd.f32 %v2395, %v2589
    %v2785 = vmax.f32 %v2784, 0.0
    %v2786 = vadd.f32 %v2397, %v2779
    %v2787 = vmax.f32 %v2786, 0.0
    %v2788 = vpack.c.bf16 %v2785, %v2785
    %v2789 = vpack.c.bf16 %v2787, %v2787
    %v2790 = vld [vmem:[#allocation14] sm:$0xf]
    %v2792 = vsel %vm1423, %v2790, 0
    %v2795 = vsel %vm1427, %v1834, 0
    %2797 = vmatprep.subr.bf16.mxu0 0
    %2798 = vmatpush1.bf16.msra.mxu0 %v2795
    %2799 = vmatprep.subr.bf16.mxu0 0
    %2800 = vmatpush1.bf16.msra.mxu0 0
    %2801 = vmatprep.subr.bf16.mxu0 0
    %2802 = vmatpush1.bf16.msra.mxu0 0
    %2803 = vmatprep.subr.bf16.mxu0 0
    %2804 = vmatpush1.bf16.msra.mxu0 0
    %2805 = vmatprep.subr.bf16.mxu0 0
    %2806 = vmatpush1.bf16.msra.mxu0 0
    %2807 = vmatprep.subr.bf16.mxu0 0
    %2808 = vmatpush1.bf16.msra.mxu0 0
    %2809 = vmatprep.subr.bf16.mxu0 0
    %2810 = vmatpush1.bf16.msra.mxu0 0
    %2811 = vmatprep.subr.bf16.mxu0 0
    %2812 = vmatpush1.bf16.msra.mxu0 0
    %2813 = vmatprep.subr.bf16.mxu0 0
    %2814 = vmatpush1.bf16.msra.mxu0 0
    %2815 = vmatprep.subr.bf16.mxu0 0
    %2816 = vmatpush1.bf16.msra.mxu0 0
    %2817 = vmatprep.subr.bf16.mxu0 0
    %2818 = vmatpush1.bf16.msra.mxu0 0
    %2819 = vmatprep.subr.bf16.mxu0 0
    %2820 = vmatpush1.bf16.msra.mxu0 0
    %2821 = vmatprep.subr.bf16.mxu0 0
    %2822 = vmatpush1.bf16.msra.mxu0 0
    %2823 = vmatprep.subr.bf16.mxu0 0
    %2824 = vmatpush1.bf16.msra.mxu0 0
    %2825 = vmatprep.subr.bf16.mxu0 0
    %2826 = vmatpush1.bf16.msra.mxu0 0
    %2827 = vmatprep.subr.bf16.mxu0 0
    %2828 = vmatpush1.bf16.msra.mxu0 0
    %2829 = vmatprep.mubr.bf16.mxu0 0
    %2830 = vmatmul.mubr.bf16.gmra.mrb[0].mxu0 %v2792
    %v2831 = vpop.f32.mrb[0].mxu0
    %v2832 = vadd.f32 0.0, %v2831
    %v2833 = vpop.f32.mrb[0].mxu0
    %v2834 = vpop.f32.mrb[0].mxu0
    %v2835 = vpop.f32.mrb[0].mxu0
    %2836 = vdwg.mxu0
    %v2838 = vsel %vm1427, %v1835, 0
    %2840 = vmatprep.subr.bf16.mxu0 0
    %2841 = vmatpush1.bf16.msra.mxu0 %v2838
    %2842 = vmatprep.subr.bf16.mxu0 0
    %2843 = vmatpush1.bf16.msra.mxu0 0
    %2844 = vmatprep.subr.bf16.mxu0 0
    %2845 = vmatpush1.bf16.msra.mxu0 0
    %2846 = vmatprep.subr.bf16.mxu0 0
    %2847 = vmatpush1.bf16.msra.mxu0 0
    %2848 = vmatprep.subr.bf16.mxu0 0
    %2849 = vmatpush1.bf16.msra.mxu0 0
    %2850 = vmatprep.subr.bf16.mxu0 0
    %2851 = vmatpush1.bf16.msra.mxu0 0
    %2852 = vmatprep.subr.bf16.mxu0 0
    %2853 = vmatpush1.bf16.msra.mxu0 0
    %2854 = vmatprep.subr.bf16.mxu0 0
    %2855 = vmatpush1.bf16.msra.mxu0 0
    %2856 = vmatprep.subr.bf16.mxu0 0
    %2857 = vmatpush1.bf16.msra.mxu0 0
    %2858 = vmatprep.subr.bf16.mxu0 0
    %2859 = vmatpush1.bf16.msra.mxu0 0
    %2860 = vmatprep.subr.bf16.mxu0 0
    %2861 = vmatpush1.bf16.msra.mxu0 0
    %2862 = vmatprep.subr.bf16.mxu0 0
    %2863 = vmatpush1.bf16.msra.mxu0 0
    %2864 = vmatprep.subr.bf16.mxu0 0
    %2865 = vmatpush1.bf16.msra.mxu0 0
    %2866 = vmatprep.subr.bf16.mxu0 0
    %2867 = vmatpush1.bf16.msra.mxu0 0
    %2868 = vmatprep.subr.bf16.mxu0 0
    %2869 = vmatpush1.bf16.msra.mxu0 0
    %2870 = vmatprep.subr.bf16.mxu0 0
    %2871 = vmatpush1.bf16.msra.mxu0 0
    %2872 = vmatprep.mubr.bf16.mxu0 0
    %2873 = vmatmul.mubr.bf16.gmra.mrb[0].mxu0 %v2792
    %v2874 = vpop.f32.mrb[0].mxu0
    %v2875 = vadd.f32 0.0, %v2874
    %v2876 = vpop.f32.mrb[0].mxu0
    %v2877 = vpop.f32.mrb[0].mxu0
    %v2878 = vpop.f32.mrb[0].mxu0
    %2879 = vdwg.mxu0
    %v2881 = vsel %vm1427, %v2788, 0
    %2883 = vmatprep.subr.bf16.mxu0 0
    %2884 = vmatpush1.bf16.msra.mxu0 %v2881
    %2885 = vmatprep.subr.bf16.mxu0 0
    %2886 = vmatpush1.bf16.msra.mxu0 0
    %2887 = vmatprep.subr.bf16.mxu0 0
    %2888 = vmatpush1.bf16.msra.mxu0 0
    %2889 = vmatprep.subr.bf16.mxu0 0
    %2890 = vmatpush1.bf16.msra.mxu0 0
    %2891 = vmatprep.subr.bf16.mxu0 0
    %2892 = vmatpush1.bf16.msra.mxu0 0
    %2893 = vmatprep.subr.bf16.mxu0 0
    %2894 = vmatpush1.bf16.msra.mxu0 0
    %2895 = vmatprep.subr.bf16.mxu0 0
    %2896 = vmatpush1.bf16.msra.mxu0 0
    %2897 = vmatprep.subr.bf16.mxu0 0
    %2898 = vmatpush1.bf16.msra.mxu0 0
    %2899 = vmatprep.subr.bf16.mxu0 0
    %2900 = vmatpush1.bf16.msra.mxu0 0
    %2901 = vmatprep.subr.bf16.mxu0 0
    %2902 = vmatpush1.bf16.msra.mxu0 0
    %2903 = vmatprep.subr.bf16.mxu0 0
    %2904 = vmatpush1.bf16.msra.mxu0 0
    %2905 = vmatprep.subr.bf16.mxu0 0
    %2906 = vmatpush1.bf16.msra.mxu0 0
    %2907 = vmatprep.subr.bf16.mxu0 0
    %2908 = vmatpush1.bf16.msra.mxu0 0
    %2909 = vmatprep.subr.bf16.mxu0 0
    %2910 = vmatpush1.bf16.msra.mxu0 0
    %2911 = vmatprep.subr.bf16.mxu0 0
    %2912 = vmatpush1.bf16.msra.mxu0 0
    %2913 = vmatprep.subr.bf16.mxu0 0
    %2914 = vmatpush1.bf16.msra.mxu0 0
    %2915 = vmatprep.mubr.bf16.mxu0 0
    %2916 = vmatmul.mubr.bf16.gmra.mrb[0].mxu0 %v2792
    %v2917 = vpop.f32.mrb[0].mxu0
    %v2918 = vadd.f32 0.0, %v2917
    %v2919 = vpop.f32.mrb[0].mxu0
    %v2920 = vpop.f32.mrb[0].mxu0
    %v2921 = vpop.f32.mrb[0].mxu0
    %2922 = vdwg.mxu0
    %v2924 = vsel %vm1427, %v2789, 0
    %2926 = vmatprep.subr.bf16.mxu0 0
    %2927 = vmatpush1.bf16.msra.mxu0 %v2924
    %2928 = vmatprep.subr.bf16.mxu0 0
    %2929 = vmatpush1.bf16.msra.mxu0 0
    %2930 = vmatprep.subr.bf16.mxu0 0
    %2931 = vmatpush1.bf16.msra.mxu0 0
    %2932 = vmatprep.subr.bf16.mxu0 0
    %2933 = vmatpush1.bf16.msra.mxu0 0
    %2934 = vmatprep.subr.bf16.mxu0 0
    %2935 = vmatpush1.bf16.msra.mxu0 0
    %2936 = vmatprep.subr.bf16.mxu0 0
    %2937 = vmatpush1.bf16.msra.mxu0 0
    %2938 = vmatprep.subr.bf16.mxu0 0
    %2939 = vmatpush1.bf16.msra.mxu0 0
    %2940 = vmatprep.subr.bf16.mxu0 0
    %2941 = vmatpush1.bf16.msra.mxu0 0
    %2942 = vmatprep.subr.bf16.mxu0 0
    %2943 = vmatpush1.bf16.msra.mxu0 0
    %2944 = vmatprep.subr.bf16.mxu0 0
    %2945 = vmatpush1.bf16.msra.mxu0 0
    %2946 = vmatprep.subr.bf16.mxu0 0
    %2947 = vmatpush1.bf16.msra.mxu0 0
    %2948 = vmatprep.subr.bf16.mxu0 0
    %2949 = vmatpush1.bf16.msra.mxu0 0
    %2950 = vmatprep.subr.bf16.mxu0 0
    %2951 = vmatpush1.bf16.msra.mxu0 0
    %2952 = vmatprep.subr.bf16.mxu0 0
    %2953 = vmatpush1.bf16.msra.mxu0 0
    %2954 = vmatprep.subr.bf16.mxu0 0
    %2955 = vmatpush1.bf16.msra.mxu0 0
    %2956 = vmatprep.subr.bf16.mxu0 0
    %2957 = vmatpush1.bf16.msra.mxu0 0
    %2958 = vmatprep.mubr.bf16.mxu0 0
    %2959 = vmatmul.mubr.bf16.gmra.mrb[0].mxu0 %v2792
    %v2960 = vpop.f32.mrb[0].mxu0
    %v2961 = vadd.f32 0.0, %v2960
    %v2962 = vpop.f32.mrb[0].mxu0
    %v2963 = vpop.f32.mrb[0].mxu0
    %v2964 = vpop.f32.mrb[0].mxu0
    %2965 = vdwg.mxu0
    %v2966 = vld [vmem:[%s21] sm:$0xff]
    %2968 = vset.pattern.permute.xlu0 0
    %2969 = vperm.xlu0 %2968, %v2966
    %v2970 = vpop.permute.xlu0 %2969
    %v2972 = vmul.f32 %v2832, %v2970
    %v2973 = vmul.f32 %v2875, %v2970
    %v2974 = vmul.f32 %v2918, %v2970
    %v2975 = vmul.f32 %v2961, %v2970
    %v2976 = vpack.c.bf16 %v2972, %v2972
    %v2977 = vpack.c.bf16 %v2973, %v2973
    %v2978 = vpack.c.bf16 %v2974, %v2974
    %v2979 = vpack.c.bf16 %v2975, %v2975
    %v2980 = vld [vmem:[%s71] sm:$0xf]
    %v2981 = vld [vmem:[%s71 + $0x4] sm:$0xf]
    %v2982 = vld [vmem:[%s71 + $0x8] sm:$0xf]
    %v2983 = vld [vmem:[%s71 + $0xc] sm:$0xf]
    %v2984 = vld [vmem:[%s71 + $0x10] sm:$0xf]
    %v2985 = vld [vmem:[%s71 + $0x14] sm:$0xf]
    %v2986 = vld [vmem:[%s71 + $0x18] sm:$0xf]
    %v2987 = vld [vmem:[%s71 + $0x1c] sm:$0xf]
    %v2988 = vld [vmem:[%s71 + $0x20] sm:$0xf]
    %v2989 = vld [vmem:[%s71 + $0x24] sm:$0xf]
    %v2990 = vld [vmem:[%s71 + $0x28] sm:$0xf]
    %v2991 = vld [vmem:[%s71 + $0x2c] sm:$0xf]
    %v2992 = vld [vmem:[%s71 + $0x30] sm:$0xf]
    %v2993 = vld [vmem:[%s71 + $0x34] sm:$0xf]
    %v2994 = vld [vmem:[%s71 + $0x38] sm:$0xf]
    %v2995 = vld [vmem:[%s71 + $0x3c] sm:$0xf]
    %v2996 = vld [vmem:[%s71 + $0x40] sm:$0xf]
    %v2997 = vld [vmem:[%s71 + $0x44] sm:$0xf]
    %v2998 = vld [vmem:[%s71 + $0x48] sm:$0xf]
    %v2999 = vld [vmem:[%s71 + $0x4c] sm:$0xf]
    %v3000 = vld [vmem:[%s71 + $0x50] sm:$0xf]
    %v3001 = vld [vmem:[%s71 + $0x54] sm:$0xf]
    %v3002 = vld [vmem:[%s71 + $0x58] sm:$0xf]
    %v3003 = vld [vmem:[%s71 + $0x5c] sm:$0xf]
    %v3004 = vld [vmem:[%s71 + $0x60] sm:$0xf]
    %v3005 = vld [vmem:[%s71 + $0x64] sm:$0xf]
    %v3006 = vld [vmem:[%s71 + $0x68] sm:$0xf]
    %v3007 = vld [vmem:[%s71 + $0x6c] sm:$0xf]
    %v3008 = vld [vmem:[%s71 + $0x70] sm:$0xf]
    %v3009 = vld [vmem:[%s71 + $0x74] sm:$0xf]
    %v3010 = vld [vmem:[%s71 + $0x78] sm:$0xf]
    %v3011 = vld [vmem:[%s71 + $0x7c] sm:$0xf]
    %v3012 = vld [vmem:[%s71 + $0x80] sm:$0xf]
    %v3013 = vld [vmem:[%s71 + $0x84] sm:$0xf]
    %v3014 = vld [vmem:[%s71 + $0x88] sm:$0xf]
    %v3015 = vld [vmem:[%s71 + $0x8c] sm:$0xf]
    %v3016 = vld [vmem:[%s71 + $0x90] sm:$0xf]
    %v3017 = vld [vmem:[%s71 + $0x94] sm:$0xf]
    %v3018 = vld [vmem:[%s71 + $0x98] sm:$0xf]
    %v3019 = vld [vmem:[%s71 + $0x9c] sm:$0xf]
    %v3020 = vld [vmem:[%s71 + $0xa0] sm:$0xf]
    %v3021 = vld [vmem:[%s71 + $0xa4] sm:$0xf]
    %v3022 = vld [vmem:[%s71 + $0xa8] sm:$0xf]
    %v3023 = vld [vmem:[%s71 + $0xac] sm:$0xf]
    %v3024 = vld [vmem:[%s71 + $0xb0] sm:$0xf]
    %v3025 = vld [vmem:[%s71 + $0xb4] sm:$0xf]
    %v3026 = vld [vmem:[%s71 + $0xb8] sm:$0xf]
    %v3027 = vld [vmem:[%s71 + $0xbc] sm:$0xf]
    %v3028 = vld [vmem:[%s71 + $0xc0] sm:$0xf]
    %v3029 = vld [vmem:[%s71 + $0xc4] sm:$0xf]
    %v3030 = vld [vmem:[%s71 + $0xc8] sm:$0xf]
    %v3031 = vld [vmem:[%s71 + $0xcc] sm:$0xf]
    %v3032 = vld [vmem:[%s71 + $0xd0] sm:$0xf]
    %v3033 = vld [vmem:[%s71 + $0xd4] sm:$0xf]
    %v3034 = vld [vmem:[%s71 + $0xd8] sm:$0xf]
    %v3035 = vld [vmem:[%s71 + $0xdc] sm:$0xf]
    %v3036 = vld [vmem:[%s71 + $0xe0] sm:$0xf]
    %v3037 = vld [vmem:[%s71 + $0xe4] sm:$0xf]
    %v3038 = vld [vmem:[%s71 + $0xe8] sm:$0xf]
    %v3039 = vld [vmem:[%s71 + $0xec] sm:$0xf]
    %v3040 = vld [vmem:[%s71 + $0xf0] sm:$0xf]
    %v3041 = vld [vmem:[%s71 + $0xf4] sm:$0xf]
    %v3042 = vld [vmem:[%s71 + $0xf8] sm:$0xf]
    %v3043 = vld [vmem:[%s71 + $0xfc] sm:$0xf]
    %v3044 = vld [vmem:[%s73] sm:$0x1]
    %v3046 = vlaneseq
    %v3047 = vshrl.u32 %v3046, 7
    %v3048 = vsub.s32 0, %v3047
    %v3049 = vrot.slane %v3044, %v3048
    %v3115 = vunpack.c.l.b16 %v2980
    %v3116 = vunpack.c.l.b16 %v2981
    %v3117 = vunpack.c.l.b16 %v2982
    %v3118 = vunpack.c.l.b16 %v2983
    %v3119 = vunpack.c.l.b16 %v2984
    %v3120 = vunpack.c.l.b16 %v2985
    %v3121 = vunpack.c.l.b16 %v2986
    %v3122 = vunpack.c.l.b16 %v2987
    %v3123 = vunpack.c.l.b16 %v2988
    %v3124 = vunpack.c.l.b16 %v2989
    %v3125 = vunpack.c.l.b16 %v2990
    %v3126 = vunpack.c.l.b16 %v2991
    %v3127 = vunpack.c.l.b16 %v2992
    %v3128 = vunpack.c.l.b16 %v2993
    %v3129 = vunpack.c.l.b16 %v2994
    %v3130 = vunpack.c.l.b16 %v2995
    %v3131 = vunpack.c.l.b16 %v2996
    %v3132 = vunpack.c.l.b16 %v2997
    %v3133 = vunpack.c.l.b16 %v2998
    %v3134 = vunpack.c.l.b16 %v2999
    %v3135 = vunpack.c.l.b16 %v3000
    %v3136 = vunpack.c.l.b16 %v3001
    %v3137 = vunpack.c.l.b16 %v3002
    %v3138 = vunpack.c.l.b16 %v3003
    %v3139 = vunpack.c.l.b16 %v3004
    %v3140 = vunpack.c.l.b16 %v3005
    %v3141 = vunpack.c.l.b16 %v3006
    %v3142 = vunpack.c.l.b16 %v3007
    %v3143 = vunpack.c.l.b16 %v3008
    %v3144 = vunpack.c.l.b16 %v3009
    %v3145 = vunpack.c.l.b16 %v3010
    %v3146 = vunpack.c.l.b16 %v3011
    %v3147 = vunpack.c.l.b16 %v3012
    %v3148 = vunpack.c.l.b16 %v3013
    %v3149 = vunpack.c.l.b16 %v3014
    %v3150 = vunpack.c.l.b16 %v3015
    %v3151 = vunpack.c.l.b16 %v3016
    %v3152 = vunpack.c.l.b16 %v3017
    %v3153 = vunpack.c.l.b16 %v3018
    %v3154 = vunpack.c.l.b16 %v3019
    %v3155 = vunpack.c.l.b16 %v3020
    %v3156 = vunpack.c.l.b16 %v3021
    %v3157 = vunpack.c.l.b16 %v3022
    %v3158 = vunpack.c.l.b16 %v3023
    %v3159 = vunpack.c.l.b16 %v3024
    %v3160 = vunpack.c.l.b16 %v3025
    %v3161 = vunpack.c.l.b16 %v3026
    %v3162 = vunpack.c.l.b16 %v3027
    %v3163 = vunpack.c.l.b16 %v3028
    %v3164 = vunpack.c.l.b16 %v3029
    %v3165 = vunpack.c.l.b16 %v3030
    %v3166 = vunpack.c.l.b16 %v3031
    %v3167 = vunpack.c.l.b16 %v3032
    %v3168 = vunpack.c.l.b16 %v3033
    %v3169 = vunpack.c.l.b16 %v3034
    %v3170 = vunpack.c.l.b16 %v3035
    %v3171 = vunpack.c.l.b16 %v3036
    %v3172 = vunpack.c.l.b16 %v3037
    %v3173 = vunpack.c.l.b16 %v3038
    %v3174 = vunpack.c.l.b16 %v3039
    %v3175 = vunpack.c.l.b16 %v3040
    %v3176 = vunpack.c.l.b16 %v3041
    %v3177 = vunpack.c.l.b16 %v3042
    %v3178 = vunpack.c.l.b16 %v3043
    %v3179 = vpack.c.b16 %v3116, %v3115
    %v3180 = vpack.c.b16 %v3118, %v3117
    %v3181 = vpack.c.b16 %v3120, %v3119
    %v3182 = vpack.c.b16 %v3122, %v3121
    %v3183 = vpack.c.b16 %v3124, %v3123
    %v3184 = vpack.c.b16 %v3126, %v3125
    %v3185 = vpack.c.b16 %v3128, %v3127
    %v3186 = vpack.c.b16 %v3130, %v3129
    %v3187 = vpack.c.b16 %v3132, %v3131
    %v3188 = vpack.c.b16 %v3134, %v3133
    %v3189 = vpack.c.b16 %v3136, %v3135
    %v3190 = vpack.c.b16 %v3138, %v3137
    %v3191 = vpack.c.b16 %v3140, %v3139
    %v3192 = vpack.c.b16 %v3142, %v3141
    %v3193 = vpack.c.b16 %v3144, %v3143
    %v3194 = vpack.c.b16 %v3146, %v3145
    %v3195 = vpack.c.b16 %v3148, %v3147
    %v3196 = vpack.c.b16 %v3150, %v3149
    %v3197 = vpack.c.b16 %v3152, %v3151
    %v3198 = vpack.c.b16 %v3154, %v3153
    %v3199 = vpack.c.b16 %v3156, %v3155
    %v3200 = vpack.c.b16 %v3158, %v3157
    %v3201 = vpack.c.b16 %v3160, %v3159
    %v3202 = vpack.c.b16 %v3162, %v3161
    %v3203 = vpack.c.b16 %v3164, %v3163
    %v3204 = vpack.c.b16 %v3166, %v3165
    %v3205 = vpack.c.b16 %v3168, %v3167
    %v3206 = vpack.c.b16 %v3170, %v3169
    %v3207 = vpack.c.b16 %v3172, %v3171
    %v3208 = vpack.c.b16 %v3174, %v3173
    %v3209 = vpack.c.b16 %v3176, %v3175
    %v3210 = vpack.c.b16 %v3178, %v3177
    %3243 = vmatprep.subr.bf16.mxu0 0
    %3244 = vmatpush1.bf16.msra.mxu0 %v3179
    %3245 = vmatprep.subr.bf16.mxu0 0
    %3246 = vmatpush1.bf16.msra.mxu0 %v3180
    %3247 = vmatprep.subr.bf16.mxu0 0
    %3248 = vmatpush1.bf16.msra.mxu0 %v3181
    %3249 = vmatprep.subr.bf16.mxu0 0
    %3250 = vmatpush1.bf16.msra.mxu0 %v3182
    %3251 = vmatprep.subr.bf16.mxu0 0
    %3252 = vmatpush1.bf16.msra.mxu0 %v3183
    %3253 = vmatprep.subr.bf16.mxu0 0
    %3254 = vmatpush1.bf16.msra.mxu0 %v3184
    %3255 = vmatprep.subr.bf16.mxu0 0
    %3256 = vmatpush1.bf16.msra.mxu0 %v3185
    %3257 = vmatprep.subr.bf16.mxu0 0
    %3258 = vmatpush1.bf16.msra.mxu0 %v3186
    %3259 = vmatprep.subr.bf16.mxu0 0
    %3260 = vmatpush1.bf16.msra.mxu0 %v3187
    %3261 = vmatprep.subr.bf16.mxu0 0
    %3262 = vmatpush1.bf16.msra.mxu0 %v3188
    %3263 = vmatprep.subr.bf16.mxu0 0
    %3264 = vmatpush1.bf16.msra.mxu0 %v3189
    %3265 = vmatprep.subr.bf16.mxu0 0
    %3266 = vmatpush1.bf16.msra.mxu0 %v3190
    %3267 = vmatprep.subr.bf16.mxu0 0
    %3268 = vmatpush1.bf16.msra.mxu0 %v3191
    %3269 = vmatprep.subr.bf16.mxu0 0
    %3270 = vmatpush1.bf16.msra.mxu0 %v3192
    %3271 = vmatprep.subr.bf16.mxu0 0
    %3272 = vmatpush1.bf16.msra.mxu0 %v3193
    %3273 = vmatprep.subr.bf16.mxu0 0
    %3274 = vmatpush1.bf16.msra.mxu0 %v3194
    %3275 = vmatprep.mubr.bf16.mxu0 %v2977
    %3276 = vmatmul.mubr.bf16.gmra.mrb[0].mxu0 %v2976
    %v3277 = vpop.f32.mrb[0].mxu0
    %v3278 = vadd.f32 %v3049, %v3277
    %v3279 = vpop.f32.mrb[0].mxu0
    %v3280 = vpop.f32.mrb[0].mxu0
    %v3281 = vpop.f32.mrb[0].mxu0
    %3282 = vdwg.mxu0
    %3283 = vmatprep.subr.bf16.mxu0 0
    %3284 = vmatpush1.bf16.msra.mxu0 %v3195
    %3285 = vmatprep.subr.bf16.mxu0 0
    %3286 = vmatpush1.bf16.msra.mxu0 %v3196
    %3287 = vmatprep.subr.bf16.mxu0 0
    %3288 = vmatpush1.bf16.msra.mxu0 %v3197
    %3289 = vmatprep.subr.bf16.mxu0 0
    %3290 = vmatpush1.bf16.msra.mxu0 %v3198
    %3291 = vmatprep.subr.bf16.mxu0 0
    %3292 = vmatpush1.bf16.msra.mxu0 %v3199
    %3293 = vmatprep.subr.bf16.mxu0 0
    %3294 = vmatpush1.bf16.msra.mxu0 %v3200
    %3295 = vmatprep.subr.bf16.mxu0 0
    %3296 = vmatpush1.bf16.msra.mxu0 %v3201
    %3297 = vmatprep.subr.bf16.mxu0 0
    %3298 = vmatpush1.bf16.msra.mxu0 %v3202
    %3299 = vmatprep.subr.bf16.mxu0 0
    %3300 = vmatpush1.bf16.msra.mxu0 %v3203
    %3301 = vmatprep.subr.bf16.mxu0 0
    %3302 = vmatpush1.bf16.msra.mxu0 %v3204
    %3303 = vmatprep.subr.bf16.mxu0 0
    %3304 = vmatpush1.bf16.msra.mxu0 %v3205
    %3305 = vmatprep.subr.bf16.mxu0 0
    %3306 = vmatpush1.bf16.msra.mxu0 %v3206
    %3307 = vmatprep.subr.bf16.mxu0 0
    %3308 = vmatpush1.bf16.msra.mxu0 %v3207
    %3309 = vmatprep.subr.bf16.mxu0 0
    %3310 = vmatpush1.bf16.msra.mxu0 %v3208
    %3311 = vmatprep.subr.bf16.mxu0 0
    %3312 = vmatpush1.bf16.msra.mxu0 %v3209
    %3313 = vmatprep.subr.bf16.mxu0 0
    %3314 = vmatpush1.bf16.msra.mxu0 %v3210
    %3315 = vmatprep.mubr.bf16.mxu0 %v2979
    %3316 = vmatmul.mubr.bf16.gmra.mrb[0].mxu0 %v2978
    %v3317 = vpop.f32.mrb[0].mxu0
    %v3318 = vadd.f32 %v3278, %v3317
    %v3319 = vpop.f32.mrb[0].mxu0
    %v3320 = vpop.f32.mrb[0].mxu0
    %v3321 = vpop.f32.mrb[0].mxu0
    %3322 = vdwg.mxu0
    %v3323 = vmax.f32 %v3318, 0.0
    %v3324 = vpack.c.bf16 %v3323, %v3323
    %v3325 = vld [vmem:[%s75] sm:$0xf]
    %v3326 = vld [vmem:[%s75 + $0x4] sm:$0xf]
    %v3327 = vld [vmem:[%s77] sm:$0x1]
    %v3329 = vlaneseq
    %v3330 = vshrl.u32 %v3329, 7
    %v3331 = vsub.s32 0, %v3330
    %v3332 = vrot.slane %v3327, %v3331
    %v3336 = vunpack.c.l.b16 %v3325
    %v3337 = vunpack.c.l.b16 %v3326
    %v3338 = vpack.c.b16 %v3337, %v3336
    %vm3340 = vcmask 130048
    %v3342 = vsel %vm3340, %v3324, 0
    %3344 = vmatprep.subr.bf16.mxu0 0
    %3345 = vmatpush1.bf16.msra.mxu0 %v3338
    %3346 = vmatprep.subr.bf16.mxu0 0
    %3347 = vmatpush1.bf16.msra.mxu0 0
    %3348 = vmatprep.subr.bf16.mxu0 0
    %3349 = vmatpush1.bf16.msra.mxu0 0
    %3350 = vmatprep.subr.bf16.mxu0 0
    %3351 = vmatpush1.bf16.msra.mxu0 0
    %3352 = vmatprep.subr.bf16.mxu0 0
    %3353 = vmatpush1.bf16.msra.mxu0 0
    %3354 = vmatprep.subr.bf16.mxu0 0
    %3355 = vmatpush1.bf16.msra.mxu0 0
    %3356 = vmatprep.subr.bf16.mxu0 0
    %3357 = vmatpush1.bf16.msra.mxu0 0
    %3358 = vmatprep.subr.bf16.mxu0 0
    %3359 = vmatpush1.bf16.msra.mxu0 0
    %3360 = vmatprep.subr.bf16.mxu0 0
    %3361 = vmatpush1.bf16.msra.mxu0 0
    %3362 = vmatprep.subr.bf16.mxu0 0
    %3363 = vmatpush1.bf16.msra.mxu0 0
    %3364 = vmatprep.subr.bf16.mxu0 0
    %3365 = vmatpush1.bf16.msra.mxu0 0
    %3366 = vmatprep.subr.bf16.mxu0 0
    %3367 = vmatpush1.bf16.msra.mxu0 0
    %3368 = vmatprep.subr.bf16.mxu0 0
    %3369 = vmatpush1.bf16.msra.mxu0 0
    %3370 = vmatprep.subr.bf16.mxu0 0
    %3371 = vmatpush1.bf16.msra.mxu0 0
    %3372 = vmatprep.subr.bf16.mxu0 0
    %3373 = vmatpush1.bf16.msra.mxu0 0
    %3374 = vmatprep.subr.bf16.mxu0 0
    %3375 = vmatpush1.bf16.msra.mxu0 0
    %3376 = vmatprep.mubr.bf16.mxu0 0
    %3377 = vmatmul.mubr.bf16.gmra.mrb[0].mxu0 %v3342
    %v3378 = vpop.f32.mrb[0].mxu0
    %v3379 = vadd.f32 %v3332, %v3378
    %v3380 = vpop.f32.mrb[0].mxu0
    %v3381 = vpop.f32.mrb[0].mxu0
    %v3382 = vpop.f32.mrb[0].mxu0
    %3383 = vdwg.mxu0
    %v3384 = vmax.f32 %v3379, 0.0
    %3385 = vst [vmem:[#allocation44] sm:$0xff] %v3384
    // Predicated region
    $region266: #{tpu_custom_call.1} parent=1 // pred_check
      _
    $region267: #{tpu_custom_call.1} parent=1 // pred_check_branch
      %3387 = sbr.rel (0) target = $region269
    $region268: #{tpu_custom_call.1} parent=1 // pred_region
      %s3389 = ssub.s32 128, 128
      %3390 = vsyncadd [#allocation4], %s3389
      %s3392 = sshll.u32 [#allocation44], 4
      %s3393 = int_to_ptr.vmem [resolvable:$true] %s3392
      %3395 = dma.vmem_to_hbm [thread:$0]  %s3393, 128, %s79, [#allocation4]
    $region269: #{tpu_custom_call.1} parent=1 // pred_fallthru
      _
    // Predicated region
    $region270: #{tpu_custom_call.1} parent=1 // pred_check
      _
    $region271: #{tpu_custom_call.1} parent=1 // pred_check_branch
      %3397 = sbr.rel (0) target = $region273
    $region272: #{tpu_custom_call.1} parent=1 // pred_region
      %3398 = dma.done [#allocation4], 128
    $region273: #{tpu_custom_call.1} parent=1 // pred_fallthru
      _
    %3399 = vsyncpa [#allocation3], 1
    %3400 = vsyncpa [#allocation6], 1
    %3401 = vsyncpa [#allocation9], 1
    %3402 = vsyncpa [#allocation12], 1
    %3403 = vsyncpa [#allocation15], 1
    %3404 = vsyncpa [#allocation18], 1
    %3405 = vsyncpa [#allocation21], 1
    %3406 = vsyncpa [#allocation24], 1
    %3407 = vsyncpa [#allocation27], 1
    %3408 = vsyncpa [#allocation30], 1
    %3409 = vsyncpa [#allocation33], 1
    %3410 = vsyncpa [#allocation36], 1
    %3411 = vsyncpa [#allocation39], 1
    %3412 = vsyncpa [#allocation42], 1
    %3413 = vsyncpa [#allocation4], 1

</llo_original>
